<compile_context>
chip_gen: v5e
topology: v5e:2x2
jax: 0.10.0
libtpu: 0.0.40
codegen_flags: <defaults>
</compile_context>

<pallas_src>
import functools

import numpy as np
import jax
import jax.numpy as jnp
from jax import lax
from jax.experimental import pallas as pl
from jax.experimental.pallas import tpu as pltpu


# ----------------------------- shared math helpers -----------------------------

def _layernorm(x, g, b, eps=1e-12):
    mu = jnp.mean(x, axis=-1, keepdims=True)
    xc = x - mu
    var = jnp.mean(xc * xc, axis=-1, keepdims=True)
    return xc * lax.rsqrt(var + eps) * g + b


def _erf_approx(x):
    # Abramowitz & Stegun 7.1.26, |error| < 1.5e-7.  exp + reciprocal on the EUP.
    a1, a2, a3, a4, a5 = 0.254829592, -0.284496736, 1.421413741, -1.453152027, 1.061405429
    p = 0.3275911
    s = jnp.where(x >= 0.0, 1.0, -1.0)
    ax = jnp.abs(x)
    t = pl.reciprocal(1.0 + p * ax, approx=True)   # EUP slot (perf review)
    poly = t * (a1 + t * (a2 + t * (a3 + t * (a4 + t * a5))))
    return s * (1.0 - poly * jnp.exp(-ax * ax))


def _gelu_erf(x):
    # nn.GELU() default (erf-based).  TODO(synk): tanh-GELU would trim VALU work
    # further if the tolerance allows.
    return x * 0.5 * (1.0 + _erf_approx(x * 0.7071067811865476))


# --------------------------------- Pallas kernel --------------------------------

def _make_encoder_kernel(num_head, d_head, num_layer, mm_dtype):
    D = num_head * d_head
    NT = (((1,), (1,)), ((), ()))   # "nt" dot: contract minor dims of both operands

    def kernel(vfeat_ref, tfeat_ref, vqm_ref, vkm_ref, tqm_ref, tkm_ref,
               vpw_ref, vadd_ref, vg_ref, vb_ref,
               tpw_ref, tadd_ref, tg_ref, tb_ref,
               awv_ref, abv_ref, awt_ref, abt_ref,
               w1_ref, b1_ref, w2_ref, b2_ref, lng_ref, lnb_ref,
               vid_out_ref, txt_out_ref,
               vid_st, txt_st, proj_v, proj_t, ctx_v, ctx_t,
               m_vv, m_vt, m_tv, m_tt):
        l = pl.program_id(1)

        # -------- layer 0 only: stream embeddings + mask outer products --------
        @pl.when(l == 0)
        def _init():
            vid_st[...] = _layernorm(
                jnp.dot(vfeat_ref[0].astype(mm_dtype), vpw_ref[...],
                        preferred_element_type=jnp.float32) + vadd_ref[...],
                vg_ref[...], vb_ref[...])
            txt_st[...] = _layernorm(
                jnp.dot(tfeat_ref[0].astype(mm_dtype), tpw_ref[...],
                        preferred_element_type=jnp.float32) + tadd_ref[...],
                tg_ref[...], tb_ref[...])
            vq, tq = vqm_ref[0], tqm_ref[0]          # (Lv,1), (Lt,1)
            vk, tk = vkm_ref[0], tkm_ref[0]          # (1,Lv), (1,Lt)
            m_vv[...] = vq * vk
            m_vt[...] = vq * tk
            m_tv[...] = tq * vk
            m_tt[...] = tq * tk

        # ------------------------------ layer l --------------------------------
        vid = vid_st[...]                            # (Lv, D) f32
        txt = txt_st[...]                            # (Lt, D) f32

        # Fused lane-dense projections: ONE (L,D)x(D,6D) matmul per stream.
        #   vid-stream columns: [q_vv | k_vv | v_vv | q_tv | k_vt | v_vt]
        #   txt-stream columns: [k_tv | v_tv | q_vt | q_tt | k_tt | v_tt]
        proj_v[...] = (jnp.dot(vid.astype(mm_dtype), awv_ref[0],
                               preferred_element_type=jnp.float32) + abv_ref[0])
        proj_t[...] = (jnp.dot(txt.astype(mm_dtype), awt_ref[0],
                               preferred_element_type=jnp.float32) + abt_ref[0])

        def hsl(ref, blk, h):
            s = blk * D + h * d_head                 # static python ints
            return ref[:, s:s + d_head]

        def attend(q_ref, qi1, qi2, k1_ref, ki1, vi1, k2_ref, ki2, vi2,
                   msk1, msk2, ctx_scr):
            # Softmax over the concatenated [block1 | block2] key axis computed in
            # two blocks with a shared max / denominator (identical maths).
            ok1 = msk1[...] > 0.5
            ok2 = msk2[...] > 0.5
            for h in range(num_head):
                q1 = hsl(q_ref, qi1, h)
                q2 = hsl(q_ref, qi2, h)
                k1 = hsl(k1_ref, ki1, h)
                v1 = hsl(k1_ref, vi1, h)
                k2 = hsl(k2_ref, ki2, h)
                v2 = hsl(k2_ref, vi2, h)
                lg1 = lax.dot_general(q1, k1, NT, preferred_element_type=jnp.float32)
                lg2 = lax.dot_general(q2, k2, NT, preferred_element_type=jnp.float32)
                lg1 = jnp.where(ok1, lg1, -10000.0)
                lg2 = jnp.where(ok2, lg2, -10000.0)
                m = jnp.maximum(jnp.max(lg1, axis=-1, keepdims=True),
                                jnp.max(lg2, axis=-1, keepdims=True))
                e1 = jnp.exp(lg1 - m)
                e2 = jnp.exp(lg2 - m)
                inv = pl.reciprocal(jnp.sum(e1, axis=-1, keepdims=True)
                                    + jnp.sum(e2, axis=-1, keepdims=True), approx=True)
                # Scale the CONTEXT, not the probabilities (perf review); the
                # post-softmax 1/sqrt(d_head) is folded into the value weights.
                # PV result is written straight to its lane slice (no extract).
                ctx_scr[:, h * d_head:(h + 1) * d_head] = inv * (
                    jnp.dot(e1, v1, preferred_element_type=jnp.float32)
                    + jnp.dot(e2, v2, preferred_element_type=jnp.float32))

        # video queries attend to [video keys | text keys]
        attend(proj_v, 0, 3, proj_v, 1, 2, proj_t, 0, 1, m_vv, m_vt, ctx_v)
        # text queries attend to [video keys | text keys]
        attend(proj_t, 2, 3, proj_v, 4, 5, proj_t, 4, 5, m_tv, m_tt, ctx_t)

        vid1 = vid + ctx_v[...]
        txt1 = txt + ctx_t[...]

        def ffn_ln(x, idx):
            h1 = jnp.dot(x.astype(mm_dtype), w1_ref[0, idx],
                         preferred_element_type=jnp.float32) + b1_ref[0, idx]
            h1 = _gelu_erf(h1)
            f = jnp.dot(h1.astype(mm_dtype), w2_ref[0, idx],
                        preferred_element_type=jnp.float32) + b2_ref[0, idx]
            return _layernorm(f + x, lng_ref[0, idx], lnb_ref[0, idx])

        vid_st[...] = ffn_ln(vid1, 0)
        txt_st[...] = ffn_ln(txt1, 1)

        @pl.when(l == num_layer - 1)
        def _write():
            vid_out_ref[0] = vid_st[...]
            txt_out_ref[0] = txt_st[...]

    return kernel


# ------------------------------ full forward (Pallas) ---------------------------

@functools.partial(jax.jit, static_argnames=("num_head", "matmul_dtype"))
def vl_bert_forward(params, vid_feat, vid_mask, txt_feat, txt_mask, num_head,
                    matmul_dtype=jnp.bfloat16):
    f32 = jnp.float32
    B, Lv, Din_v = vid_feat.shape
    _, Lt, Din_t = txt_feat.shape
    D = params["vid_proj_w"].shape[1]
    F = params["w1"].shape[-1]
    NL = params["attn_w"].shape[0]
    dh = D // num_head
    D6 = 6 * D

    # fold projection bias + positional + token-type embedding into one add term
    vadd = (params["vid_proj_b"] + params["vid_pe"][:Lv] + params["type_vid"]).astype(f32)
    tadd = (params["txt_proj_b"] + params["txt_pe"][:Lt] + params["type_txt"]).astype(f32)

    # fold the post-softmax 1/sqrt(d_head) scale into the value projections (exact)
    scale = np.ones((12, 1, 1), np.float32)
    scale[[2, 5, 8, 11]] = 1.0 / np.sqrt(dh)
    aw = params["attn_w"] * scale[None]                 # (NL, 12, D, D)
    ab = params["attn_b"] * scale[None, :, :, 0]        # (NL, 12, D)

    # fuse the 6 projections that share an input stream into one (D, 6D) matrix
    vid_cols = (0, 1, 2, 3, 7, 8)     # q_vv k_vv v_vv q_tv k_vt v_vt
    txt_cols = (4, 5, 6, 9, 10, 11)   # k_tv v_tv q_vt q_tt k_tt v_tt
    awv = jnp.concatenate([aw[:, i] for i in vid_cols], axis=-1)                 # (NL,D,6D)
    awt = jnp.concatenate([aw[:, i] for i in txt_cols], axis=-1)
    abv = jnp.concatenate([ab[:, i] for i in vid_cols], axis=-1)[:, None, :]     # (NL,1,6D)
    abt = jnp.concatenate([ab[:, i] for i in txt_cols], axis=-1)[:, None, :]

    # bf16 weights for the MXU (f32 accumulation); biases / LN / activations stay f32
    wd = matmul_dtype
    vpw, tpw = params["vid_proj_w"].astype(wd), params["txt_proj_w"].astype(wd)
    awv, awt = awv.astype(wd), awt.astype(wd)
    w1, w2 = params["w1"].astype(wd), params["w2"].astype(wd)
    abv, abt = abv.astype(f32), abt.astype(f32)
    b1 = params["b1"][:, :, None, :].astype(f32)        # (NL,2,1,F)
    b2 = params["b2"][:, :, None, :].astype(f32)        # (NL,2,1,D)
    lng = params["ln_g"][:, :, None, :].astype(f32)     # (NL,2,1,D)
    lnb = params["ln_b"][:, :, None, :].astype(f32)

    vm = vid_mask.astype(f32)
    tm = txt_mask.astype(f32)
    vqm, vkm = vm[:, :, None], vm[:, None, :]            # (B,Lv,1), (B,1,Lv)
    tqm, tkm = tm[:, :, None], tm[:, None, :]            # (B,Lt,1), (B,1,Lt)

    kernel = _make_encoder_kernel(num_head, dh, NL, wd)

    def cmap(n):     # constant-index (embedding) weights
        return lambda b, l: (0,) * n

    def bmap(n):     # batch-indexed, layer-invariant
        return lambda b, l: (b,) + (0,) * (n - 1)

    def lmap(n):     # layer-indexed weights, streamed over the layer grid axis
        return lambda b, l: (l,) + (0,) * (n - 1)

    vid_out, txt_out = pl.pallas_call(
        kernel,
        out_shape=(jax.ShapeDtypeStruct((B, Lv, D), f32),
                   jax.ShapeDtypeStruct((B, Lt, D), f32)),
        grid=(B, NL),
        in_specs=[
            pl.BlockSpec((1, Lv, Din_v), bmap(3)),      # vid_feat
            pl.BlockSpec((1, Lt, Din_t), bmap(3)),      # txt_feat
            pl.BlockSpec((1, Lv, 1), bmap(3)),          # vid query mask
            pl.BlockSpec((1, 1, Lv), bmap(3)),          # vid key mask
            pl.BlockSpec((1, Lt, 1), bmap(3)),          # txt query mask
            pl.BlockSpec((1, 1, Lt), bmap(3)),          # txt key mask
            pl.BlockSpec((Din_v, D), cmap(2)),          # vid_proj_w (bf16)
            pl.BlockSpec((Lv, D), cmap(2)),             # vadd (bias+pe+type)
            pl.BlockSpec((1, D), cmap(2)),              # vid_ln_g
            pl.BlockSpec((1, D), cmap(2)),              # vid_ln_b
            pl.BlockSpec((Din_t, D), cmap(2)),          # txt_proj_w (bf16)
            pl.BlockSpec((Lt, D), cmap(2)),             # tadd
            pl.BlockSpec((1, D), cmap(2)),              # txt_ln_g
            pl.BlockSpec((1, D), cmap(2)),              # txt_ln_b
            pl.BlockSpec((1, D, D6), lmap(3)),          # fused vid-stream proj W (bf16)
            pl.BlockSpec((1, 1, D6), lmap(3)),          # fused vid-stream proj b
            pl.BlockSpec((1, D, D6), lmap(3)),          # fused txt-stream proj W (bf16)
            pl.BlockSpec((1, 1, D6), lmap(3)),          # fused txt-stream proj b
            pl.BlockSpec((1, 2, D, F), lmap(4)),        # ffn w1 (bf16)
            pl.BlockSpec((1, 2, 1, F), lmap(4)),        # ffn b1
            pl.BlockSpec((1, 2, F, D), lmap(4)),        # ffn w2 (bf16)
            pl.BlockSpec((1, 2, 1, D), lmap(4)),        # ffn b2
            pl.BlockSpec((1, 2, 1, D), lmap(4)),        # ln gamma
            pl.BlockSpec((1, 2, 1, D), lmap(4)),        # ln beta
        ],
        out_specs=(pl.BlockSpec((1, Lv, D), bmap(3)),
                   pl.BlockSpec((1, Lt, D), bmap(3))),
        scratch_shapes=[
            pltpu.VMEM((Lv, D), f32),      # vid residual stream (carried over layers)
            pltpu.VMEM((Lt, D), f32),      # txt residual stream
            pltpu.VMEM((Lv, D6), f32),     # fused projections of the vid stream
            pltpu.VMEM((Lt, D6), f32),     # fused projections of the txt stream
            pltpu.VMEM((Lv, D), f32),      # vid attention context
            pltpu.VMEM((Lt, D), f32),      # txt attention context
            pltpu.VMEM((Lv, Lv), f32),     # mask vid-q x vid-k (hoisted to l==0)
            pltpu.VMEM((Lv, Lt), f32),     # mask vid-q x txt-k
            pltpu.VMEM((Lt, Lv), f32),     # mask txt-q x vid-k
            pltpu.VMEM((Lt, Lt), f32),     # mask txt-q x txt-k
        ],
        compiler_params=pltpu.CompilerParams(
            dimension_semantics=("parallel", "arbitrary"),
            vmem_limit_bytes=64 * 1024 * 1024),
    )(vid_feat, txt_feat, vqm, vkm, tqm, tkm,
      vpw, vadd, params["vid_ln_g"], params["vid_ln_b"],
      tpw, tadd, params["txt_ln_g"], params["txt_ln_b"],
      awv, abv, awt, abt, w1, b1, w2, b2, lng, lnb)
    return vid_out, txt_out


# ------------------------------- pure-JAX reference ------------------------------

def ref_forward(params, vid_feat, vid_mask, txt_feat, txt_mask, num_head):
    D = params["vid_proj_w"].shape[1]
    H, dh = num_head, D // num_head
    B, Lv, _ = vid_feat.shape
    Lt = txt_feat.shape[1]
    NL = params["attn_w"].shape[0]

    vid = vid_feat @ params["vid_proj_w"] + params["vid_proj_b"]
    txt = txt_feat @ params["txt_proj_w"] + params["txt_proj_b"]
    vid = _layernorm(vid + params["vid_pe"][None, :Lv] + params["type_vid"],
                     params["vid_ln_g"], params["vid_ln_b"])
    txt = _layernorm(txt + params["txt_pe"][None, :Lt] + params["type_txt"],
                     params["txt_ln_g"], params["txt_ln_b"])

    vm = vid_mask.astype(jnp.float32)
    tm = txt_mask.astype(jnp.float32)
    cat_m = jnp.concatenate([vm, tm], axis=1)
    vmask2d = vm[:, :, None] * cat_m[:, None, :]
    tmask2d = tm[:, :, None] * cat_m[:, None, :]

    def heads(x):
        return x.reshape(x.shape[0], x.shape[1], H, dh)

    for l in range(NL):
        aw, ab = params["attn_w"][l], params["attn_b"][l]
        w1, b1 = params["w1"][l], params["b1"][l]
        w2, b2 = params["w2"][l], params["b2"][l]
        lg, lb = params["ln_g"][l], params["ln_b"][l]

        def lin(x, i):
            return x @ aw[i] + ab[i]

        q_vv, k_vv, v_vv = lin(vid, 0), lin(vid, 1), lin(vid, 2)
        q_tv, k_tv, v_tv = lin(vid, 3), lin(txt, 4), lin(txt, 5)
        q_vt, k_vt, v_vt = lin(txt, 6), lin(vid, 7), lin(vid, 8)
        q_tt, k_tt, v_tt = lin(txt, 9), lin(txt, 10), lin(txt, 11)

        v_value = heads(jnp.concatenate([v_vv, v_tv], axis=1))
        t_value = heads(jnp.concatenate([v_vt, v_tt], axis=1))

        def logits(q, k):
            return jnp.einsum("bqhd,bkhd->bhqk", heads(q), heads(k))

        v_logits = jnp.concatenate([logits(q_vv, k_vv), logits(q_tv, k_tv)], axis=-1)
        t_logits = jnp.concatenate([logits(q_vt, k_vt), logits(q_tt, k_tt)], axis=-1)
        v_logits = jnp.where(vmask2d[:, None] > 0.5, v_logits, -10000.0)
        t_logits = jnp.where(tmask2d[:, None] > 0.5, t_logits, -10000.0)

        # NOTE: 1/sqrt(d_head) scaling AFTER softmax — matches the PyTorch source.
        v_probs = jax.nn.softmax(v_logits, axis=-1) / np.sqrt(dh)
        t_probs = jax.nn.softmax(t_logits, axis=-1) / np.sqrt(dh)
        vid_attn = jnp.einsum("bhqk,bkhd->bqhd", v_probs, v_value).reshape(B, Lv, D)
        txt_attn = jnp.einsum("bhqk,bkhd->bqhd", t_probs, t_value).reshape(B, Lt, D)

        vid1 = vid + vid_attn
        txt1 = txt + txt_attn

        def ffn_ln(x, idx):
            h = jax.nn.gelu(x @ w1[idx] + b1[idx], approximate=False)
            f = h @ w2[idx] + b2[idx]
            return _layernorm(f + x, lg[idx], lb[idx])

        vid, txt = ffn_ln(vid1, 0), ffn_ln(txt1, 1)
    return vid, txt


# --------------------------------- parameter init --------------------------------

def init_params(key, *, d_model, num_layer, input_vid_dim, input_txt_dim,
                ff_dim, max_vid_len, max_txt_len):
    # Weights stored already transposed to (in, out) relative to torch nn.Linear.
    # Per-layer weights are stacked on a leading num_layer axis.
    # TODO(synk): PyTorch `clones()` deep-copies one layer (identical init across
    # layers); here each layer gets its own deterministic random init.
    ks = jax.random.split(key, 14)

    def nrm(k, shape, scale=0.05):
        return scale * jax.random.normal(k, shape, jnp.float32)

    return dict(
        vid_proj_w=nrm(ks[0], (input_vid_dim, d_model)),
        vid_proj_b=nrm(ks[1], (1, d_model)),
        txt_proj_w=nrm(ks[2], (input_txt_dim, d_model)),
        txt_proj_b=nrm(ks[3], (1, d_model)),
        vid_pe=nrm(ks[4], (max_vid_len, d_model), 0.02),
        txt_pe=nrm(ks[5], (max_txt_len, d_model), 0.02),
        type_vid=nrm(ks[6], (1, d_model), 1.0),
        type_txt=nrm(ks[7], (1, d_model), 1.0),
        vid_ln_g=jnp.ones((1, d_model), jnp.float32),
        vid_ln_b=jnp.zeros((1, d_model), jnp.float32),
        txt_ln_g=jnp.ones((1, d_model), jnp.float32),
        txt_ln_b=jnp.zeros((1, d_model), jnp.float32),
        attn_w=nrm(ks[8], (num_layer, 12, d_model, d_model)),
        attn_b=nrm(ks[9], (num_layer, 12, d_model), 0.02),
        w1=nrm(ks[10], (num_layer, 2, d_model, ff_dim)),
        b1=nrm(ks[11], (num_layer, 2, ff_dim), 0.02),
        w2=nrm(ks[12], (num_layer, 2, ff_dim, d_model)),
        b2=nrm(ks[13], (num_layer, 2, d_model), 0.02),
        ln_g=jnp.ones((num_layer, 2, d_model), jnp.float32),
        ln_b=jnp.zeros((num_layer, 2, d_model), jnp.float32),
    )


# -------------------------------------- main -------------------------------------

if __name__ == "__main__":
    B, Lv, Lt = 2, 16, 8
    D_IN_VID, D_IN_TXT = 48, 48
    D_MODEL, NUM_HEAD, NUM_LAYER, FF_DIM = 32, 4, 2, 64
    assert D_MODEL % NUM_HEAD == 0

    key = jax.random.PRNGKey(0)
    kp, kv, kt = jax.random.split(key, 3)

    params = init_params(kp, d_model=D_MODEL, num_layer=NUM_LAYER,
                         input_vid_dim=D_IN_VID, input_txt_dim=D_IN_TXT,
                         ff_dim=FF_DIM, max_vid_len=32, max_txt_len=16)

    vid_feat = jax.random.normal(kv, (B, Lv, D_IN_VID), jnp.float32)
    txt_feat = jax.random.normal(kt, (B, Lt, D_IN_TXT), jnp.float32)
    vid_mask = jnp.arange(Lv)[None, :] < jnp.array([Lv, Lv - 5])[:, None]   # (B, Lv) bool
    txt_mask = jnp.arange(Lt)[None, :] < jnp.array([Lt, Lt - 3])[:, None]   # (B, Lt) bool

    vid_out, txt_out = vl_bert_forward(params, vid_feat, vid_mask,
                                       txt_feat, txt_mask, num_head=NUM_HEAD)
    jax.block_until_ready((vid_out, txt_out))

    vid_ref, txt_ref = ref_forward(params, vid_feat, vid_mask,
                                   txt_feat, txt_mask, NUM_HEAD)
    assert vid_out.shape == (B, Lv, D_MODEL) and txt_out.shape == (B, Lt, D_MODEL)
    # Tolerance accounts for bf16 matmul inputs (f32 accumulation) plus the erf
    # polynomial and approx-reciprocal softmax; observed error is well below this.
    assert np.allclose(np.asarray(vid_out), np.asarray(vid_ref), atol=3e-2, rtol=3e-2)
    assert np.allclose(np.asarray(txt_out), np.asarray(txt_ref), atol=3e-2, rtol=3e-2)

    print("KERNEL_OK")
</pallas_src>

<mosaic_0001>
module attributes {stable_mosaic.version = 11 : i64} {
  func.func @kernel(%arg0: i32, %arg1: i32, %arg2: memref<1x16x48xf32, #tpu.memory_space<vmem>>, %arg3: memref<1x8x48xf32, #tpu.memory_space<vmem>>, %arg4: memref<1x16x1xf32, #tpu.memory_space<vmem>>, %arg5: memref<1x1x16xf32, #tpu.memory_space<vmem>>, %arg6: memref<1x8x1xf32, #tpu.memory_space<vmem>>, %arg7: memref<1x1x8xf32, #tpu.memory_space<vmem>>, %arg8: memref<48x32xbf16, #tpu.memory_space<vmem>>, %arg9: memref<16x32xf32, #tpu.memory_space<vmem>>, %arg10: memref<1x32xf32, #tpu.memory_space<vmem>>, %arg11: memref<1x32xf32, #tpu.memory_space<vmem>>, %arg12: memref<48x32xbf16, #tpu.memory_space<vmem>>, %arg13: memref<8x32xf32, #tpu.memory_space<vmem>>, %arg14: memref<1x32xf32, #tpu.memory_space<vmem>>, %arg15: memref<1x32xf32, #tpu.memory_space<vmem>>, %arg16: memref<1x32x192xbf16, #tpu.memory_space<vmem>>, %arg17: memref<1x1x192xf32, #tpu.memory_space<vmem>>, %arg18: memref<1x32x192xbf16, #tpu.memory_space<vmem>>, %arg19: memref<1x1x192xf32, #tpu.memory_space<vmem>>, %arg20: memref<1x2x32x64xbf16, #tpu.memory_space<vmem>>, %arg21: memref<1x2x1x64xf32, #tpu.memory_space<vmem>>, %arg22: memref<1x2x64x32xbf16, #tpu.memory_space<vmem>>, %arg23: memref<1x2x1x32xf32, #tpu.memory_space<vmem>>, %arg24: memref<1x2x1x32xf32, #tpu.memory_space<vmem>>, %arg25: memref<1x2x1x32xf32, #tpu.memory_space<vmem>>, %arg26: memref<1x16x32xf32, #tpu.memory_space<vmem>>, %arg27: memref<1x8x32xf32, #tpu.memory_space<vmem>>, %arg28: memref<16x32xf32, #tpu.memory_space<vmem>>, %arg29: memref<8x32xf32, #tpu.memory_space<vmem>>, %arg30: memref<16x192xf32, #tpu.memory_space<vmem>>, %arg31: memref<8x192xf32, #tpu.memory_space<vmem>>, %arg32: memref<16x32xf32, #tpu.memory_space<vmem>>, %arg33: memref<8x32xf32, #tpu.memory_space<vmem>>, %arg34: memref<16x16xf32, #tpu.memory_space<vmem>>, %arg35: memref<16x8xf32, #tpu.memory_space<vmem>>, %arg36: memref<8x16xf32, #tpu.memory_space<vmem>>, %arg37: memref<8x8xf32, #tpu.memory_space<vmem>>) attributes {dimension_semantics = [#tpu.dimension_semantics<parallel>, #tpu.dimension_semantics<arbitrary>], iteration_bounds = array<i64: 2, 2>, scalar_prefetch = 0 : i64, scratch_operands = 10 : i64, tpu.core_type = #tpu.core_type<tc>, window_params = [{transform_indices = @transform_0, window_bounds = array<i64: 1, 16, 48>}, {transform_indices = @transform_1, window_bounds = array<i64: 1, 8, 48>}, {transform_indices = @transform_2, window_bounds = array<i64: 1, 16, 1>}, {transform_indices = @transform_3, window_bounds = array<i64: 1, 1, 16>}, {transform_indices = @transform_4, window_bounds = array<i64: 1, 8, 1>}, {transform_indices = @transform_5, window_bounds = array<i64: 1, 1, 8>}, {pipeline_mode = #tpu.pipeline_mode<synchronous>, transform_indices = @transform_6, window_bounds = array<i64: 48, 32>}, {pipeline_mode = #tpu.pipeline_mode<synchronous>, transform_indices = @transform_7, window_bounds = array<i64: 16, 32>}, {pipeline_mode = #tpu.pipeline_mode<synchronous>, transform_indices = @transform_8, window_bounds = array<i64: 1, 32>}, {pipeline_mode = #tpu.pipeline_mode<synchronous>, transform_indices = @transform_9, window_bounds = array<i64: 1, 32>}, {pipeline_mode = #tpu.pipeline_mode<synchronous>, transform_indices = @transform_10, window_bounds = array<i64: 48, 32>}, {pipeline_mode = #tpu.pipeline_mode<synchronous>, transform_indices = @transform_11, window_bounds = array<i64: 8, 32>}, {pipeline_mode = #tpu.pipeline_mode<synchronous>, transform_indices = @transform_12, window_bounds = array<i64: 1, 32>}, {pipeline_mode = #tpu.pipeline_mode<synchronous>, transform_indices = @transform_13, window_bounds = array<i64: 1, 32>}, {transform_indices = @transform_14, window_bounds = array<i64: 1, 32, 192>}, {transform_indices = @transform_15, window_bounds = array<i64: 1, 1, 192>}, {transform_indices = @transform_16, window_bounds = array<i64: 1, 32, 192>}, {transform_indices = @transform_17, window_bounds = array<i64: 1, 1, 192>}, {transform_indices = @transform_18, window_bounds = array<i64: 1, 2, 32, 64>}, {transform_indices = @transform_19, window_bounds = array<i64: 1, 2, 1, 64>}, {transform_indices = @transform_20, window_bounds = array<i64: 1, 2, 64, 32>}, {transform_indices = @transform_21, window_bounds = array<i64: 1, 2, 1, 32>}, {transform_indices = @transform_22, window_bounds = array<i64: 1, 2, 1, 32>}, {transform_indices = @transform_23, window_bounds = array<i64: 1, 2, 1, 32>}, {transform_indices = @transform_24, window_bounds = array<i64: 1, 16, 32>}, {transform_indices = @transform_25, window_bounds = array<i64: 1, 8, 32>}]} {
    %c0_i32 = arith.constant 0 : i32
    %0 = arith.cmpi eq, %arg1, %c0_i32 : i32
    %1 = arith.extui %0 : i1 to i32
    %c0_i32_0 = arith.constant 0 : i32
    %2 = arith.cmpi ne, %1, %c0_i32_0 : i32
    scf.if %2 {
      %c0_302 = arith.constant 0 : index
      %c0_303 = arith.constant 0 : index
      %c0_304 = arith.constant 0 : index
      %486 = vector.load %arg2[%c0_302, %c0_303, %c0_304] : memref<1x16x48xf32, #tpu.memory_space<vmem>>, vector<1x16x48xf32>
      %487 = vector.shape_cast %486 : vector<1x16x48xf32> to vector<16x48xf32>
      %488 = arith.truncf %487 : vector<16x48xf32> to vector<16x48xbf16>
      %c0_305 = arith.constant 0 : index
      %c0_306 = arith.constant 0 : index
      %489 = vector.load %arg8[%c0_305, %c0_306] : memref<48x32xbf16, #tpu.memory_space<vmem>>, vector<48x32xbf16>
      %cst_307 = arith.constant dense<0.000000e+00> : vector<16x32xf32>
      %490 = tpu.matmul %488, %489, %cst_307 {dimension_numbers = #tpu.dot_dimension_numbers<[1], [0], [0], [1], [0, 0, 1, 1], [], []>} : vector<16x48xbf16>, vector<48x32xbf16>, vector<16x32xf32> -> vector<16x32xf32>
      %c0_308 = arith.constant 0 : index
      %c0_309 = arith.constant 0 : index
      %491 = vector.load %arg9[%c0_308, %c0_309] : memref<16x32xf32, #tpu.memory_space<vmem>>, vector<16x32xf32>
      %492 = arith.addf %490, %491 : vector<16x32xf32>
      %c0_310 = arith.constant 0 : index
      %c0_311 = arith.constant 0 : index
      %493 = vector.load %arg10[%c0_310, %c0_311] : memref<1x32xf32, #tpu.memory_space<vmem>>, vector<1x32xf32>
      %c0_312 = arith.constant 0 : index
      %c0_313 = arith.constant 0 : index
      %494 = vector.load %arg11[%c0_312, %c0_313] : memref<1x32xf32, #tpu.memory_space<vmem>>, vector<1x32xf32>
      %cst_314 = arith.constant dense<0.000000e+00> : vector<16xf32>
      %495 = vector.multi_reduction <add>, %492, %cst_314 [1] : vector<16x32xf32> to vector<16xf32>
      %496 = vector.shape_cast %495 : vector<16xf32> to vector<16x1xf32>
      %cst_315 = arith.constant 3.200000e+01 : f32
      %497 = vector.broadcast %cst_315 : f32 to vector<16x1xf32>
      %498 = arith.divf %496, %497 : vector<16x1xf32>
      %499 = vector.broadcast %498 : vector<16x1xf32> to vector<16x32xf32>
      %500 = arith.subf %492, %499 : vector<16x32xf32>
      %501 = arith.mulf %500, %500 : vector<16x32xf32>
      %cst_316 = arith.constant dense<0.000000e+00> : vector<16xf32>
      %502 = vector.multi_reduction <add>, %501, %cst_316 [1] : vector<16x32xf32> to vector<16xf32>
      %503 = vector.shape_cast %502 : vector<16xf32> to vector<16x1xf32>
      %cst_317 = arith.constant 3.200000e+01 : f32
      %504 = vector.broadcast %cst_317 : f32 to vector<16x1xf32>
      %505 = arith.divf %503, %504 : vector<16x1xf32>
      %cst_318 = arith.constant 9.99999996E-13 : f32
      %506 = vector.broadcast %cst_318 : f32 to vector<16x1xf32>
      %507 = arith.addf %505, %506 : vector<16x1xf32>
      %508 = math.rsqrt %507 : vector<16x1xf32>
      %509 = vector.broadcast %508 : vector<16x1xf32> to vector<16x32xf32>
      %510 = arith.mulf %500, %509 : vector<16x32xf32>
      %511 = vector.broadcast %493 : vector<1x32xf32> to vector<16x32xf32>
      %512 = arith.mulf %510, %511 : vector<16x32xf32>
      %513 = vector.broadcast %494 : vector<1x32xf32> to vector<16x32xf32>
      %514 = arith.addf %512, %513 : vector<16x32xf32>
      %c0_319 = arith.constant 0 : index
      %c0_320 = arith.constant 0 : index
      %515 = vector.load %arg28[%c0_319, %c0_320] : memref<16x32xf32, #tpu.memory_space<vmem>>, vector<16x32xf32>
      tpu.vector_store %arg28[%c0_319, %c0_320], %514 {strides = array<i32>} : memref<16x32xf32, #tpu.memory_space<vmem>>, vector<16x32xf32>,
      %c0_321 = arith.constant 0 : index
      %c0_322 = arith.constant 0 : index
      %c0_323 = arith.constant 0 : index
      %516 = vector.load %arg3[%c0_321, %c0_322, %c0_323] : memref<1x8x48xf32, #tpu.memory_space<vmem>>, vector<1x8x48xf32>
      %517 = vector.shape_cast %516 : vector<1x8x48xf32> to vector<8x48xf32>
      %518 = arith.truncf %517 : vector<8x48xf32> to vector<8x48xbf16>
      %c0_324 = arith.constant 0 : index
      %c0_325 = arith.constant 0 : index
      %519 = vector.load %arg12[%c0_324, %c0_325] : memref<48x32xbf16, #tpu.memory_space<vmem>>, vector<48x32xbf16>
      %cst_326 = arith.constant dense<0.000000e+00> : vector<8x32xf32>
      %520 = tpu.matmul %518, %519, %cst_326 {dimension_numbers = #tpu.dot_dimension_numbers<[1], [0], [0], [1], [0, 0, 1, 1], [], []>} : vector<8x48xbf16>, vector<48x32xbf16>, vector<8x32xf32> -> vector<8x32xf32>
      %c0_327 = arith.constant 0 : index
      %c0_328 = arith.constant 0 : index
      %521 = vector.load %arg13[%c0_327, %c0_328] : memref<8x32xf32, #tpu.memory_space<vmem>>, vector<8x32xf32>
      %522 = arith.addf %520, %521 : vector<8x32xf32>
      %c0_329 = arith.constant 0 : index
      %c0_330 = arith.constant 0 : index
      %523 = vector.load %arg14[%c0_329, %c0_330] : memref<1x32xf32, #tpu.memory_space<vmem>>, vector<1x32xf32>
      %c0_331 = arith.constant 0 : index
      %c0_332 = arith.constant 0 : index
      %524 = vector.load %arg15[%c0_331, %c0_332] : memref<1x32xf32, #tpu.memory_space<vmem>>, vector<1x32xf32>
      %cst_333 = arith.constant dense<0.000000e+00> : vector<8xf32>
      %525 = vector.multi_reduction <add>, %522, %cst_333 [1] : vector<8x32xf32> to vector<8xf32>
      %526 = vector.shape_cast %525 : vector<8xf32> to vector<8x1xf32>
      %cst_334 = arith.constant 3.200000e+01 : f32
      %527 = vector.broadcast %cst_334 : f32 to vector<8x1xf32>
      %528 = arith.divf %526, %527 : vector<8x1xf32>
      %529 = vector.broadcast %528 : vector<8x1xf32> to vector<8x32xf32>
      %530 = arith.subf %522, %529 : vector<8x32xf32>
      %531 = arith.mulf %530, %530 : vector<8x32xf32>
      %cst_335 = arith.constant dense<0.000000e+00> : vector<8xf32>
      %532 = vector.multi_reduction <add>, %531, %cst_335 [1] : vector<8x32xf32> to vector<8xf32>
      %533 = vector.shape_cast %532 : vector<8xf32> to vector<8x1xf32>
      %cst_336 = arith.constant 3.200000e+01 : f32
      %534 = vector.broadcast %cst_336 : f32 to vector<8x1xf32>
      %535 = arith.divf %533, %534 : vector<8x1xf32>
      %cst_337 = arith.constant 9.99999996E-13 : f32
      %536 = vector.broadcast %cst_337 : f32 to vector<8x1xf32>
      %537 = arith.addf %535, %536 : vector<8x1xf32>
      %538 = math.rsqrt %537 : vector<8x1xf32>
      %539 = vector.broadcast %538 : vector<8x1xf32> to vector<8x32xf32>
      %540 = arith.mulf %530, %539 : vector<8x32xf32>
      %541 = vector.broadcast %523 : vector<1x32xf32> to vector<8x32xf32>
      %542 = arith.mulf %540, %541 : vector<8x32xf32>
      %543 = vector.broadcast %524 : vector<1x32xf32> to vector<8x32xf32>
      %544 = arith.addf %542, %543 : vector<8x32xf32>
      %c0_338 = arith.constant 0 : index
      %c0_339 = arith.constant 0 : index
      %545 = vector.load %arg29[%c0_338, %c0_339] : memref<8x32xf32, #tpu.memory_space<vmem>>, vector<8x32xf32>
      tpu.vector_store %arg29[%c0_338, %c0_339], %544 {strides = array<i32>} : memref<8x32xf32, #tpu.memory_space<vmem>>, vector<8x32xf32>,
      %c0_340 = arith.constant 0 : index
      %c0_341 = arith.constant 0 : index
      %c0_342 = arith.constant 0 : index
      %546 = vector.load %arg4[%c0_340, %c0_341, %c0_342] : memref<1x16x1xf32, #tpu.memory_space<vmem>>, vector<1x16x1xf32>
      %547 = vector.shape_cast %546 : vector<1x16x1xf32> to vector<16x1xf32>
      %c0_343 = arith.constant 0 : index
      %c0_344 = arith.constant 0 : index
      %c0_345 = arith.constant 0 : index
      %548 = vector.load %arg6[%c0_343, %c0_344, %c0_345] : memref<1x8x1xf32, #tpu.memory_space<vmem>>, vector<1x8x1xf32>
      %549 = vector.shape_cast %548 : vector<1x8x1xf32> to vector<8x1xf32>
      %c0_346 = arith.constant 0 : index
      %c0_347 = arith.constant 0 : index
      %c0_348 = arith.constant 0 : index
      %550 = vector.load %arg5[%c0_346, %c0_347, %c0_348] : memref<1x1x16xf32, #tpu.memory_space<vmem>>, vector<1x1x16xf32>
      %551 = vector.shape_cast %550 : vector<1x1x16xf32> to vector<1x16xf32>
      %c0_349 = arith.constant 0 : index
      %c0_350 = arith.constant 0 : index
      %c0_351 = arith.constant 0 : index
      %552 = vector.load %arg7[%c0_349, %c0_350, %c0_351] : memref<1x1x8xf32, #tpu.memory_space<vmem>>, vector<1x1x8xf32>
      %553 = vector.shape_cast %552 : vector<1x1x8xf32> to vector<1x8xf32>
      %554 = vector.broadcast %547 : vector<16x1xf32> to vector<16x16xf32>
      %555 = vector.broadcast %551 : vector<1x16xf32> to vector<16x16xf32>
      %556 = arith.mulf %554, %555 : vector<16x16xf32>
      %c0_352 = arith.constant 0 : index
      %c0_353 = arith.constant 0 : index
      %557 = vector.load %arg34[%c0_352, %c0_353] : memref<16x16xf32, #tpu.memory_space<vmem>>, vector<16x16xf32>
      tpu.vector_store %arg34[%c0_352, %c0_353], %556 {strides = array<i32>} : memref<16x16xf32, #tpu.memory_space<vmem>>, vector<16x16xf32>,
      %558 = vector.broadcast %547 : vector<16x1xf32> to vector<16x8xf32>
      %559 = vector.broadcast %553 : vector<1x8xf32> to vector<16x8xf32>
      %560 = arith.mulf %558, %559 : vector<16x8xf32>
      %c0_354 = arith.constant 0 : index
      %c0_355 = arith.constant 0 : index
      %561 = vector.load %arg35[%c0_354, %c0_355] : memref<16x8xf32, #tpu.memory_space<vmem>>, vector<16x8xf32>
      tpu.vector_store %arg35[%c0_354, %c0_355], %560 {strides = array<i32>} : memref<16x8xf32, #tpu.memory_space<vmem>>, vector<16x8xf32>,
      %562 = vector.broadcast %549 : vector<8x1xf32> to vector<8x16xf32>
      %563 = vector.broadcast %551 : vector<1x16xf32> to vector<8x16xf32>
      %564 = arith.mulf %562, %563 : vector<8x16xf32>
      %c0_356 = arith.constant 0 : index
      %c0_357 = arith.constant 0 : index
      %565 = vector.load %arg36[%c0_356, %c0_357] : memref<8x16xf32, #tpu.memory_space<vmem>>, vector<8x16xf32>
      tpu.vector_store %arg36[%c0_356, %c0_357], %564 {strides = array<i32>} : memref<8x16xf32, #tpu.memory_space<vmem>>, vector<8x16xf32>,
      %566 = vector.broadcast %549 : vector<8x1xf32> to vector<8x8xf32>
      %567 = vector.broadcast %553 : vector<1x8xf32> to vector<8x8xf32>
      %568 = arith.mulf %566, %567 : vector<8x8xf32>
      %c0_358 = arith.constant 0 : index
      %c0_359 = arith.constant 0 : index
      %569 = vector.load %arg37[%c0_358, %c0_359] : memref<8x8xf32, #tpu.memory_space<vmem>>, vector<8x8xf32>
      tpu.vector_store %arg37[%c0_358, %c0_359], %568 {strides = array<i32>} : memref<8x8xf32, #tpu.memory_space<vmem>>, vector<8x8xf32>,
    } else {
    }
    %c0 = arith.constant 0 : index
    %c0_1 = arith.constant 0 : index
    %3 = vector.load %arg28[%c0, %c0_1] : memref<16x32xf32, #tpu.memory_space<vmem>>, vector<16x32xf32>
    %c0_2 = arith.constant 0 : index
    %c0_3 = arith.constant 0 : index
    %4 = vector.load %arg29[%c0_2, %c0_3] : memref<8x32xf32, #tpu.memory_space<vmem>>, vector<8x32xf32>
    %5 = arith.truncf %3 : vector<16x32xf32> to vector<16x32xbf16>
    %c0_4 = arith.constant 0 : index
    %c0_5 = arith.constant 0 : index
    %c0_6 = arith.constant 0 : index
    %6 = vector.load %arg16[%c0_4, %c0_5, %c0_6] : memref<1x32x192xbf16, #tpu.memory_space<vmem>>, vector<1x32x192xbf16>
    %7 = vector.shape_cast %6 : vector<1x32x192xbf16> to vector<32x192xbf16>
    %cst = arith.constant dense<0.000000e+00> : vector<16x192xf32>
    %8 = tpu.matmul %5, %7, %cst {dimension_numbers = #tpu.dot_dimension_numbers<[1], [0], [0], [1], [0, 0, 1, 1], [], []>} : vector<16x32xbf16>, vector<32x192xbf16>, vector<16x192xf32> -> vector<16x192xf32>
    %c0_7 = arith.constant 0 : index
    %c0_8 = arith.constant 0 : index
    %c0_9 = arith.constant 0 : index
    %9 = vector.load %arg17[%c0_7, %c0_8, %c0_9] : memref<1x1x192xf32, #tpu.memory_space<vmem>>, vector<1x1x192xf32>
    %10 = vector.shape_cast %9 : vector<1x1x192xf32> to vector<1x192xf32>
    %11 = vector.broadcast %10 : vector<1x192xf32> to vector<16x192xf32>
    %12 = arith.addf %8, %11 : vector<16x192xf32>
    %c0_10 = arith.constant 0 : index
    %c0_11 = arith.constant 0 : index
    %13 = vector.load %arg30[%c0_10, %c0_11] : memref<16x192xf32, #tpu.memory_space<vmem>>, vector<16x192xf32>
    tpu.vector_store %arg30[%c0_10, %c0_11], %12 {strides = array<i32>} : memref<16x192xf32, #tpu.memory_space<vmem>>, vector<16x192xf32>,
    %14 = arith.truncf %4 : vector<8x32xf32> to vector<8x32xbf16>
    %c0_12 = arith.constant 0 : index
    %c0_13 = arith.constant 0 : index
    %c0_14 = arith.constant 0 : index
    %15 = vector.load %arg18[%c0_12, %c0_13, %c0_14] : memref<1x32x192xbf16, #tpu.memory_space<vmem>>, vector<1x32x192xbf16>
    %16 = vector.shape_cast %15 : vector<1x32x192xbf16> to vector<32x192xbf16>
    %cst_15 = arith.constant dense<0.000000e+00> : vector<8x192xf32>
    %17 = tpu.matmul %14, %16, %cst_15 {dimension_numbers = #tpu.dot_dimension_numbers<[1], [0], [0], [1], [0, 0, 1, 1], [], []>} : vector<8x32xbf16>, vector<32x192xbf16>, vector<8x192xf32> -> vector<8x192xf32>
    %c0_16 = arith.constant 0 : index
    %c0_17 = arith.constant 0 : index
    %c0_18 = arith.constant 0 : index
    %18 = vector.load %arg19[%c0_16, %c0_17, %c0_18] : memref<1x1x192xf32, #tpu.memory_space<vmem>>, vector<1x1x192xf32>
    %19 = vector.shape_cast %18 : vector<1x1x192xf32> to vector<1x192xf32>
    %20 = vector.broadcast %19 : vector<1x192xf32> to vector<8x192xf32>
    %21 = arith.addf %17, %20 : vector<8x192xf32>
    %c0_19 = arith.constant 0 : index
    %c0_20 = arith.constant 0 : index
    %22 = vector.load %arg31[%c0_19, %c0_20] : memref<8x192xf32, #tpu.memory_space<vmem>>, vector<8x192xf32>
    tpu.vector_store %arg31[%c0_19, %c0_20], %21 {strides = array<i32>} : memref<8x192xf32, #tpu.memory_space<vmem>>, vector<8x192xf32>,
    %c0_21 = arith.constant 0 : index
    %c0_22 = arith.constant 0 : index
    %23 = vector.load %arg34[%c0_21, %c0_22] : memref<16x16xf32, #tpu.memory_space<vmem>>, vector<16x16xf32>
    %cst_23 = arith.constant 5.000000e-01 : f32
    %24 = vector.broadcast %cst_23 : f32 to vector<16x16xf32>
    %25 = arith.cmpf ogt, %23, %24 : vector<16x16xf32>
    %c0_24 = arith.constant 0 : index
    %c0_25 = arith.constant 0 : index
    %26 = vector.load %arg35[%c0_24, %c0_25] : memref<16x8xf32, #tpu.memory_space<vmem>>, vector<16x8xf32>
    %cst_26 = arith.constant 5.000000e-01 : f32
    %27 = vector.broadcast %cst_26 : f32 to vector<16x8xf32>
    %28 = arith.cmpf ogt, %26, %27 : vector<16x8xf32>
    %c0_27 = arith.constant 0 : index
    %c0_28 = arith.constant 0 : index
    %29 = vector.load %arg30[%c0_27, %c0_28] : memref<16x192xf32, #tpu.memory_space<vmem>>, vector<16x8xf32>
    %c0_29 = arith.constant 0 : index
    %c96 = arith.constant 96 : index
    %30 = vector.load %arg30[%c0_29, %c96] : memref<16x192xf32, #tpu.memory_space<vmem>>, vector<16x8xf32>
    %c0_30 = arith.constant 0 : index
    %c32 = arith.constant 32 : index
    %31 = vector.load %arg30[%c0_30, %c32] : memref<16x192xf32, #tpu.memory_space<vmem>>, vector<16x8xf32>
    %c0_31 = arith.constant 0 : index
    %c64 = arith.constant 64 : index
    %32 = vector.load %arg30[%c0_31, %c64] : memref<16x192xf32, #tpu.memory_space<vmem>>, vector<16x8xf32>
    %c0_32 = arith.constant 0 : index
    %c0_33 = arith.constant 0 : index
    %33 = vector.load %arg31[%c0_32, %c0_33] : memref<8x192xf32, #tpu.memory_space<vmem>>, vector<8x8xf32>
    %c0_34 = arith.constant 0 : index
    %c32_35 = arith.constant 32 : index
    %34 = vector.load %arg31[%c0_34, %c32_35] : memref<8x192xf32, #tpu.memory_space<vmem>>, vector<8x8xf32>
    %cst_36 = arith.constant dense<0.000000e+00> : vector<16x16xf32>
    %35 = tpu.matmul %29, %31, %cst_36 {dimension_numbers = #tpu.dot_dimension_numbers<[1], [1], [0], [0], [0, 0, 1, 0], [], []>} : vector<16x8xf32>, vector<16x8xf32>, vector<16x16xf32> -> vector<16x16xf32>
    %cst_37 = arith.constant dense<0.000000e+00> : vector<16x8xf32>
    %36 = tpu.matmul %30, %33, %cst_37 {dimension_numbers = #tpu.dot_dimension_numbers<[1], [1], [0], [0], [0, 0, 1, 0], [], []>} : vector<16x8xf32>, vector<8x8xf32>, vector<16x8xf32> -> vector<16x8xf32>
    %cst_38 = arith.constant -1.000000e+04 : f32
    %37 = vector.broadcast %cst_38 : f32 to vector<16x16xf32>
    %38 = arith.select %25, %35, %37 : vector<16x16xi1>, vector<16x16xf32>
    %cst_39 = arith.constant -1.000000e+04 : f32
    %39 = vector.broadcast %cst_39 : f32 to vector<16x8xf32>
    %40 = arith.select %28, %36, %39 : vector<16x8xi1>, vector<16x8xf32>
    %cst_40 = arith.constant dense<0xFF800000> : vector<16xf32>
    %41 = vector.multi_reduction <maximumf>, %38, %cst_40 [1] : vector<16x16xf32> to vector<16xf32>
    %42 = vector.shape_cast %41 : vector<16xf32> to vector<16x1xf32>
    %cst_41 = arith.constant dense<0xFF800000> : vector<16xf32>
    %43 = vector.multi_reduction <maximumf>, %40, %cst_41 [1] : vector<16x8xf32> to vector<16xf32>
    %44 = vector.shape_cast %43 : vector<16xf32> to vector<16x1xf32>
    %45 = arith.maximumf %42, %44 : vector<16x1xf32>
    %46 = vector.broadcast %45 : vector<16x1xf32> to vector<16x16xf32>
    %47 = arith.subf %38, %46 : vector<16x16xf32>
    %48 = math.exp %47 : vector<16x16xf32>
    %49 = vector.broadcast %45 : vector<16x1xf32> to vector<16x8xf32>
    %50 = arith.subf %40, %49 : vector<16x8xf32>
    %51 = math.exp %50 : vector<16x8xf32>
    %cst_42 = arith.constant dense<0.000000e+00> : vector<16xf32>
    %52 = vector.multi_reduction <add>, %48, %cst_42 [1] : vector<16x16xf32> to vector<16xf32>
    %53 = vector.shape_cast %52 : vector<16xf32> to vector<16x1xf32>
    %cst_43 = arith.constant dense<0.000000e+00> : vector<16xf32>
    %54 = vector.multi_reduction <add>, %51, %cst_43 [1] : vector<16x8xf32> to vector<16xf32>
    %55 = vector.shape_cast %54 : vector<16xf32> to vector<16x1xf32>
    %56 = arith.addf %53, %55 : vector<16x1xf32>
    %57 = tpu.reciprocal %56 {approx = true} : vector<16x1xf32> -> vector<16x1xf32>
    %cst_44 = arith.constant dense<0.000000e+00> : vector<16x8xf32>
    %58 = tpu.matmul %48, %32, %cst_44 {dimension_numbers = #tpu.dot_dimension_numbers<[1], [0], [0], [1], [0, 0, 1, 1], [], []>} : vector<16x16xf32>, vector<16x8xf32>, vector<16x8xf32> -> vector<16x8xf32>
    %cst_45 = arith.constant dense<0.000000e+00> : vector<16x8xf32>
    %59 = tpu.matmul %51, %34, %cst_45 {dimension_numbers = #tpu.dot_dimension_numbers<[1], [0], [0], [1], [0, 0, 1, 1], [], []>} : vector<16x8xf32>, vector<8x8xf32>, vector<16x8xf32> -> vector<16x8xf32>
    %60 = arith.addf %58, %59 : vector<16x8xf32>
    %61 = vector.broadcast %57 : vector<16x1xf32> to vector<16x8xf32>
    %62 = arith.mulf %61, %60 : vector<16x8xf32>
    %c0_46 = arith.constant 0 : index
    %c0_47 = arith.constant 0 : index
    %63 = vector.load %arg32[%c0_46, %c0_47] : memref<16x32xf32, #tpu.memory_space<vmem>>, vector<16x8xf32>
    tpu.vector_store %arg32[%c0_46, %c0_47], %62 {strides = array<i32>} : memref<16x32xf32, #tpu.memory_space<vmem>>, vector<16x8xf32>,
    %c0_48 = arith.constant 0 : index
    %c8 = arith.constant 8 : index
    %64 = vector.load %arg30[%c0_48, %c8] : memref<16x192xf32, #tpu.memory_space<vmem>>, vector<16x8xf32>
    %c0_49 = arith.constant 0 : index
    %c104 = arith.constant 104 : index
    %65 = vector.load %arg30[%c0_49, %c104] : memref<16x192xf32, #tpu.memory_space<vmem>>, vector<16x8xf32>
    %c0_50 = arith.constant 0 : index
    %c40 = arith.constant 40 : index
    %66 = vector.load %arg30[%c0_50, %c40] : memref<16x192xf32, #tpu.memory_space<vmem>>, vector<16x8xf32>
    %c0_51 = arith.constant 0 : index
    %c72 = arith.constant 72 : index
    %67 = vector.load %arg30[%c0_51, %c72] : memref<16x192xf32, #tpu.memory_space<vmem>>, vector<16x8xf32>
    %c0_52 = arith.constant 0 : index
    %c8_53 = arith.constant 8 : index
    %68 = vector.load %arg31[%c0_52, %c8_53] : memref<8x192xf32, #tpu.memory_space<vmem>>, vector<8x8xf32>
    %c0_54 = arith.constant 0 : index
    %c40_55 = arith.constant 40 : index
    %69 = vector.load %arg31[%c0_54, %c40_55] : memref<8x192xf32, #tpu.memory_space<vmem>>, vector<8x8xf32>
    %cst_56 = arith.constant dense<0.000000e+00> : vector<16x16xf32>
    %70 = tpu.matmul %64, %66, %cst_56 {dimension_numbers = #tpu.dot_dimension_numbers<[1], [1], [0], [0], [0, 0, 1, 0], [], []>} : vector<16x8xf32>, vector<16x8xf32>, vector<16x16xf32> -> vector<16x16xf32>
    %cst_57 = arith.constant dense<0.000000e+00> : vector<16x8xf32>
    %71 = tpu.matmul %65, %68, %cst_57 {dimension_numbers = #tpu.dot_dimension_numbers<[1], [1], [0], [0], [0, 0, 1, 0], [], []>} : vector<16x8xf32>, vector<8x8xf32>, vector<16x8xf32> -> vector<16x8xf32>
    %cst_58 = arith.constant -1.000000e+04 : f32
    %72 = vector.broadcast %cst_58 : f32 to vector<16x16xf32>
    %73 = arith.select %25, %70, %72 : vector<16x16xi1>, vector<16x16xf32>
    %cst_59 = arith.constant -1.000000e+04 : f32
    %74 = vector.broadcast %cst_59 : f32 to vector<16x8xf32>
    %75 = arith.select %28, %71, %74 : vector<16x8xi1>, vector<16x8xf32>
    %cst_60 = arith.constant dense<0xFF800000> : vector<16xf32>
    %76 = vector.multi_reduction <maximumf>, %73, %cst_60 [1] : vector<16x16xf32> to vector<16xf32>
    %77 = vector.shape_cast %76 : vector<16xf32> to vector<16x1xf32>
    %cst_61 = arith.constant dense<0xFF800000> : vector<16xf32>
    %78 = vector.multi_reduction <maximumf>, %75, %cst_61 [1] : vector<16x8xf32> to vector<16xf32>
    %79 = vector.shape_cast %78 : vector<16xf32> to vector<16x1xf32>
    %80 = arith.maximumf %77, %79 : vector<16x1xf32>
    %81 = vector.broadcast %80 : vector<16x1xf32> to vector<16x16xf32>
    %82 = arith.subf %73, %81 : vector<16x16xf32>
    %83 = math.exp %82 : vector<16x16xf32>
    %84 = vector.broadcast %80 : vector<16x1xf32> to vector<16x8xf32>
    %85 = arith.subf %75, %84 : vector<16x8xf32>
    %86 = math.exp %85 : vector<16x8xf32>
    %cst_62 = arith.constant dense<0.000000e+00> : vector<16xf32>
    %87 = vector.multi_reduction <add>, %83, %cst_62 [1] : vector<16x16xf32> to vector<16xf32>
    %88 = vector.shape_cast %87 : vector<16xf32> to vector<16x1xf32>
    %cst_63 = arith.constant dense<0.000000e+00> : vector<16xf32>
    %89 = vector.multi_reduction <add>, %86, %cst_63 [1] : vector<16x8xf32> to vector<16xf32>
    %90 = vector.shape_cast %89 : vector<16xf32> to vector<16x1xf32>
    %91 = arith.addf %88, %90 : vector<16x1xf32>
    %92 = tpu.reciprocal %91 {approx = true} : vector<16x1xf32> -> vector<16x1xf32>
    %cst_64 = arith.constant dense<0.000000e+00> : vector<16x8xf32>
    %93 = tpu.matmul %83, %67, %cst_64 {dimension_numbers = #tpu.dot_dimension_numbers<[1], [0], [0], [1], [0, 0, 1, 1], [], []>} : vector<16x16xf32>, vector<16x8xf32>, vector<16x8xf32> -> vector<16x8xf32>
    %cst_65 = arith.constant dense<0.000000e+00> : vector<16x8xf32>
    %94 = tpu.matmul %86, %69, %cst_65 {dimension_numbers = #tpu.dot_dimension_numbers<[1], [0], [0], [1], [0, 0, 1, 1], [], []>} : vector<16x8xf32>, vector<8x8xf32>, vector<16x8xf32> -> vector<16x8xf32>
    %95 = arith.addf %93, %94 : vector<16x8xf32>
    %96 = vector.broadcast %92 : vector<16x1xf32> to vector<16x8xf32>
    %97 = arith.mulf %96, %95 : vector<16x8xf32>
    %c0_66 = arith.constant 0 : index
    %c8_67 = arith.constant 8 : index
    %98 = vector.load %arg32[%c0_66, %c8_67] : memref<16x32xf32, #tpu.memory_space<vmem>>, vector<16x8xf32>
    tpu.vector_store %arg32[%c0_66, %c8_67], %97 {strides = array<i32>} : memref<16x32xf32, #tpu.memory_space<vmem>>, vector<16x8xf32>,
    %c0_68 = arith.constant 0 : index
    %c16 = arith.constant 16 : index
    %99 = vector.load %arg30[%c0_68, %c16] : memref<16x192xf32, #tpu.memory_space<vmem>>, vector<16x8xf32>
    %c0_69 = arith.constant 0 : index
    %c112 = arith.constant 112 : index
    %100 = vector.load %arg30[%c0_69, %c112] : memref<16x192xf32, #tpu.memory_space<vmem>>, vector<16x8xf32>
    %c0_70 = arith.constant 0 : index
    %c48 = arith.constant 48 : index
    %101 = vector.load %arg30[%c0_70, %c48] : memref<16x192xf32, #tpu.memory_space<vmem>>, vector<16x8xf32>
    %c0_71 = arith.constant 0 : index
    %c80 = arith.constant 80 : index
    %102 = vector.load %arg30[%c0_71, %c80] : memref<16x192xf32, #tpu.memory_space<vmem>>, vector<16x8xf32>
    %c0_72 = arith.constant 0 : index
    %c16_73 = arith.constant 16 : index
    %103 = vector.load %arg31[%c0_72, %c16_73] : memref<8x192xf32, #tpu.memory_space<vmem>>, vector<8x8xf32>
    %c0_74 = arith.constant 0 : index
    %c48_75 = arith.constant 48 : index
    %104 = vector.load %arg31[%c0_74, %c48_75] : memref<8x192xf32, #tpu.memory_space<vmem>>, vector<8x8xf32>
    %cst_76 = arith.constant dense<0.000000e+00> : vector<16x16xf32>
    %105 = tpu.matmul %99, %101, %cst_76 {dimension_numbers = #tpu.dot_dimension_numbers<[1], [1], [0], [0], [0, 0, 1, 0], [], []>} : vector<16x8xf32>, vector<16x8xf32>, vector<16x16xf32> -> vector<16x16xf32>
    %cst_77 = arith.constant dense<0.000000e+00> : vector<16x8xf32>
    %106 = tpu.matmul %100, %103, %cst_77 {dimension_numbers = #tpu.dot_dimension_numbers<[1], [1], [0], [0], [0, 0, 1, 0], [], []>} : vector<16x8xf32>, vector<8x8xf32>, vector<16x8xf32> -> vector<16x8xf32>
    %cst_78 = arith.constant -1.000000e+04 : f32
    %107 = vector.broadcast %cst_78 : f32 to vector<16x16xf32>
    %108 = arith.select %25, %105, %107 : vector<16x16xi1>, vector<16x16xf32>
    %cst_79 = arith.constant -1.000000e+04 : f32
    %109 = vector.broadcast %cst_79 : f32 to vector<16x8xf32>
    %110 = arith.select %28, %106, %109 : vector<16x8xi1>, vector<16x8xf32>
    %cst_80 = arith.constant dense<0xFF800000> : vector<16xf32>
    %111 = vector.multi_reduction <maximumf>, %108, %cst_80 [1] : vector<16x16xf32> to vector<16xf32>
    %112 = vector.shape_cast %111 : vector<16xf32> to vector<16x1xf32>
    %cst_81 = arith.constant dense<0xFF800000> : vector<16xf32>
    %113 = vector.multi_reduction <maximumf>, %110, %cst_81 [1] : vector<16x8xf32> to vector<16xf32>
    %114 = vector.shape_cast %113 : vector<16xf32> to vector<16x1xf32>
    %115 = arith.maximumf %112, %114 : vector<16x1xf32>
    %116 = vector.broadcast %115 : vector<16x1xf32> to vector<16x16xf32>
    %117 = arith.subf %108, %116 : vector<16x16xf32>
    %118 = math.exp %117 : vector<16x16xf32>
    %119 = vector.broadcast %115 : vector<16x1xf32> to vector<16x8xf32>
    %120 = arith.subf %110, %119 : vector<16x8xf32>
    %121 = math.exp %120 : vector<16x8xf32>
    %cst_82 = arith.constant dense<0.000000e+00> : vector<16xf32>
    %122 = vector.multi_reduction <add>, %118, %cst_82 [1] : vector<16x16xf32> to vector<16xf32>
    %123 = vector.shape_cast %122 : vector<16xf32> to vector<16x1xf32>
    %cst_83 = arith.constant dense<0.000000e+00> : vector<16xf32>
    %124 = vector.multi_reduction <add>, %121, %cst_83 [1] : vector<16x8xf32> to vector<16xf32>
    %125 = vector.shape_cast %124 : vector<16xf32> to vector<16x1xf32>
    %126 = arith.addf %123, %125 : vector<16x1xf32>
    %127 = tpu.reciprocal %126 {approx = true} : vector<16x1xf32> -> vector<16x1xf32>
    %cst_84 = arith.constant dense<0.000000e+00> : vector<16x8xf32>
    %128 = tpu.matmul %118, %102, %cst_84 {dimension_numbers = #tpu.dot_dimension_numbers<[1], [0], [0], [1], [0, 0, 1, 1], [], []>} : vector<16x16xf32>, vector<16x8xf32>, vector<16x8xf32> -> vector<16x8xf32>
    %cst_85 = arith.constant dense<0.000000e+00> : vector<16x8xf32>
    %129 = tpu.matmul %121, %104, %cst_85 {dimension_numbers = #tpu.dot_dimension_numbers<[1], [0], [0], [1], [0, 0, 1, 1], [], []>} : vector<16x8xf32>, vector<8x8xf32>, vector<16x8xf32> -> vector<16x8xf32>
    %130 = arith.addf %128, %129 : vector<16x8xf32>
    %131 = vector.broadcast %127 : vector<16x1xf32> to vector<16x8xf32>
    %132 = arith.mulf %131, %130 : vector<16x8xf32>
    %c0_86 = arith.constant 0 : index
    %c16_87 = arith.constant 16 : index
    %133 = vector.load %arg32[%c0_86, %c16_87] : memref<16x32xf32, #tpu.memory_space<vmem>>, vector<16x8xf32>
    tpu.vector_store %arg32[%c0_86, %c16_87], %132 {strides = array<i32>} : memref<16x32xf32, #tpu.memory_space<vmem>>, vector<16x8xf32>,
    %c0_88 = arith.constant 0 : index
    %c24 = arith.constant 24 : index
    %134 = vector.load %arg30[%c0_88, %c24] : memref<16x192xf32, #tpu.memory_space<vmem>>, vector<16x8xf32>
    %c0_89 = arith.constant 0 : index
    %c120 = arith.constant 120 : index
    %135 = vector.load %arg30[%c0_89, %c120] : memref<16x192xf32, #tpu.memory_space<vmem>>, vector<16x8xf32>
    %c0_90 = arith.constant 0 : index
    %c56 = arith.constant 56 : index
    %136 = vector.load %arg30[%c0_90, %c56] : memref<16x192xf32, #tpu.memory_space<vmem>>, vector<16x8xf32>
    %c0_91 = arith.constant 0 : index
    %c88 = arith.constant 88 : index
    %137 = vector.load %arg30[%c0_91, %c88] : memref<16x192xf32, #tpu.memory_space<vmem>>, vector<16x8xf32>
    %c0_92 = arith.constant 0 : index
    %c24_93 = arith.constant 24 : index
    %138 = vector.load %arg31[%c0_92, %c24_93] : memref<8x192xf32, #tpu.memory_space<vmem>>, vector<8x8xf32>
    %c0_94 = arith.constant 0 : index
    %c56_95 = arith.constant 56 : index
    %139 = vector.load %arg31[%c0_94, %c56_95] : memref<8x192xf32, #tpu.memory_space<vmem>>, vector<8x8xf32>
    %cst_96 = arith.constant dense<0.000000e+00> : vector<16x16xf32>
    %140 = tpu.matmul %134, %136, %cst_96 {dimension_numbers = #tpu.dot_dimension_numbers<[1], [1], [0], [0], [0, 0, 1, 0], [], []>} : vector<16x8xf32>, vector<16x8xf32>, vector<16x16xf32> -> vector<16x16xf32>
    %cst_97 = arith.constant dense<0.000000e+00> : vector<16x8xf32>
    %141 = tpu.matmul %135, %138, %cst_97 {dimension_numbers = #tpu.dot_dimension_numbers<[1], [1], [0], [0], [0, 0, 1, 0], [], []>} : vector<16x8xf32>, vector<8x8xf32>, vector<16x8xf32> -> vector<16x8xf32>
    %cst_98 = arith.constant -1.000000e+04 : f32
    %142 = vector.broadcast %cst_98 : f32 to vector<16x16xf32>
    %143 = arith.select %25, %140, %142 : vector<16x16xi1>, vector<16x16xf32>
    %cst_99 = arith.constant -1.000000e+04 : f32
    %144 = vector.broadcast %cst_99 : f32 to vector<16x8xf32>
    %145 = arith.select %28, %141, %144 : vector<16x8xi1>, vector<16x8xf32>
    %cst_100 = arith.constant dense<0xFF800000> : vector<16xf32>
    %146 = vector.multi_reduction <maximumf>, %143, %cst_100 [1] : vector<16x16xf32> to vector<16xf32>
    %147 = vector.shape_cast %146 : vector<16xf32> to vector<16x1xf32>
    %cst_101 = arith.constant dense<0xFF800000> : vector<16xf32>
    %148 = vector.multi_reduction <maximumf>, %145, %cst_101 [1] : vector<16x8xf32> to vector<16xf32>
    %149 = vector.shape_cast %148 : vector<16xf32> to vector<16x1xf32>
    %150 = arith.maximumf %147, %149 : vector<16x1xf32>
    %151 = vector.broadcast %150 : vector<16x1xf32> to vector<16x16xf32>
    %152 = arith.subf %143, %151 : vector<16x16xf32>
    %153 = math.exp %152 : vector<16x16xf32>
    %154 = vector.broadcast %150 : vector<16x1xf32> to vector<16x8xf32>
    %155 = arith.subf %145, %154 : vector<16x8xf32>
    %156 = math.exp %155 : vector<16x8xf32>
    %cst_102 = arith.constant dense<0.000000e+00> : vector<16xf32>
    %157 = vector.multi_reduction <add>, %153, %cst_102 [1] : vector<16x16xf32> to vector<16xf32>
    %158 = vector.shape_cast %157 : vector<16xf32> to vector<16x1xf32>
    %cst_103 = arith.constant dense<0.000000e+00> : vector<16xf32>
    %159 = vector.multi_reduction <add>, %156, %cst_103 [1] : vector<16x8xf32> to vector<16xf32>
    %160 = vector.shape_cast %159 : vector<16xf32> to vector<16x1xf32>
    %161 = arith.addf %158, %160 : vector<16x1xf32>
    %162 = tpu.reciprocal %161 {approx = true} : vector<16x1xf32> -> vector<16x1xf32>
    %cst_104 = arith.constant dense<0.000000e+00> : vector<16x8xf32>
    %163 = tpu.matmul %153, %137, %cst_104 {dimension_numbers = #tpu.dot_dimension_numbers<[1], [0], [0], [1], [0, 0, 1, 1], [], []>} : vector<16x16xf32>, vector<16x8xf32>, vector<16x8xf32> -> vector<16x8xf32>
    %cst_105 = arith.constant dense<0.000000e+00> : vector<16x8xf32>
    %164 = tpu.matmul %156, %139, %cst_105 {dimension_numbers = #tpu.dot_dimension_numbers<[1], [0], [0], [1], [0, 0, 1, 1], [], []>} : vector<16x8xf32>, vector<8x8xf32>, vector<16x8xf32> -> vector<16x8xf32>
    %165 = arith.addf %163, %164 : vector<16x8xf32>
    %166 = vector.broadcast %162 : vector<16x1xf32> to vector<16x8xf32>
    %167 = arith.mulf %166, %165 : vector<16x8xf32>
    %c0_106 = arith.constant 0 : index
    %c24_107 = arith.constant 24 : index
    %168 = vector.load %arg32[%c0_106, %c24_107] : memref<16x32xf32, #tpu.memory_space<vmem>>, vector<16x8xf32>
    tpu.vector_store %arg32[%c0_106, %c24_107], %167 {strides = array<i32>} : memref<16x32xf32, #tpu.memory_space<vmem>>, vector<16x8xf32>,
    %c0_108 = arith.constant 0 : index
    %c0_109 = arith.constant 0 : index
    %169 = vector.load %arg36[%c0_108, %c0_109] : memref<8x16xf32, #tpu.memory_space<vmem>>, vector<8x16xf32>
    %cst_110 = arith.constant 5.000000e-01 : f32
    %170 = vector.broadcast %cst_110 : f32 to vector<8x16xf32>
    %171 = arith.cmpf ogt, %169, %170 : vector<8x16xf32>
    %c0_111 = arith.constant 0 : index
    %c0_112 = arith.constant 0 : index
    %172 = vector.load %arg37[%c0_111, %c0_112] : memref<8x8xf32, #tpu.memory_space<vmem>>, vector<8x8xf32>
    %cst_113 = arith.constant 5.000000e-01 : f32
    %173 = vector.broadcast %cst_113 : f32 to vector<8x8xf32>
    %174 = arith.cmpf ogt, %172, %173 : vector<8x8xf32>
    %c0_114 = arith.constant 0 : index
    %c64_115 = arith.constant 64 : index
    %175 = vector.load %arg31[%c0_114, %c64_115] : memref<8x192xf32, #tpu.memory_space<vmem>>, vector<8x8xf32>
    %c0_116 = arith.constant 0 : index
    %c96_117 = arith.constant 96 : index
    %176 = vector.load %arg31[%c0_116, %c96_117] : memref<8x192xf32, #tpu.memory_space<vmem>>, vector<8x8xf32>
    %c0_118 = arith.constant 0 : index
    %c128 = arith.constant 128 : index
    %177 = vector.load %arg30[%c0_118, %c128] : memref<16x192xf32, #tpu.memory_space<vmem>>, vector<16x8xf32>
    %c0_119 = arith.constant 0 : index
    %c160 = arith.constant 160 : index
    %178 = vector.load %arg30[%c0_119, %c160] : memref<16x192xf32, #tpu.memory_space<vmem>>, vector<16x8xf32>
    %c0_120 = arith.constant 0 : index
    %c128_121 = arith.constant 128 : index
    %179 = vector.load %arg31[%c0_120, %c128_121] : memref<8x192xf32, #tpu.memory_space<vmem>>, vector<8x8xf32>
    %c0_122 = arith.constant 0 : index
    %c160_123 = arith.constant 160 : index
    %180 = vector.load %arg31[%c0_122, %c160_123] : memref<8x192xf32, #tpu.memory_space<vmem>>, vector<8x8xf32>
    %cst_124 = arith.constant dense<0.000000e+00> : vector<8x16xf32>
    %181 = tpu.matmul %175, %177, %cst_124 {dimension_numbers = #tpu.dot_dimension_numbers<[1], [1], [0], [0], [0, 0, 1, 0], [], []>} : vector<8x8xf32>, vector<16x8xf32>, vector<8x16xf32> -> vector<8x16xf32>
    %cst_125 = arith.constant dense<0.000000e+00> : vector<8x8xf32>
    %182 = tpu.matmul %176, %179, %cst_125 {dimension_numbers = #tpu.dot_dimension_numbers<[1], [1], [0], [0], [0, 0, 1, 0], [], []>} : vector<8x8xf32>, vector<8x8xf32>, vector<8x8xf32> -> vector<8x8xf32>
    %cst_126 = arith.constant -1.000000e+04 : f32
    %183 = vector.broadcast %cst_126 : f32 to vector<8x16xf32>
    %184 = arith.select %171, %181, %183 : vector<8x16xi1>, vector<8x16xf32>
    %cst_127 = arith.constant -1.000000e+04 : f32
    %185 = vector.broadcast %cst_127 : f32 to vector<8x8xf32>
    %186 = arith.select %174, %182, %185 : vector<8x8xi1>, vector<8x8xf32>
    %cst_128 = arith.constant dense<0xFF800000> : vector<8xf32>
    %187 = vector.multi_reduction <maximumf>, %184, %cst_128 [1] : vector<8x16xf32> to vector<8xf32>
    %188 = vector.shape_cast %187 : vector<8xf32> to vector<8x1xf32>
    %cst_129 = arith.constant dense<0xFF800000> : vector<8xf32>
    %189 = vector.multi_reduction <maximumf>, %186, %cst_129 [1] : vector<8x8xf32> to vector<8xf32>
    %190 = vector.shape_cast %189 : vector<8xf32> to vector<8x1xf32>
    %191 = arith.maximumf %188, %190 : vector<8x1xf32>
    %192 = vector.broadcast %191 : vector<8x1xf32> to vector<8x16xf32>
    %193 = arith.subf %184, %192 : vector<8x16xf32>
    %194 = math.exp %193 : vector<8x16xf32>
    %195 = vector.broadcast %191 : vector<8x1xf32> to vector<8x8xf32>
    %196 = arith.subf %186, %195 : vector<8x8xf32>
    %197 = math.exp %196 : vector<8x8xf32>
    %cst_130 = arith.constant dense<0.000000e+00> : vector<8xf32>
    %198 = vector.multi_reduction <add>, %194, %cst_130 [1] : vector<8x16xf32> to vector<8xf32>
    %199 = vector.shape_cast %198 : vector<8xf32> to vector<8x1xf32>
    %cst_131 = arith.constant dense<0.000000e+00> : vector<8xf32>
    %200 = vector.multi_reduction <add>, %197, %cst_131 [1] : vector<8x8xf32> to vector<8xf32>
    %201 = vector.shape_cast %200 : vector<8xf32> to vector<8x1xf32>
    %202 = arith.addf %199, %201 : vector<8x1xf32>
    %203 = tpu.reciprocal %202 {approx = true} : vector<8x1xf32> -> vector<8x1xf32>
    %cst_132 = arith.constant dense<0.000000e+00> : vector<8x8xf32>
    %204 = tpu.matmul %194, %178, %cst_132 {dimension_numbers = #tpu.dot_dimension_numbers<[1], [0], [0], [1], [0, 0, 1, 1], [], []>} : vector<8x16xf32>, vector<16x8xf32>, vector<8x8xf32> -> vector<8x8xf32>
    %cst_133 = arith.constant dense<0.000000e+00> : vector<8x8xf32>
    %205 = tpu.matmul %197, %180, %cst_133 {dimension_numbers = #tpu.dot_dimension_numbers<[1], [0], [0], [1], [0, 0, 1, 1], [], []>} : vector<8x8xf32>, vector<8x8xf32>, vector<8x8xf32> -> vector<8x8xf32>
    %206 = arith.addf %204, %205 : vector<8x8xf32>
    %207 = vector.broadcast %203 : vector<8x1xf32> to vector<8x8xf32>
    %208 = arith.mulf %207, %206 : vector<8x8xf32>
    %c0_134 = arith.constant 0 : index
    %c0_135 = arith.constant 0 : index
    %209 = vector.load %arg33[%c0_134, %c0_135] : memref<8x32xf32, #tpu.memory_space<vmem>>, vector<8x8xf32>
    tpu.vector_store %arg33[%c0_134, %c0_135], %208 {strides = array<i32>} : memref<8x32xf32, #tpu.memory_space<vmem>>, vector<8x8xf32>,
    %c0_136 = arith.constant 0 : index
    %c72_137 = arith.constant 72 : index
    %210 = vector.load %arg31[%c0_136, %c72_137] : memref<8x192xf32, #tpu.memory_space<vmem>>, vector<8x8xf32>
    %c0_138 = arith.constant 0 : index
    %c104_139 = arith.constant 104 : index
    %211 = vector.load %arg31[%c0_138, %c104_139] : memref<8x192xf32, #tpu.memory_space<vmem>>, vector<8x8xf32>
    %c0_140 = arith.constant 0 : index
    %c136 = arith.constant 136 : index
    %212 = vector.load %arg30[%c0_140, %c136] : memref<16x192xf32, #tpu.memory_space<vmem>>, vector<16x8xf32>
    %c0_141 = arith.constant 0 : index
    %c168 = arith.constant 168 : index
    %213 = vector.load %arg30[%c0_141, %c168] : memref<16x192xf32, #tpu.memory_space<vmem>>, vector<16x8xf32>
    %c0_142 = arith.constant 0 : index
    %c136_143 = arith.constant 136 : index
    %214 = vector.load %arg31[%c0_142, %c136_143] : memref<8x192xf32, #tpu.memory_space<vmem>>, vector<8x8xf32>
    %c0_144 = arith.constant 0 : index
    %c168_145 = arith.constant 168 : index
    %215 = vector.load %arg31[%c0_144, %c168_145] : memref<8x192xf32, #tpu.memory_space<vmem>>, vector<8x8xf32>
    %cst_146 = arith.constant dense<0.000000e+00> : vector<8x16xf32>
    %216 = tpu.matmul %210, %212, %cst_146 {dimension_numbers = #tpu.dot_dimension_numbers<[1], [1], [0], [0], [0, 0, 1, 0], [], []>} : vector<8x8xf32>, vector<16x8xf32>, vector<8x16xf32> -> vector<8x16xf32>
    %cst_147 = arith.constant dense<0.000000e+00> : vector<8x8xf32>
    %217 = tpu.matmul %211, %214, %cst_147 {dimension_numbers = #tpu.dot_dimension_numbers<[1], [1], [0], [0], [0, 0, 1, 0], [], []>} : vector<8x8xf32>, vector<8x8xf32>, vector<8x8xf32> -> vector<8x8xf32>
    %cst_148 = arith.constant -1.000000e+04 : f32
    %218 = vector.broadcast %cst_148 : f32 to vector<8x16xf32>
    %219 = arith.select %171, %216, %218 : vector<8x16xi1>, vector<8x16xf32>
    %cst_149 = arith.constant -1.000000e+04 : f32
    %220 = vector.broadcast %cst_149 : f32 to vector<8x8xf32>
    %221 = arith.select %174, %217, %220 : vector<8x8xi1>, vector<8x8xf32>
    %cst_150 = arith.constant dense<0xFF800000> : vector<8xf32>
    %222 = vector.multi_reduction <maximumf>, %219, %cst_150 [1] : vector<8x16xf32> to vector<8xf32>
    %223 = vector.shape_cast %222 : vector<8xf32> to vector<8x1xf32>
    %cst_151 = arith.constant dense<0xFF800000> : vector<8xf32>
    %224 = vector.multi_reduction <maximumf>, %221, %cst_151 [1] : vector<8x8xf32> to vector<8xf32>
    %225 = vector.shape_cast %224 : vector<8xf32> to vector<8x1xf32>
    %226 = arith.maximumf %223, %225 : vector<8x1xf32>
    %227 = vector.broadcast %226 : vector<8x1xf32> to vector<8x16xf32>
    %228 = arith.subf %219, %227 : vector<8x16xf32>
    %229 = math.exp %228 : vector<8x16xf32>
    %230 = vector.broadcast %226 : vector<8x1xf32> to vector<8x8xf32>
    %231 = arith.subf %221, %230 : vector<8x8xf32>
    %232 = math.exp %231 : vector<8x8xf32>
    %cst_152 = arith.constant dense<0.000000e+00> : vector<8xf32>
    %233 = vector.multi_reduction <add>, %229, %cst_152 [1] : vector<8x16xf32> to vector<8xf32>
    %234 = vector.shape_cast %233 : vector<8xf32> to vector<8x1xf32>
    %cst_153 = arith.constant dense<0.000000e+00> : vector<8xf32>
    %235 = vector.multi_reduction <add>, %232, %cst_153 [1] : vector<8x8xf32> to vector<8xf32>
    %236 = vector.shape_cast %235 : vector<8xf32> to vector<8x1xf32>
    %237 = arith.addf %234, %236 : vector<8x1xf32>
    %238 = tpu.reciprocal %237 {approx = true} : vector<8x1xf32> -> vector<8x1xf32>
    %cst_154 = arith.constant dense<0.000000e+00> : vector<8x8xf32>
    %239 = tpu.matmul %229, %213, %cst_154 {dimension_numbers = #tpu.dot_dimension_numbers<[1], [0], [0], [1], [0, 0, 1, 1], [], []>} : vector<8x16xf32>, vector<16x8xf32>, vector<8x8xf32> -> vector<8x8xf32>
    %cst_155 = arith.constant dense<0.000000e+00> : vector<8x8xf32>
    %240 = tpu.matmul %232, %215, %cst_155 {dimension_numbers = #tpu.dot_dimension_numbers<[1], [0], [0], [1], [0, 0, 1, 1], [], []>} : vector<8x8xf32>, vector<8x8xf32>, vector<8x8xf32> -> vector<8x8xf32>
    %241 = arith.addf %239, %240 : vector<8x8xf32>
    %242 = vector.broadcast %238 : vector<8x1xf32> to vector<8x8xf32>
    %243 = arith.mulf %242, %241 : vector<8x8xf32>
    %c0_156 = arith.constant 0 : index
    %c8_157 = arith.constant 8 : index
    %244 = vector.load %arg33[%c0_156, %c8_157] : memref<8x32xf32, #tpu.memory_space<vmem>>, vector<8x8xf32>
    tpu.vector_store %arg33[%c0_156, %c8_157], %243 {strides = array<i32>} : memref<8x32xf32, #tpu.memory_space<vmem>>, vector<8x8xf32>,
    %c0_158 = arith.constant 0 : index
    %c80_159 = arith.constant 80 : index
    %245 = vector.load %arg31[%c0_158, %c80_159] : memref<8x192xf32, #tpu.memory_space<vmem>>, vector<8x8xf32>
    %c0_160 = arith.constant 0 : index
    %c112_161 = arith.constant 112 : index
    %246 = vector.load %arg31[%c0_160, %c112_161] : memref<8x192xf32, #tpu.memory_space<vmem>>, vector<8x8xf32>
    %c0_162 = arith.constant 0 : index
    %c144 = arith.constant 144 : index
    %247 = vector.load %arg30[%c0_162, %c144] : memref<16x192xf32, #tpu.memory_space<vmem>>, vector<16x8xf32>
    %c0_163 = arith.constant 0 : index
    %c176 = arith.constant 176 : index
    %248 = vector.load %arg30[%c0_163, %c176] : memref<16x192xf32, #tpu.memory_space<vmem>>, vector<16x8xf32>
    %c0_164 = arith.constant 0 : index
    %c144_165 = arith.constant 144 : index
    %249 = vector.load %arg31[%c0_164, %c144_165] : memref<8x192xf32, #tpu.memory_space<vmem>>, vector<8x8xf32>
    %c0_166 = arith.constant 0 : index
    %c176_167 = arith.constant 176 : index
    %250 = vector.load %arg31[%c0_166, %c176_167] : memref<8x192xf32, #tpu.memory_space<vmem>>, vector<8x8xf32>
    %cst_168 = arith.constant dense<0.000000e+00> : vector<8x16xf32>
    %251 = tpu.matmul %245, %247, %cst_168 {dimension_numbers = #tpu.dot_dimension_numbers<[1], [1], [0], [0], [0, 0, 1, 0], [], []>} : vector<8x8xf32>, vector<16x8xf32>, vector<8x16xf32> -> vector<8x16xf32>
    %cst_169 = arith.constant dense<0.000000e+00> : vector<8x8xf32>
    %252 = tpu.matmul %246, %249, %cst_169 {dimension_numbers = #tpu.dot_dimension_numbers<[1], [1], [0], [0], [0, 0, 1, 0], [], []>} : vector<8x8xf32>, vector<8x8xf32>, vector<8x8xf32> -> vector<8x8xf32>
    %cst_170 = arith.constant -1.000000e+04 : f32
    %253 = vector.broadcast %cst_170 : f32 to vector<8x16xf32>
    %254 = arith.select %171, %251, %253 : vector<8x16xi1>, vector<8x16xf32>
    %cst_171 = arith.constant -1.000000e+04 : f32
    %255 = vector.broadcast %cst_171 : f32 to vector<8x8xf32>
    %256 = arith.select %174, %252, %255 : vector<8x8xi1>, vector<8x8xf32>
    %cst_172 = arith.constant dense<0xFF800000> : vector<8xf32>
    %257 = vector.multi_reduction <maximumf>, %254, %cst_172 [1] : vector<8x16xf32> to vector<8xf32>
    %258 = vector.shape_cast %257 : vector<8xf32> to vector<8x1xf32>
    %cst_173 = arith.constant dense<0xFF800000> : vector<8xf32>
    %259 = vector.multi_reduction <maximumf>, %256, %cst_173 [1] : vector<8x8xf32> to vector<8xf32>
    %260 = vector.shape_cast %259 : vector<8xf32> to vector<8x1xf32>
    %261 = arith.maximumf %258, %260 : vector<8x1xf32>
    %262 = vector.broadcast %261 : vector<8x1xf32> to vector<8x16xf32>
    %263 = arith.subf %254, %262 : vector<8x16xf32>
    %264 = math.exp %263 : vector<8x16xf32>
    %265 = vector.broadcast %261 : vector<8x1xf32> to vector<8x8xf32>
    %266 = arith.subf %256, %265 : vector<8x8xf32>
    %267 = math.exp %266 : vector<8x8xf32>
    %cst_174 = arith.constant dense<0.000000e+00> : vector<8xf32>
    %268 = vector.multi_reduction <add>, %264, %cst_174 [1] : vector<8x16xf32> to vector<8xf32>
    %269 = vector.shape_cast %268 : vector<8xf32> to vector<8x1xf32>
    %cst_175 = arith.constant dense<0.000000e+00> : vector<8xf32>
    %270 = vector.multi_reduction <add>, %267, %cst_175 [1] : vector<8x8xf32> to vector<8xf32>
    %271 = vector.shape_cast %270 : vector<8xf32> to vector<8x1xf32>
    %272 = arith.addf %269, %271 : vector<8x1xf32>
    %273 = tpu.reciprocal %272 {approx = true} : vector<8x1xf32> -> vector<8x1xf32>
    %cst_176 = arith.constant dense<0.000000e+00> : vector<8x8xf32>
    %274 = tpu.matmul %264, %248, %cst_176 {dimension_numbers = #tpu.dot_dimension_numbers<[1], [0], [0], [1], [0, 0, 1, 1], [], []>} : vector<8x16xf32>, vector<16x8xf32>, vector<8x8xf32> -> vector<8x8xf32>
    %cst_177 = arith.constant dense<0.000000e+00> : vector<8x8xf32>
    %275 = tpu.matmul %267, %250, %cst_177 {dimension_numbers = #tpu.dot_dimension_numbers<[1], [0], [0], [1], [0, 0, 1, 1], [], []>} : vector<8x8xf32>, vector<8x8xf32>, vector<8x8xf32> -> vector<8x8xf32>
    %276 = arith.addf %274, %275 : vector<8x8xf32>
    %277 = vector.broadcast %273 : vector<8x1xf32> to vector<8x8xf32>
    %278 = arith.mulf %277, %276 : vector<8x8xf32>
    %c0_178 = arith.constant 0 : index
    %c16_179 = arith.constant 16 : index
    %279 = vector.load %arg33[%c0_178, %c16_179] : memref<8x32xf32, #tpu.memory_space<vmem>>, vector<8x8xf32>
    tpu.vector_store %arg33[%c0_178, %c16_179], %278 {strides = array<i32>} : memref<8x32xf32, #tpu.memory_space<vmem>>, vector<8x8xf32>,
    %c0_180 = arith.constant 0 : index
    %c88_181 = arith.constant 88 : index
    %280 = vector.load %arg31[%c0_180, %c88_181] : memref<8x192xf32, #tpu.memory_space<vmem>>, vector<8x8xf32>
    %c0_182 = arith.constant 0 : index
    %c120_183 = arith.constant 120 : index
    %281 = vector.load %arg31[%c0_182, %c120_183] : memref<8x192xf32, #tpu.memory_space<vmem>>, vector<8x8xf32>
    %c0_184 = arith.constant 0 : index
    %c152 = arith.constant 152 : index
    %282 = vector.load %arg30[%c0_184, %c152] : memref<16x192xf32, #tpu.memory_space<vmem>>, vector<16x8xf32>
    %c0_185 = arith.constant 0 : index
    %c184 = arith.constant 184 : index
    %283 = vector.load %arg30[%c0_185, %c184] : memref<16x192xf32, #tpu.memory_space<vmem>>, vector<16x8xf32>
    %c0_186 = arith.constant 0 : index
    %c152_187 = arith.constant 152 : index
    %284 = vector.load %arg31[%c0_186, %c152_187] : memref<8x192xf32, #tpu.memory_space<vmem>>, vector<8x8xf32>
    %c0_188 = arith.constant 0 : index
    %c184_189 = arith.constant 184 : index
    %285 = vector.load %arg31[%c0_188, %c184_189] : memref<8x192xf32, #tpu.memory_space<vmem>>, vector<8x8xf32>
    %cst_190 = arith.constant dense<0.000000e+00> : vector<8x16xf32>
    %286 = tpu.matmul %280, %282, %cst_190 {dimension_numbers = #tpu.dot_dimension_numbers<[1], [1], [0], [0], [0, 0, 1, 0], [], []>} : vector<8x8xf32>, vector<16x8xf32>, vector<8x16xf32> -> vector<8x16xf32>
    %cst_191 = arith.constant dense<0.000000e+00> : vector<8x8xf32>
    %287 = tpu.matmul %281, %284, %cst_191 {dimension_numbers = #tpu.dot_dimension_numbers<[1], [1], [0], [0], [0, 0, 1, 0], [], []>} : vector<8x8xf32>, vector<8x8xf32>, vector<8x8xf32> -> vector<8x8xf32>
    %cst_192 = arith.constant -1.000000e+04 : f32
    %288 = vector.broadcast %cst_192 : f32 to vector<8x16xf32>
    %289 = arith.select %171, %286, %288 : vector<8x16xi1>, vector<8x16xf32>
    %cst_193 = arith.constant -1.000000e+04 : f32
    %290 = vector.broadcast %cst_193 : f32 to vector<8x8xf32>
    %291 = arith.select %174, %287, %290 : vector<8x8xi1>, vector<8x8xf32>
    %cst_194 = arith.constant dense<0xFF800000> : vector<8xf32>
    %292 = vector.multi_reduction <maximumf>, %289, %cst_194 [1] : vector<8x16xf32> to vector<8xf32>
    %293 = vector.shape_cast %292 : vector<8xf32> to vector<8x1xf32>
    %cst_195 = arith.constant dense<0xFF800000> : vector<8xf32>
    %294 = vector.multi_reduction <maximumf>, %291, %cst_195 [1] : vector<8x8xf32> to vector<8xf32>
    %295 = vector.shape_cast %294 : vector<8xf32> to vector<8x1xf32>
    %296 = arith.maximumf %293, %295 : vector<8x1xf32>
    %297 = vector.broadcast %296 : vector<8x1xf32> to vector<8x16xf32>
    %298 = arith.subf %289, %297 : vector<8x16xf32>
    %299 = math.exp %298 : vector<8x16xf32>
    %300 = vector.broadcast %296 : vector<8x1xf32> to vector<8x8xf32>
    %301 = arith.subf %291, %300 : vector<8x8xf32>
    %302 = math.exp %301 : vector<8x8xf32>
    %cst_196 = arith.constant dense<0.000000e+00> : vector<8xf32>
    %303 = vector.multi_reduction <add>, %299, %cst_196 [1] : vector<8x16xf32> to vector<8xf32>
    %304 = vector.shape_cast %303 : vector<8xf32> to vector<8x1xf32>
    %cst_197 = arith.constant dense<0.000000e+00> : vector<8xf32>
    %305 = vector.multi_reduction <add>, %302, %cst_197 [1] : vector<8x8xf32> to vector<8xf32>
    %306 = vector.shape_cast %305 : vector<8xf32> to vector<8x1xf32>
    %307 = arith.addf %304, %306 : vector<8x1xf32>
    %308 = tpu.reciprocal %307 {approx = true} : vector<8x1xf32> -> vector<8x1xf32>
    %cst_198 = arith.constant dense<0.000000e+00> : vector<8x8xf32>
    %309 = tpu.matmul %299, %283, %cst_198 {dimension_numbers = #tpu.dot_dimension_numbers<[1], [0], [0], [1], [0, 0, 1, 1], [], []>} : vector<8x16xf32>, vector<16x8xf32>, vector<8x8xf32> -> vector<8x8xf32>
    %cst_199 = arith.constant dense<0.000000e+00> : vector<8x8xf32>
    %310 = tpu.matmul %302, %285, %cst_199 {dimension_numbers = #tpu.dot_dimension_numbers<[1], [0], [0], [1], [0, 0, 1, 1], [], []>} : vector<8x8xf32>, vector<8x8xf32>, vector<8x8xf32> -> vector<8x8xf32>
    %311 = arith.addf %309, %310 : vector<8x8xf32>
    %312 = vector.broadcast %308 : vector<8x1xf32> to vector<8x8xf32>
    %313 = arith.mulf %312, %311 : vector<8x8xf32>
    %c0_200 = arith.constant 0 : index
    %c24_201 = arith.constant 24 : index
    %314 = vector.load %arg33[%c0_200, %c24_201] : memref<8x32xf32, #tpu.memory_space<vmem>>, vector<8x8xf32>
    tpu.vector_store %arg33[%c0_200, %c24_201], %313 {strides = array<i32>} : memref<8x32xf32, #tpu.memory_space<vmem>>, vector<8x8xf32>,
    %c0_202 = arith.constant 0 : index
    %c0_203 = arith.constant 0 : index
    %315 = vector.load %arg32[%c0_202, %c0_203] : memref<16x32xf32, #tpu.memory_space<vmem>>, vector<16x32xf32>
    %316 = arith.addf %3, %315 : vector<16x32xf32>
    %c0_204 = arith.constant 0 : index
    %c0_205 = arith.constant 0 : index
    %317 = vector.load %arg33[%c0_204, %c0_205] : memref<8x32xf32, #tpu.memory_space<vmem>>, vector<8x32xf32>
    %318 = arith.addf %4, %317 : vector<8x32xf32>
    %319 = arith.truncf %316 : vector<16x32xf32> to vector<16x32xbf16>
    %c0_206 = arith.constant 0 : index
    %c0_207 = arith.constant 0 : index
    %c0_208 = arith.constant 0 : index
    %c0_209 = arith.constant 0 : index
    %320 = vector.load %arg20[%c0_206, %c0_207, %c0_208, %c0_209] : memref<1x2x32x64xbf16, #tpu.memory_space<vmem>>, vector<1x1x32x64xbf16>
    %321 = vector.shape_cast %320 : vector<1x1x32x64xbf16> to vector<32x64xbf16>
    %cst_210 = arith.constant dense<0.000000e+00> : vector<16x64xf32>
    %322 = tpu.matmul %319, %321, %cst_210 {dimension_numbers = #tpu.dot_dimension_numbers<[1], [0], [0], [1], [0, 0, 1, 1], [], []>} : vector<16x32xbf16>, vector<32x64xbf16>, vector<16x64xf32> -> vector<16x64xf32>
    %c0_211 = arith.constant 0 : index
    %c0_212 = arith.constant 0 : index
    %c0_213 = arith.constant 0 : index
    %c0_214 = arith.constant 0 : index
    %323 = vector.load %arg21[%c0_211, %c0_212, %c0_213, %c0_214] : memref<1x2x1x64xf32, #tpu.memory_space<vmem>>, vector<1x1x1x64xf32>
    %324 = vector.shape_cast %323 : vector<1x1x1x64xf32> to vector<1x64xf32>
    %325 = vector.broadcast %324 : vector<1x64xf32> to vector<16x64xf32>
    %326 = arith.addf %322, %325 : vector<16x64xf32>
    %cst_215 = arith.constant 5.000000e-01 : f32
    %327 = vector.broadcast %cst_215 : f32 to vector<16x64xf32>
    %328 = arith.mulf %326, %327 : vector<16x64xf32>
    %cst_216 = arith.constant 0.707106769 : f32
    %329 = vector.broadcast %cst_216 : f32 to vector<16x64xf32>
    %330 = arith.mulf %326, %329 : vector<16x64xf32>
    %cst_217 = arith.constant 0.000000e+00 : f32
    %331 = vector.broadcast %cst_217 : f32 to vector<16x64xf32>
    %332 = arith.cmpf oge, %330, %331 : vector<16x64xf32>
    %cst_218 = arith.constant 1.000000e+00 : f32
    %cst_219 = arith.constant -1.000000e+00 : f32
    %333 = vector.broadcast %cst_218 : f32 to vector<16x64xf32>
    %334 = vector.broadcast %cst_219 : f32 to vector<16x64xf32>
    %335 = arith.select %332, %333, %334 : vector<16x64xi1>, vector<16x64xf32>
    %336 = math.absf %330 : vector<16x64xf32>
    %cst_220 = arith.constant 0.327591091 : f32
    %337 = vector.broadcast %cst_220 : f32 to vector<16x64xf32>
    %338 = arith.mulf %337, %336 : vector<16x64xf32>
    %cst_221 = arith.constant 1.000000e+00 : f32
    %339 = vector.broadcast %cst_221 : f32 to vector<16x64xf32>
    %340 = arith.addf %339, %338 : vector<16x64xf32>
    %341 = tpu.reciprocal %340 {approx = true} : vector<16x64xf32> -> vector<16x64xf32>
    %cst_222 = arith.constant 1.06140542 : f32
    %342 = vector.broadcast %cst_222 : f32 to vector<16x64xf32>
    %343 = arith.mulf %341, %342 : vector<16x64xf32>
    %cst_223 = arith.constant -1.45315206 : f32
    %344 = vector.broadcast %cst_223 : f32 to vector<16x64xf32>
    %345 = arith.addf %344, %343 : vector<16x64xf32>
    %346 = arith.mulf %341, %345 : vector<16x64xf32>
    %cst_224 = arith.constant 1.42141378 : f32
    %347 = vector.broadcast %cst_224 : f32 to vector<16x64xf32>
    %348 = arith.addf %347, %346 : vector<16x64xf32>
    %349 = arith.mulf %341, %348 : vector<16x64xf32>
    %cst_225 = arith.constant -0.284496725 : f32
    %350 = vector.broadcast %cst_225 : f32 to vector<16x64xf32>
    %351 = arith.addf %350, %349 : vector<16x64xf32>
    %352 = arith.mulf %341, %351 : vector<16x64xf32>
    %cst_226 = arith.constant 0.254829586 : f32
    %353 = vector.broadcast %cst_226 : f32 to vector<16x64xf32>
    %354 = arith.addf %353, %352 : vector<16x64xf32>
    %355 = arith.mulf %341, %354 : vector<16x64xf32>
    %cst_227 = arith.constant 0.000000e+00 : f32
    %356 = vector.broadcast %cst_227 : f32 to vector<16x64xf32>
    %357 = arith.subf %356, %336 : vector<16x64xf32>
    %358 = arith.mulf %357, %336 : vector<16x64xf32>
    %359 = math.exp %358 : vector<16x64xf32>
    %360 = arith.mulf %355, %359 : vector<16x64xf32>
    %cst_228 = arith.constant 1.000000e+00 : f32
    %361 = vector.broadcast %cst_228 : f32 to vector<16x64xf32>
    %362 = arith.subf %361, %360 : vector<16x64xf32>
    %363 = arith.mulf %335, %362 : vector<16x64xf32>
    %cst_229 = arith.constant 1.000000e+00 : f32
    %364 = vector.broadcast %cst_229 : f32 to vector<16x64xf32>
    %365 = arith.addf %364, %363 : vector<16x64xf32>
    %366 = arith.mulf %328, %365 : vector<16x64xf32>
    %367 = arith.truncf %366 : vector<16x64xf32> to vector<16x64xbf16>
    %c0_230 = arith.constant 0 : index
    %c0_231 = arith.constant 0 : index
    %c0_232 = arith.constant 0 : index
    %c0_233 = arith.constant 0 : index
    %368 = vector.load %arg22[%c0_230, %c0_231, %c0_232, %c0_233] : memref<1x2x64x32xbf16, #tpu.memory_space<vmem>>, vector<1x1x64x32xbf16>
    %369 = vector.shape_cast %368 : vector<1x1x64x32xbf16> to vector<64x32xbf16>
    %cst_234 = arith.constant dense<0.000000e+00> : vector<16x32xf32>
    %370 = tpu.matmul %367, %369, %cst_234 {dimension_numbers = #tpu.dot_dimension_numbers<[1], [0], [0], [1], [0, 0, 1, 1], [], []>} : vector<16x64xbf16>, vector<64x32xbf16>, vector<16x32xf32> -> vector<16x32xf32>
    %c0_235 = arith.constant 0 : index
    %c0_236 = arith.constant 0 : index
    %c0_237 = arith.constant 0 : index
    %c0_238 = arith.constant 0 : index
    %371 = vector.load %arg23[%c0_235, %c0_236, %c0_237, %c0_238] : memref<1x2x1x32xf32, #tpu.memory_space<vmem>>, vector<1x1x1x32xf32>
    %372 = vector.shape_cast %371 : vector<1x1x1x32xf32> to vector<1x32xf32>
    %373 = vector.broadcast %372 : vector<1x32xf32> to vector<16x32xf32>
    %374 = arith.addf %370, %373 : vector<16x32xf32>
    %375 = arith.addf %374, %316 : vector<16x32xf32>
    %c0_239 = arith.constant 0 : index
    %c0_240 = arith.constant 0 : index
    %c0_241 = arith.constant 0 : index
    %c0_242 = arith.constant 0 : index
    %376 = vector.load %arg24[%c0_239, %c0_240, %c0_241, %c0_242] : memref<1x2x1x32xf32, #tpu.memory_space<vmem>>, vector<1x1x1x32xf32>
    %377 = vector.shape_cast %376 : vector<1x1x1x32xf32> to vector<1x32xf32>
    %c0_243 = arith.constant 0 : index
    %c0_244 = arith.constant 0 : index
    %c0_245 = arith.constant 0 : index
    %c0_246 = arith.constant 0 : index
    %378 = vector.load %arg25[%c0_243, %c0_244, %c0_245, %c0_246] : memref<1x2x1x32xf32, #tpu.memory_space<vmem>>, vector<1x1x1x32xf32>
    %379 = vector.shape_cast %378 : vector<1x1x1x32xf32> to vector<1x32xf32>
    %cst_247 = arith.constant dense<0.000000e+00> : vector<16xf32>
    %380 = vector.multi_reduction <add>, %375, %cst_247 [1] : vector<16x32xf32> to vector<16xf32>
    %381 = vector.shape_cast %380 : vector<16xf32> to vector<16x1xf32>
    %cst_248 = arith.constant 3.200000e+01 : f32
    %382 = vector.broadcast %cst_248 : f32 to vector<16x1xf32>
    %383 = arith.divf %381, %382 : vector<16x1xf32>
    %384 = vector.broadcast %383 : vector<16x1xf32> to vector<16x32xf32>
    %385 = arith.subf %375, %384 : vector<16x32xf32>
    %386 = arith.mulf %385, %385 : vector<16x32xf32>
    %cst_249 = arith.constant dense<0.000000e+00> : vector<16xf32>
    %387 = vector.multi_reduction <add>, %386, %cst_249 [1] : vector<16x32xf32> to vector<16xf32>
    %388 = vector.shape_cast %387 : vector<16xf32> to vector<16x1xf32>
    %cst_250 = arith.constant 3.200000e+01 : f32
    %389 = vector.broadcast %cst_250 : f32 to vector<16x1xf32>
    %390 = arith.divf %388, %389 : vector<16x1xf32>
    %cst_251 = arith.constant 9.99999996E-13 : f32
    %391 = vector.broadcast %cst_251 : f32 to vector<16x1xf32>
    %392 = arith.addf %390, %391 : vector<16x1xf32>
    %393 = math.rsqrt %392 : vector<16x1xf32>
    %394 = vector.broadcast %393 : vector<16x1xf32> to vector<16x32xf32>
    %395 = arith.mulf %385, %394 : vector<16x32xf32>
    %396 = vector.broadcast %377 : vector<1x32xf32> to vector<16x32xf32>
    %397 = arith.mulf %395, %396 : vector<16x32xf32>
    %398 = vector.broadcast %379 : vector<1x32xf32> to vector<16x32xf32>
    %399 = arith.addf %397, %398 : vector<16x32xf32>
    %c0_252 = arith.constant 0 : index
    %c0_253 = arith.constant 0 : index
    %400 = vector.load %arg28[%c0_252, %c0_253] : memref<16x32xf32, #tpu.memory_space<vmem>>, vector<16x32xf32>
    tpu.vector_store %arg28[%c0_252, %c0_253], %399 {strides = array<i32>} : memref<16x32xf32, #tpu.memory_space<vmem>>, vector<16x32xf32>,
    %401 = arith.truncf %318 : vector<8x32xf32> to vector<8x32xbf16>
    %c0_254 = arith.constant 0 : index
    %c1 = arith.constant 1 : index
    %c0_255 = arith.constant 0 : index
    %c0_256 = arith.constant 0 : index
    %402 = vector.load %arg20[%c0_254, %c1, %c0_255, %c0_256] : memref<1x2x32x64xbf16, #tpu.memory_space<vmem>>, vector<1x1x32x64xbf16>
    %403 = vector.shape_cast %402 : vector<1x1x32x64xbf16> to vector<32x64xbf16>
    %cst_257 = arith.constant dense<0.000000e+00> : vector<8x64xf32>
    %404 = tpu.matmul %401, %403, %cst_257 {dimension_numbers = #tpu.dot_dimension_numbers<[1], [0], [0], [1], [0, 0, 1, 1], [], []>} : vector<8x32xbf16>, vector<32x64xbf16>, vector<8x64xf32> -> vector<8x64xf32>
    %c0_258 = arith.constant 0 : index
    %c1_259 = arith.constant 1 : index
    %c0_260 = arith.constant 0 : index
    %c0_261 = arith.constant 0 : index
    %405 = vector.load %arg21[%c0_258, %c1_259, %c0_260, %c0_261] : memref<1x2x1x64xf32, #tpu.memory_space<vmem>>, vector<1x1x1x64xf32>
    %406 = vector.shape_cast %405 : vector<1x1x1x64xf32> to vector<1x64xf32>
    %407 = vector.broadcast %406 : vector<1x64xf32> to vector<8x64xf32>
    %408 = arith.addf %404, %407 : vector<8x64xf32>
    %cst_262 = arith.constant 5.000000e-01 : f32
    %409 = vector.broadcast %cst_262 : f32 to vector<8x64xf32>
    %410 = arith.mulf %408, %409 : vector<8x64xf32>
    %cst_263 = arith.constant 0.707106769 : f32
    %411 = vector.broadcast %cst_263 : f32 to vector<8x64xf32>
    %412 = arith.mulf %408, %411 : vector<8x64xf32>
    %cst_264 = arith.constant 0.000000e+00 : f32
    %413 = vector.broadcast %cst_264 : f32 to vector<8x64xf32>
    %414 = arith.cmpf oge, %412, %413 : vector<8x64xf32>
    %cst_265 = arith.constant 1.000000e+00 : f32
    %cst_266 = arith.constant -1.000000e+00 : f32
    %415 = vector.broadcast %cst_265 : f32 to vector<8x64xf32>
    %416 = vector.broadcast %cst_266 : f32 to vector<8x64xf32>
    %417 = arith.select %414, %415, %416 : vector<8x64xi1>, vector<8x64xf32>
    %418 = math.absf %412 : vector<8x64xf32>
    %cst_267 = arith.constant 0.327591091 : f32
    %419 = vector.broadcast %cst_267 : f32 to vector<8x64xf32>
    %420 = arith.mulf %419, %418 : vector<8x64xf32>
    %cst_268 = arith.constant 1.000000e+00 : f32
    %421 = vector.broadcast %cst_268 : f32 to vector<8x64xf32>
    %422 = arith.addf %421, %420 : vector<8x64xf32>
    %423 = tpu.reciprocal %422 {approx = true} : vector<8x64xf32> -> vector<8x64xf32>
    %cst_269 = arith.constant 1.06140542 : f32
    %424 = vector.broadcast %cst_269 : f32 to vector<8x64xf32>
    %425 = arith.mulf %423, %424 : vector<8x64xf32>
    %cst_270 = arith.constant -1.45315206 : f32
    %426 = vector.broadcast %cst_270 : f32 to vector<8x64xf32>
    %427 = arith.addf %426, %425 : vector<8x64xf32>
    %428 = arith.mulf %423, %427 : vector<8x64xf32>
    %cst_271 = arith.constant 1.42141378 : f32
    %429 = vector.broadcast %cst_271 : f32 to vector<8x64xf32>
    %430 = arith.addf %429, %428 : vector<8x64xf32>
    %431 = arith.mulf %423, %430 : vector<8x64xf32>
    %cst_272 = arith.constant -0.284496725 : f32
    %432 = vector.broadcast %cst_272 : f32 to vector<8x64xf32>
    %433 = arith.addf %432, %431 : vector<8x64xf32>
    %434 = arith.mulf %423, %433 : vector<8x64xf32>
    %cst_273 = arith.constant 0.254829586 : f32
    %435 = vector.broadcast %cst_273 : f32 to vector<8x64xf32>
    %436 = arith.addf %435, %434 : vector<8x64xf32>
    %437 = arith.mulf %423, %436 : vector<8x64xf32>
    %cst_274 = arith.constant 0.000000e+00 : f32
    %438 = vector.broadcast %cst_274 : f32 to vector<8x64xf32>
    %439 = arith.subf %438, %418 : vector<8x64xf32>
    %440 = arith.mulf %439, %418 : vector<8x64xf32>
    %441 = math.exp %440 : vector<8x64xf32>
    %442 = arith.mulf %437, %441 : vector<8x64xf32>
    %cst_275 = arith.constant 1.000000e+00 : f32
    %443 = vector.broadcast %cst_275 : f32 to vector<8x64xf32>
    %444 = arith.subf %443, %442 : vector<8x64xf32>
    %445 = arith.mulf %417, %444 : vector<8x64xf32>
    %cst_276 = arith.constant 1.000000e+00 : f32
    %446 = vector.broadcast %cst_276 : f32 to vector<8x64xf32>
    %447 = arith.addf %446, %445 : vector<8x64xf32>
    %448 = arith.mulf %410, %447 : vector<8x64xf32>
    %449 = arith.truncf %448 : vector<8x64xf32> to vector<8x64xbf16>
    %c0_277 = arith.constant 0 : index
    %c1_278 = arith.constant 1 : index
    %c0_279 = arith.constant 0 : index
    %c0_280 = arith.constant 0 : index
    %450 = vector.load %arg22[%c0_277, %c1_278, %c0_279, %c0_280] : memref<1x2x64x32xbf16, #tpu.memory_space<vmem>>, vector<1x1x64x32xbf16>
    %451 = vector.shape_cast %450 : vector<1x1x64x32xbf16> to vector<64x32xbf16>
    %cst_281 = arith.constant dense<0.000000e+00> : vector<8x32xf32>
    %452 = tpu.matmul %449, %451, %cst_281 {dimension_numbers = #tpu.dot_dimension_numbers<[1], [0], [0], [1], [0, 0, 1, 1], [], []>} : vector<8x64xbf16>, vector<64x32xbf16>, vector<8x32xf32> -> vector<8x32xf32>
    %c0_282 = arith.constant 0 : index
    %c1_283 = arith.constant 1 : index
    %c0_284 = arith.constant 0 : index
    %c0_285 = arith.constant 0 : index
    %453 = vector.load %arg23[%c0_282, %c1_283, %c0_284, %c0_285] : memref<1x2x1x32xf32, #tpu.memory_space<vmem>>, vector<1x1x1x32xf32>
    %454 = vector.shape_cast %453 : vector<1x1x1x32xf32> to vector<1x32xf32>
    %455 = vector.broadcast %454 : vector<1x32xf32> to vector<8x32xf32>
    %456 = arith.addf %452, %455 : vector<8x32xf32>
    %457 = arith.addf %456, %318 : vector<8x32xf32>
    %c0_286 = arith.constant 0 : index
    %c1_287 = arith.constant 1 : index
    %c0_288 = arith.constant 0 : index
    %c0_289 = arith.constant 0 : index
    %458 = vector.load %arg24[%c0_286, %c1_287, %c0_288, %c0_289] : memref<1x2x1x32xf32, #tpu.memory_space<vmem>>, vector<1x1x1x32xf32>
    %459 = vector.shape_cast %458 : vector<1x1x1x32xf32> to vector<1x32xf32>
    %c0_290 = arith.constant 0 : index
    %c1_291 = arith.constant 1 : index
    %c0_292 = arith.constant 0 : index
    %c0_293 = arith.constant 0 : index
    %460 = vector.load %arg25[%c0_290, %c1_291, %c0_292, %c0_293] : memref<1x2x1x32xf32, #tpu.memory_space<vmem>>, vector<1x1x1x32xf32>
    %461 = vector.shape_cast %460 : vector<1x1x1x32xf32> to vector<1x32xf32>
    %cst_294 = arith.constant dense<0.000000e+00> : vector<8xf32>
    %462 = vector.multi_reduction <add>, %457, %cst_294 [1] : vector<8x32xf32> to vector<8xf32>
    %463 = vector.shape_cast %462 : vector<8xf32> to vector<8x1xf32>
    %cst_295 = arith.constant 3.200000e+01 : f32
    %464 = vector.broadcast %cst_295 : f32 to vector<8x1xf32>
    %465 = arith.divf %463, %464 : vector<8x1xf32>
    %466 = vector.broadcast %465 : vector<8x1xf32> to vector<8x32xf32>
    %467 = arith.subf %457, %466 : vector<8x32xf32>
    %468 = arith.mulf %467, %467 : vector<8x32xf32>
    %cst_296 = arith.constant dense<0.000000e+00> : vector<8xf32>
    %469 = vector.multi_reduction <add>, %468, %cst_296 [1] : vector<8x32xf32> to vector<8xf32>
    %470 = vector.shape_cast %469 : vector<8xf32> to vector<8x1xf32>
    %cst_297 = arith.constant 3.200000e+01 : f32
    %471 = vector.broadcast %cst_297 : f32 to vector<8x1xf32>
    %472 = arith.divf %470, %471 : vector<8x1xf32>
    %cst_298 = arith.constant 9.99999996E-13 : f32
    %473 = vector.broadcast %cst_298 : f32 to vector<8x1xf32>
    %474 = arith.addf %472, %473 : vector<8x1xf32>
    %475 = math.rsqrt %474 : vector<8x1xf32>
    %476 = vector.broadcast %475 : vector<8x1xf32> to vector<8x32xf32>
    %477 = arith.mulf %467, %476 : vector<8x32xf32>
    %478 = vector.broadcast %459 : vector<1x32xf32> to vector<8x32xf32>
    %479 = arith.mulf %477, %478 : vector<8x32xf32>
    %480 = vector.broadcast %461 : vector<1x32xf32> to vector<8x32xf32>
    %481 = arith.addf %479, %480 : vector<8x32xf32>
    %c0_299 = arith.constant 0 : index
    %c0_300 = arith.constant 0 : index
    %482 = vector.load %arg29[%c0_299, %c0_300] : memref<8x32xf32, #tpu.memory_space<vmem>>, vector<8x32xf32>
    tpu.vector_store %arg29[%c0_299, %c0_300], %481 {strides = array<i32>} : memref<8x32xf32, #tpu.memory_space<vmem>>, vector<8x32xf32>,
    %c1_i32 = arith.constant 1 : i32
    %483 = arith.cmpi eq, %arg1, %c1_i32 : i32
    %484 = arith.extui %483 : i1 to i32
    %c0_i32_301 = arith.constant 0 : i32
    %485 = arith.cmpi ne, %484, %c0_i32_301 : i32
    scf.if %485 {
      %c0_302 = arith.constant 0 : index
      %c0_303 = arith.constant 0 : index
      %486 = vector.load %arg28[%c0_302, %c0_303] : memref<16x32xf32, #tpu.memory_space<vmem>>, vector<16x32xf32>
      %c0_304 = arith.constant 0 : index
      %c0_305 = arith.constant 0 : index
      %c0_306 = arith.constant 0 : index
      %487 = vector.load %arg26[%c0_304, %c0_305, %c0_306] : memref<1x16x32xf32, #tpu.memory_space<vmem>>, vector<1x16x32xf32>
      %488 = vector.shape_cast %487 : vector<1x16x32xf32> to vector<16x32xf32>
      %489 = vector.shape_cast %486 : vector<16x32xf32> to vector<1x16x32xf32>
      tpu.vector_store %arg26[%c0_304, %c0_305, %c0_306], %489 {strides = array<i32>} : memref<1x16x32xf32, #tpu.memory_space<vmem>>, vector<1x16x32xf32>,
      %c0_307 = arith.constant 0 : index
      %c0_308 = arith.constant 0 : index
      %490 = vector.load %arg29[%c0_307, %c0_308] : memref<8x32xf32, #tpu.memory_space<vmem>>, vector<8x32xf32>
      %c0_309 = arith.constant 0 : index
      %c0_310 = arith.constant 0 : index
      %c0_311 = arith.constant 0 : index
      %491 = vector.load %arg27[%c0_309, %c0_310, %c0_311] : memref<1x8x32xf32, #tpu.memory_space<vmem>>, vector<1x8x32xf32>
      %492 = vector.shape_cast %491 : vector<1x8x32xf32> to vector<8x32xf32>
      %493 = vector.shape_cast %490 : vector<8x32xf32> to vector<1x8x32xf32>
      tpu.vector_store %arg27[%c0_309, %c0_310, %c0_311], %493 {strides = array<i32>} : memref<1x8x32xf32, #tpu.memory_space<vmem>>, vector<1x8x32xf32>,
    } else {
    }
    return
  }
  func.func @transform_0(%arg0: i32, %arg1: i32) -> (i32, i32, i32) {
    %c0_i32 = arith.constant 0 : i32
    %c0_i32_0 = arith.constant 0 : i32
    %c0_i32_1 = arith.constant 0 : i32
    return %arg0, %c0_i32, %c0_i32_0 : i32, i32, i32
  }
  func.func @transform_1(%arg0: i32, %arg1: i32) -> (i32, i32, i32) {
    %c0_i32 = arith.constant 0 : i32
    %c0_i32_0 = arith.constant 0 : i32
    %c0_i32_1 = arith.constant 0 : i32
    return %arg0, %c0_i32, %c0_i32_0 : i32, i32, i32
  }
  func.func @transform_2(%arg0: i32, %arg1: i32) -> (i32, i32, i32) {
    %c0_i32 = arith.constant 0 : i32
    %c0_i32_0 = arith.constant 0 : i32
    %c0_i32_1 = arith.constant 0 : i32
    return %arg0, %c0_i32, %c0_i32_0 : i32, i32, i32
  }
  func.func @transform_3(%arg0: i32, %arg1: i32) -> (i32, i32, i32) {
    %c0_i32 = arith.constant 0 : i32
    %c0_i32_0 = arith.constant 0 : i32
    %c0_i32_1 = arith.constant 0 : i32
    return %arg0, %c0_i32, %c0_i32_0 : i32, i32, i32
  }
  func.func @transform_4(%arg0: i32, %arg1: i32) -> (i32, i32, i32) {
    %c0_i32 = arith.constant 0 : i32
    %c0_i32_0 = arith.constant 0 : i32
    %c0_i32_1 = arith.constant 0 : i32
    return %arg0, %c0_i32, %c0_i32_0 : i32, i32, i32
  }
  func.func @transform_5(%arg0: i32, %arg1: i32) -> (i32, i32, i32) {
    %c0_i32 = arith.constant 0 : i32
    %c0_i32_0 = arith.constant 0 : i32
    %c0_i32_1 = arith.constant 0 : i32
    return %arg0, %c0_i32, %c0_i32_0 : i32, i32, i32
  }
  func.func @transform_6(%arg0: i32, %arg1: i32) -> (i32, i32) {
    %c0_i32 = arith.constant 0 : i32
    %c0_i32_0 = arith.constant 0 : i32
    %c0_i32_1 = arith.constant 0 : i32
    return %c0_i32, %c0_i32_0 : i32, i32
  }
  func.func @transform_7(%arg0: i32, %arg1: i32) -> (i32, i32) {
    %c0_i32 = arith.constant 0 : i32
    %c0_i32_0 = arith.constant 0 : i32
    %c0_i32_1 = arith.constant 0 : i32
    return %c0_i32, %c0_i32_0 : i32, i32
  }
  func.func @transform_8(%arg0: i32, %arg1: i32) -> (i32, i32) {
    %c0_i32 = arith.constant 0 : i32
    %c0_i32_0 = arith.constant 0 : i32
    %c0_i32_1 = arith.constant 0 : i32
    return %c0_i32, %c0_i32_0 : i32, i32
  }
  func.func @transform_9(%arg0: i32, %arg1: i32) -> (i32, i32) {
    %c0_i32 = arith.constant 0 : i32
    %c0_i32_0 = arith.constant 0 : i32
    %c0_i32_1 = arith.constant 0 : i32
    return %c0_i32, %c0_i32_0 : i32, i32
  }
  func.func @transform_10(%arg0: i32, %arg1: i32) -> (i32, i32) {
    %c0_i32 = arith.constant 0 : i32
    %c0_i32_0 = arith.constant 0 : i32
    %c0_i32_1 = arith.constant 0 : i32
    return %c0_i32, %c0_i32_0 : i32, i32
  }
  func.func @transform_11(%arg0: i32, %arg1: i32) -> (i32, i32) {
    %c0_i32 = arith.constant 0 : i32
    %c0_i32_0 = arith.constant 0 : i32
    %c0_i32_1 = arith.constant 0 : i32
    return %c0_i32, %c0_i32_0 : i32, i32
  }
  func.func @transform_12(%arg0: i32, %arg1: i32) -> (i32, i32) {
    %c0_i32 = arith.constant 0 : i32
    %c0_i32_0 = arith.constant 0 : i32
    %c0_i32_1 = arith.constant 0 : i32
    return %c0_i32, %c0_i32_0 : i32, i32
  }
  func.func @transform_13(%arg0: i32, %arg1: i32) -> (i32, i32) {
    %c0_i32 = arith.constant 0 : i32
    %c0_i32_0 = arith.constant 0 : i32
    %c0_i32_1 = arith.constant 0 : i32
    return %c0_i32, %c0_i32_0 : i32, i32
  }
  func.func @transform_14(%arg0: i32, %arg1: i32) -> (i32, i32, i32) {
    %c0_i32 = arith.constant 0 : i32
    %c0_i32_0 = arith.constant 0 : i32
    %c0_i32_1 = arith.constant 0 : i32
    return %arg1, %c0_i32, %c0_i32_0 : i32, i32, i32
  }
  func.func @transform_15(%arg0: i32, %arg1: i32) -> (i32, i32, i32) {
    %c0_i32 = arith.constant 0 : i32
    %c0_i32_0 = arith.constant 0 : i32
    %c0_i32_1 = arith.constant 0 : i32
    return %arg1, %c0_i32, %c0_i32_0 : i32, i32, i32
  }
  func.func @transform_16(%arg0: i32, %arg1: i32) -> (i32, i32, i32) {
    %c0_i32 = arith.constant 0 : i32
    %c0_i32_0 = arith.constant 0 : i32
    %c0_i32_1 = arith.constant 0 : i32
    return %arg1, %c0_i32, %c0_i32_0 : i32, i32, i32
  }
  func.func @transform_17(%arg0: i32, %arg1: i32) -> (i32, i32, i32) {
    %c0_i32 = arith.constant 0 : i32
    %c0_i32_0 = arith.constant 0 : i32
    %c0_i32_1 = arith.constant 0 : i32
    return %arg1, %c0_i32, %c0_i32_0 : i32, i32, i32
  }
  func.func @transform_18(%arg0: i32, %arg1: i32) -> (i32, i32, i32, i32) {
    %c0_i32 = arith.constant 0 : i32
    %c0_i32_0 = arith.constant 0 : i32
    %c0_i32_1 = arith.constant 0 : i32
    %c0_i32_2 = arith.constant 0 : i32
    return %arg1, %c0_i32, %c0_i32_0, %c0_i32_1 : i32, i32, i32, i32
  }
  func.func @transform_19(%arg0: i32, %arg1: i32) -> (i32, i32, i32, i32) {
    %c0_i32 = arith.constant 0 : i32
    %c0_i32_0 = arith.constant 0 : i32
    %c0_i32_1 = arith.constant 0 : i32
    %c0_i32_2 = arith.constant 0 : i32
    return %arg1, %c0_i32, %c0_i32_0, %c0_i32_1 : i32, i32, i32, i32
  }
  func.func @transform_20(%arg0: i32, %arg1: i32) -> (i32, i32, i32, i32) {
    %c0_i32 = arith.constant 0 : i32
    %c0_i32_0 = arith.constant 0 : i32
    %c0_i32_1 = arith.constant 0 : i32
    %c0_i32_2 = arith.constant 0 : i32
    return %arg1, %c0_i32, %c0_i32_0, %c0_i32_1 : i32, i32, i32, i32
  }
  func.func @transform_21(%arg0: i32, %arg1: i32) -> (i32, i32, i32, i32) {
    %c0_i32 = arith.constant 0 : i32
    %c0_i32_0 = arith.constant 0 : i32
    %c0_i32_1 = arith.constant 0 : i32
    %c0_i32_2 = arith.constant 0 : i32
    return %arg1, %c0_i32, %c0_i32_0, %c0_i32_1 : i32, i32, i32, i32
  }
  func.func @transform_22(%arg0: i32, %arg1: i32) -> (i32, i32, i32, i32) {
    %c0_i32 = arith.constant 0 : i32
    %c0_i32_0 = arith.constant 0 : i32
    %c0_i32_1 = arith.constant 0 : i32
    %c0_i32_2 = arith.constant 0 : i32
    return %arg1, %c0_i32, %c0_i32_0, %c0_i32_1 : i32, i32, i32, i32
  }
  func.func @transform_23(%arg0: i32, %arg1: i32) -> (i32, i32, i32, i32) {
    %c0_i32 = arith.constant 0 : i32
    %c0_i32_0 = arith.constant 0 : i32
    %c0_i32_1 = arith.constant 0 : i32
    %c0_i32_2 = arith.constant 0 : i32
    return %arg1, %c0_i32, %c0_i32_0, %c0_i32_1 : i32, i32, i32, i32
  }
  func.func @transform_24(%arg0: i32, %arg1: i32) -> (i32, i32, i32) {
    %c0_i32 = arith.constant 0 : i32
    %c0_i32_0 = arith.constant 0 : i32
    %c0_i32_1 = arith.constant 0 : i32
    return %arg0, %c0_i32, %c0_i32_0 : i32, i32, i32
  }
  func.func @transform_25(%arg0: i32, %arg1: i32) -> (i32, i32, i32) {
    %c0_i32 = arith.constant 0 : i32
    %c0_i32_0 = arith.constant 0 : i32
    %c0_i32_1 = arith.constant 0 : i32
    return %arg0, %c0_i32, %c0_i32_0 : i32, i32, i32
  }
}

</mosaic_0001>

<llo_original>
// kernel: vl_bert_forward.1
$region0: #{vl_bert_forward.1}
  #allocation0 [shape = 'u32[]', space=smem, size = 0x4, offset = 0x4, fixed_abs, tag = 'smem constant byte address 0x4 - core index']
  #allocation1 [shape = 'u32[72,128]{1,0:T(1,128)}', space=vmem, size = 0x9000, scoped, tag = 'internal scratch']
  #allocation2 [shape = 'f32[16,32]{1,0:T(8,128)}', space=vmem, size = 0x2000, scoped, tag = 'scratch operand']
  #allocation3 [shape = 'f32[8,32]{1,0:T(8,128)}', space=vmem, size = 0x1000, scoped, tag = 'scratch operand']
  #allocation4 [shape = 'f32[16,192]{1,0:T(8,128)}', space=vmem, size = 0x4000, scoped, tag = 'scratch operand']
  #allocation5 [shape = 'f32[8,192]{1,0:T(8,128)}', space=vmem, size = 0x2000, scoped, tag = 'scratch operand']
  #allocation6 [shape = 'f32[16,32]{1,0:T(8,128)}', space=vmem, size = 0x2000, scoped, tag = 'scratch operand']
  #allocation7 [shape = 'f32[8,32]{1,0:T(8,128)}', space=vmem, size = 0x1000, scoped, tag = 'scratch operand']
  #allocation8 [shape = 'f32[16,16]{1,0:T(8,128)}', space=vmem, size = 0x2000, scoped, tag = 'scratch operand']
  #allocation9 [shape = 'f32[16,8]{1,0:T(8,128)}', space=vmem, size = 0x2000, scoped, tag = 'scratch operand']
  #allocation10 [shape = 'f32[8,16]{1,0:T(8,128)}', space=vmem, size = 0x1000, scoped, tag = 'scratch operand']
  #allocation11 [shape = 'f32[8,8]{1,0:T(8,128)}', space=vmem, size = 0x1000, scoped, tag = 'scratch operand']
  %s0 = inlined_call_operand.vmem [shape: f32[2,16,48], index: 0, kind: input, shape index: {}]
  %s1 = inlined_call_operand.vmem [shape: f32[2,8,48], index: 1, kind: input, shape index: {}]
  %s2 = inlined_call_operand.vmem [shape: f32[2,16,1], index: 2, kind: input, shape index: {}]
  %s3 = inlined_call_operand.vmem [shape: f32[2,1,16], index: 3, kind: input, shape index: {}]
  %s4 = inlined_call_operand.vmem [shape: f32[2,8,1], index: 4, kind: input, shape index: {}]
  %s5 = inlined_call_operand.vmem [shape: f32[2,1,8], index: 5, kind: input, shape index: {}]
  %s6 = inlined_call_operand.vmem [shape: bf16[48,32], index: 6, kind: input, shape index: {}]
  %s7 = inlined_call_operand.vmem [shape: f32[16,32], index: 7, kind: input, shape index: {}]
  %s8 = inlined_call_operand.vmem [shape: f32[1,32], index: 8, kind: input, shape index: {}]
  %s9 = inlined_call_operand.vmem [shape: f32[1,32], index: 9, kind: input, shape index: {}]
  %s10 = inlined_call_operand.vmem [shape: bf16[48,32], index: 10, kind: input, shape index: {}]
  %s11 = inlined_call_operand.vmem [shape: f32[8,32], index: 11, kind: input, shape index: {}]
  %s12 = inlined_call_operand.vmem [shape: f32[1,32], index: 12, kind: input, shape index: {}]
  %s13 = inlined_call_operand.vmem [shape: f32[1,32], index: 13, kind: input, shape index: {}]
  %s14 = inlined_call_operand.vmem [shape: bf16[2,32,192], index: 14, kind: input, shape index: {}]
  %s15 = inlined_call_operand.vmem [shape: f32[2,1,192], index: 15, kind: input, shape index: {}]
  %s16 = inlined_call_operand.vmem [shape: bf16[2,32,192], index: 16, kind: input, shape index: {}]
  %s17 = inlined_call_operand.vmem [shape: f32[2,1,192], index: 17, kind: input, shape index: {}]
  %s18 = inlined_call_operand.vmem [shape: bf16[2,2,32,64], index: 18, kind: input, shape index: {}]
  %s19 = inlined_call_operand.vmem [shape: f32[2,2,1,64], index: 19, kind: input, shape index: {}]
  %s20 = inlined_call_operand.vmem [shape: bf16[2,2,64,32], index: 20, kind: input, shape index: {}]
  %s21 = inlined_call_operand.vmem [shape: f32[2,2,1,32], index: 21, kind: input, shape index: {}]
  %s22 = inlined_call_operand.vmem [shape: f32[2,2,1,32], index: 22, kind: input, shape index: {}]
  %s23 = inlined_call_operand.vmem [shape: f32[2,2,1,32], index: 23, kind: input, shape index: {}]
  %s24 = inlined_call_operand.hbm [shape: f32[2,16,32], index: 24, kind: output, shape index: {0}]
  %s25 = inlined_call_operand.hbm [shape: f32[2,8,32], index: 25, kind: output, shape index: {1}]
  %26 = xla_tuple %s24, %s25
  %s27 = sld [smem:[#allocation0]]
  $region145: #{vl_bert_forward.1} parent=0
    _
  %s29 = ssub.s32 1, %s27
  %s30 = scalar_select 0, %s29, %s27
  $region1: #{vl_bert_forward.1} parent=0
    #allocation12 [shape = 'u8[16384]{0}', space=vmem, size = 0x4000, scoped, tag = 'output window, operand 0']
    #allocation13 [shape = 's32[2]{0}', space=sflag, size = 0x8, scoped, tag = 'scoped memory for vl_bert_forward.1']
    #allocation14 [shape = 'u8[8192]{0}', space=vmem, size = 0x2000, scoped, tag = 'output window, operand 1']
    #allocation15 [shape = 's32[2]{0}', space=sflag, size = 0x8, scoped, tag = 'scoped memory for vl_bert_forward.1']
    %31 = vsyncpa [#allocation13], 0
    %s32 = scalar_lea.sflag [#allocation13], 1
    %33 = vsyncpa %s32, 0
    %34 = vsyncpa [#allocation15], 0
    %s35 = scalar_lea.sflag [#allocation15], 1
    %36 = vsyncpa %s35, 0
    loop: start=0, step=1, limit=6
    $region2: #{vl_bert_forward.1} parent=1 // loop_pre_header
      _
    $region3: #{vl_bert_forward.1} parent=1 // loop_header
      %s38 = sphi 0, %s42
      %p39 = scmp.ge.s32.totalorder %s38, 6
      %s45 = sphi 0, %s57
      %s46 = sphi 0, %s53
      %s47 = sphi 0, %s45
      %s48 = sphi 0, %s46
      %s49 = sphi 0, %s47
      %s50 = sphi 0, %s48
      %s60 = sphi 0, %s62
      %s63 = sphi 0, %s60
      %s64 = sphi 0, %s63
      %s80 = sphi 0, %s64
      %s86 = sphi 0, %s88
      %s89 = sphi 0, %s86
      %s90 = sphi 0, %s89
      %s106 = sphi 0, %s90
      %s112 = sphi 0, %s114
      %s115 = sphi 0, %s112
      %s116 = sphi 0, %s115
      %s132 = sphi 0, %s116
      %s138 = sphi 0, %s140
      %s141 = sphi 0, %s138
      %s142 = sphi 0, %s141
      %s158 = sphi 0, %s142
      %s164 = sphi 0, %s166
      %s167 = sphi 0, %s164
      %s168 = sphi 0, %s167
      %s184 = sphi 0, %s168
      %s190 = sphi 0, %s192
      %s193 = sphi 0, %s190
      %s194 = sphi 0, %s193
      %s210 = sphi 0, %s194
      %s214 = sphi 0, %s214
      %s216 = sphi 0, %s214
      %s217 = sphi 0, %s216
      %s231 = sphi 0, %s217
      %s235 = sphi 0, %s235
      %s237 = sphi 0, %s235
      %s238 = sphi 0, %s237
      %s252 = sphi 0, %s238
      %s256 = sphi 0, %s256
      %s258 = sphi 0, %s256
      %s259 = sphi 0, %s258
      %s273 = sphi 0, %s259
      %s277 = sphi 0, %s277
      %s279 = sphi 0, %s277
      %s280 = sphi 0, %s279
      %s294 = sphi 0, %s280
      %s298 = sphi 0, %s298
      %s300 = sphi 0, %s298
      %s301 = sphi 0, %s300
      %s315 = sphi 0, %s301
      %s319 = sphi 0, %s319
      %s321 = sphi 0, %s319
      %s322 = sphi 0, %s321
      %s336 = sphi 0, %s322
      %s340 = sphi 0, %s340
      %s342 = sphi 0, %s340
      %s343 = sphi 0, %s342
      %s357 = sphi 0, %s343
      %s361 = sphi 0, %s361
      %s363 = sphi 0, %s361
      %s364 = sphi 0, %s363
      %s378 = sphi 0, %s364
      %s384 = sphi 0, %s386
      %s387 = sphi 0, %s384
      %s388 = sphi 0, %s387
      %s404 = sphi 0, %s388
      %s410 = sphi 0, %s412
      %s413 = sphi 0, %s410
      %s414 = sphi 0, %s413
      %s430 = sphi 0, %s414
      %s436 = sphi 0, %s438
      %s439 = sphi 0, %s436
      %s440 = sphi 0, %s439
      %s456 = sphi 0, %s440
      %s462 = sphi 0, %s464
      %s465 = sphi 0, %s462
      %s466 = sphi 0, %s465
      %s482 = sphi 0, %s466
      %s488 = sphi 0, %s490
      %s491 = sphi 0, %s488
      %s492 = sphi 0, %s491
      %s508 = sphi 0, %s492
      %s514 = sphi 0, %s516
      %s517 = sphi 0, %s514
      %s518 = sphi 0, %s517
      %s534 = sphi 0, %s518
      %s540 = sphi 0, %s542
      %s543 = sphi 0, %s540
      %s544 = sphi 0, %s543
      %s560 = sphi 0, %s544
      %s566 = sphi 0, %s568
      %s569 = sphi 0, %s566
      %s570 = sphi 0, %s569
      %s586 = sphi 0, %s570
      %s592 = sphi 0, %s594
      %s595 = sphi 0, %s592
      %s596 = sphi 0, %s595
      %s612 = sphi 0, %s596
      %s618 = sphi 0, %s620
      %s621 = sphi 0, %s618
      %s622 = sphi 0, %s621
      %s638 = sphi 0, %s622
      %s644 = sphi 0, %s646
      %s647 = sphi 0, %s644
      %s648 = sphi 0, %s647
      %s664 = sphi 0, %s648
      %s670 = sphi 0, %s672
      %s673 = sphi 0, %s670
      %s674 = sphi 0, %s673
      %s690 = sphi 0, %s674
    $region4: #{vl_bert_forward.1} parent=1 // loop_header_branch
      %41 = sbr.rel (%p39) target = $region8
    $region5: #{vl_bert_forward.1} parent=1 // loop_body
      %s43 = ssub.s32 %s38, 1
      %s44 = ssub.s32 %s38, 2
      %s51 = sadd.s32 1, %s46
      %p52 = scmp.ge.s32.totalorder %s51, 2
      %s53 = scalar_select %p52, 0, %s51
      %s54 = sadd.s32 1, %s45
      %s55 = scalar_select %p52, %s54, %s45
      %p56 = scmp.ge.s32.totalorder %s55, 2
      %s57 = scalar_select %p56, 0, %s55
      %s58 = ssub.s32 %s45, %s57
      %p59 = scmp.eq.s32.totalorder %s58, 0
      %s61 = sadd.s32 %s60, 1
      %s62 = scalar_select %p59, %s60, %s61
      %p65 = pneg %p59
      %p66 = scmp.eq.s32.totalorder %s38, 3
      %p67 = por %p65, %p66
      %p68 = scmp.ne.s32.totalorder %s60, %s63
      %p69 = scmp.eq.s32.totalorder %s38, 0
      %p70 = por %p68, %p69
      %p71 = scmp.ne.s32.totalorder %s60, %s63
      %p72 = scmp.eq.s32.totalorder %s43, 3
      %p73 = por %p71, %p72
      %p74 = scmp.ne.s32.totalorder %s63, %s64
      %p75 = scmp.eq.s32.totalorder %s43, 0
      %p76 = por %p74, %p75
      %p77 = scmp.ne.s32.totalorder %s63, %s64
      %p78 = scmp.eq.s32.totalorder %s44, 3
      %p79 = por %p77, %p78
      %p81 = scmp.ne.s32.totalorder %s64, %s80
      %p82 = scmp.eq.s32.totalorder %s44, 0
      %p83 = por %p81, %p82
      %s84 = ssub.s32 %s45, %s57
      %p85 = scmp.eq.s32.totalorder %s84, 0
      %s87 = sadd.s32 %s86, 1
      %s88 = scalar_select %p85, %s86, %s87
      %p91 = pneg %p85
      %p92 = scmp.eq.s32.totalorder %s38, 3
      %p93 = por %p91, %p92
      %p94 = scmp.ne.s32.totalorder %s86, %s89
      %p95 = scmp.eq.s32.totalorder %s38, 0
      %p96 = por %p94, %p95
      %p97 = scmp.ne.s32.totalorder %s86, %s89
      %p98 = scmp.eq.s32.totalorder %s43, 3
      %p99 = por %p97, %p98
      %p100 = scmp.ne.s32.totalorder %s89, %s90
      %p101 = scmp.eq.s32.totalorder %s43, 0
      %p102 = por %p100, %p101
      %p103 = scmp.ne.s32.totalorder %s89, %s90
      %p104 = scmp.eq.s32.totalorder %s44, 3
      %p105 = por %p103, %p104
      %p107 = scmp.ne.s32.totalorder %s90, %s106
      %p108 = scmp.eq.s32.totalorder %s44, 0
      %p109 = por %p107, %p108
      %s110 = ssub.s32 %s45, %s57
      %p111 = scmp.eq.s32.totalorder %s110, 0
      %s113 = sadd.s32 %s112, 1
      %s114 = scalar_select %p111, %s112, %s113
      %p117 = pneg %p111
      %p118 = scmp.eq.s32.totalorder %s38, 3
      %p119 = por %p117, %p118
      %p120 = scmp.ne.s32.totalorder %s112, %s115
      %p121 = scmp.eq.s32.totalorder %s38, 0
      %p122 = por %p120, %p121
      %p123 = scmp.ne.s32.totalorder %s112, %s115
      %p124 = scmp.eq.s32.totalorder %s43, 3
      %p125 = por %p123, %p124
      %p126 = scmp.ne.s32.totalorder %s115, %s116
      %p127 = scmp.eq.s32.totalorder %s43, 0
      %p128 = por %p126, %p127
      %p129 = scmp.ne.s32.totalorder %s115, %s116
      %p130 = scmp.eq.s32.totalorder %s44, 3
      %p131 = por %p129, %p130
      %p133 = scmp.ne.s32.totalorder %s116, %s132
      %p134 = scmp.eq.s32.totalorder %s44, 0
      %p135 = por %p133, %p134
      %s136 = ssub.s32 %s45, %s57
      %p137 = scmp.eq.s32.totalorder %s136, 0
      %s139 = sadd.s32 %s138, 1
      %s140 = scalar_select %p137, %s138, %s139
      %p143 = pneg %p137
      %p144 = scmp.eq.s32.totalorder %s38, 3
      %p145 = por %p143, %p144
      %p146 = scmp.ne.s32.totalorder %s138, %s141
      %p147 = scmp.eq.s32.totalorder %s38, 0
      %p148 = por %p146, %p147
      %p149 = scmp.ne.s32.totalorder %s138, %s141
      %p150 = scmp.eq.s32.totalorder %s43, 3
      %p151 = por %p149, %p150
      %p152 = scmp.ne.s32.totalorder %s141, %s142
      %p153 = scmp.eq.s32.totalorder %s43, 0
      %p154 = por %p152, %p153
      %p155 = scmp.ne.s32.totalorder %s141, %s142
      %p156 = scmp.eq.s32.totalorder %s44, 3
      %p157 = por %p155, %p156
      %p159 = scmp.ne.s32.totalorder %s142, %s158
      %p160 = scmp.eq.s32.totalorder %s44, 0
      %p161 = por %p159, %p160
      %s162 = ssub.s32 %s45, %s57
      %p163 = scmp.eq.s32.totalorder %s162, 0
      %s165 = sadd.s32 %s164, 1
      %s166 = scalar_select %p163, %s164, %s165
      %p169 = pneg %p163
      %p170 = scmp.eq.s32.totalorder %s38, 3
      %p171 = por %p169, %p170
      %p172 = scmp.ne.s32.totalorder %s164, %s167
      %p173 = scmp.eq.s32.totalorder %s38, 0
      %p174 = por %p172, %p173
      %p175 = scmp.ne.s32.totalorder %s164, %s167
      %p176 = scmp.eq.s32.totalorder %s43, 3
      %p177 = por %p175, %p176
      %p178 = scmp.ne.s32.totalorder %s167, %s168
      %p179 = scmp.eq.s32.totalorder %s43, 0
      %p180 = por %p178, %p179
      %p181 = scmp.ne.s32.totalorder %s167, %s168
      %p182 = scmp.eq.s32.totalorder %s44, 3
      %p183 = por %p181, %p182
      %p185 = scmp.ne.s32.totalorder %s168, %s184
      %p186 = scmp.eq.s32.totalorder %s44, 0
      %p187 = por %p185, %p186
      %s188 = ssub.s32 %s45, %s57
      %p189 = scmp.eq.s32.totalorder %s188, 0
      %s191 = sadd.s32 %s190, 1
      %s192 = scalar_select %p189, %s190, %s191
      %p195 = pneg %p189
      %p196 = scmp.eq.s32.totalorder %s38, 3
      %p197 = por %p195, %p196
      %p198 = scmp.ne.s32.totalorder %s190, %s193
      %p199 = scmp.eq.s32.totalorder %s38, 0
      %p200 = por %p198, %p199
      %p201 = scmp.ne.s32.totalorder %s190, %s193
      %p202 = scmp.eq.s32.totalorder %s43, 3
      %p203 = por %p201, %p202
      %p204 = scmp.ne.s32.totalorder %s193, %s194
      %p205 = scmp.eq.s32.totalorder %s43, 0
      %p206 = por %p204, %p205
      %p207 = scmp.ne.s32.totalorder %s193, %s194
      %p208 = scmp.eq.s32.totalorder %s44, 3
      %p209 = por %p207, %p208
      %p211 = scmp.ne.s32.totalorder %s194, %s210
      %p212 = scmp.eq.s32.totalorder %s44, 0
      %p213 = por %p211, %p212
      %s215 = sadd.s32 %s214, 1
      %p218 = scmp.eq.s32.totalorder %s38, 3
      %p219 = scmp.ne.s32.totalorder %s214, %s216
      %p220 = scmp.eq.s32.totalorder %s38, 0
      %p221 = por %p219, %p220
      %p222 = scmp.ne.s32.totalorder %s214, %s216
      %p223 = scmp.eq.s32.totalorder %s43, 3
      %p224 = por %p222, %p223
      %p225 = scmp.ne.s32.totalorder %s216, %s217
      %p226 = scmp.eq.s32.totalorder %s43, 0
      %p227 = por %p225, %p226
      %p228 = scmp.ne.s32.totalorder %s216, %s217
      %p229 = scmp.eq.s32.totalorder %s44, 3
      %p230 = por %p228, %p229
      %p232 = scmp.ne.s32.totalorder %s217, %s231
      %p233 = scmp.eq.s32.totalorder %s44, 0
      %p234 = por %p232, %p233
      %s236 = sadd.s32 %s235, 1
      %p239 = scmp.eq.s32.totalorder %s38, 3
      %p240 = scmp.ne.s32.totalorder %s235, %s237
      %p241 = scmp.eq.s32.totalorder %s38, 0
      %p242 = por %p240, %p241
      %p243 = scmp.ne.s32.totalorder %s235, %s237
      %p244 = scmp.eq.s32.totalorder %s43, 3
      %p245 = por %p243, %p244
      %p246 = scmp.ne.s32.totalorder %s237, %s238
      %p247 = scmp.eq.s32.totalorder %s43, 0
      %p248 = por %p246, %p247
      %p249 = scmp.ne.s32.totalorder %s237, %s238
      %p250 = scmp.eq.s32.totalorder %s44, 3
      %p251 = por %p249, %p250
      %p253 = scmp.ne.s32.totalorder %s238, %s252
      %p254 = scmp.eq.s32.totalorder %s44, 0
      %p255 = por %p253, %p254
      %s257 = sadd.s32 %s256, 1
      %p260 = scmp.eq.s32.totalorder %s38, 3
      %p261 = scmp.ne.s32.totalorder %s256, %s258
      %p262 = scmp.eq.s32.totalorder %s38, 0
      %p263 = por %p261, %p262
      %p264 = scmp.ne.s32.totalorder %s256, %s258
      %p265 = scmp.eq.s32.totalorder %s43, 3
      %p266 = por %p264, %p265
      %p267 = scmp.ne.s32.totalorder %s258, %s259
      %p268 = scmp.eq.s32.totalorder %s43, 0
      %p269 = por %p267, %p268
      %p270 = scmp.ne.s32.totalorder %s258, %s259
      %p271 = scmp.eq.s32.totalorder %s44, 3
      %p272 = por %p270, %p271
      %p274 = scmp.ne.s32.totalorder %s259, %s273
      %p275 = scmp.eq.s32.totalorder %s44, 0
      %p276 = por %p274, %p275
      %s278 = sadd.s32 %s277, 1
      %p281 = scmp.eq.s32.totalorder %s38, 3
      %p282 = scmp.ne.s32.totalorder %s277, %s279
      %p283 = scmp.eq.s32.totalorder %s38, 0
      %p284 = por %p282, %p283
      %p285 = scmp.ne.s32.totalorder %s277, %s279
      %p286 = scmp.eq.s32.totalorder %s43, 3
      %p287 = por %p285, %p286
      %p288 = scmp.ne.s32.totalorder %s279, %s280
      %p289 = scmp.eq.s32.totalorder %s43, 0
      %p290 = por %p288, %p289
      %p291 = scmp.ne.s32.totalorder %s279, %s280
      %p292 = scmp.eq.s32.totalorder %s44, 3
      %p293 = por %p291, %p292
      %p295 = scmp.ne.s32.totalorder %s280, %s294
      %p296 = scmp.eq.s32.totalorder %s44, 0
      %p297 = por %p295, %p296
      %s299 = sadd.s32 %s298, 1
      %p302 = scmp.eq.s32.totalorder %s38, 3
      %p303 = scmp.ne.s32.totalorder %s298, %s300
      %p304 = scmp.eq.s32.totalorder %s38, 0
      %p305 = por %p303, %p304
      %p306 = scmp.ne.s32.totalorder %s298, %s300
      %p307 = scmp.eq.s32.totalorder %s43, 3
      %p308 = por %p306, %p307
      %p309 = scmp.ne.s32.totalorder %s300, %s301
      %p310 = scmp.eq.s32.totalorder %s43, 0
      %p311 = por %p309, %p310
      %p312 = scmp.ne.s32.totalorder %s300, %s301
      %p313 = scmp.eq.s32.totalorder %s44, 3
      %p314 = por %p312, %p313
      %p316 = scmp.ne.s32.totalorder %s301, %s315
      %p317 = scmp.eq.s32.totalorder %s44, 0
      %p318 = por %p316, %p317
      %s320 = sadd.s32 %s319, 1
      %p323 = scmp.eq.s32.totalorder %s38, 3
      %p324 = scmp.ne.s32.totalorder %s319, %s321
      %p325 = scmp.eq.s32.totalorder %s38, 0
      %p326 = por %p324, %p325
      %p327 = scmp.ne.s32.totalorder %s319, %s321
      %p328 = scmp.eq.s32.totalorder %s43, 3
      %p329 = por %p327, %p328
      %p330 = scmp.ne.s32.totalorder %s321, %s322
      %p331 = scmp.eq.s32.totalorder %s43, 0
      %p332 = por %p330, %p331
      %p333 = scmp.ne.s32.totalorder %s321, %s322
      %p334 = scmp.eq.s32.totalorder %s44, 3
      %p335 = por %p333, %p334
      %p337 = scmp.ne.s32.totalorder %s322, %s336
      %p338 = scmp.eq.s32.totalorder %s44, 0
      %p339 = por %p337, %p338
      %s341 = sadd.s32 %s340, 1
      %p344 = scmp.eq.s32.totalorder %s38, 3
      %p345 = scmp.ne.s32.totalorder %s340, %s342
      %p346 = scmp.eq.s32.totalorder %s38, 0
      %p347 = por %p345, %p346
      %p348 = scmp.ne.s32.totalorder %s340, %s342
      %p349 = scmp.eq.s32.totalorder %s43, 3
      %p350 = por %p348, %p349
      %p351 = scmp.ne.s32.totalorder %s342, %s343
      %p352 = scmp.eq.s32.totalorder %s43, 0
      %p353 = por %p351, %p352
      %p354 = scmp.ne.s32.totalorder %s342, %s343
      %p355 = scmp.eq.s32.totalorder %s44, 3
      %p356 = por %p354, %p355
      %p358 = scmp.ne.s32.totalorder %s343, %s357
      %p359 = scmp.eq.s32.totalorder %s44, 0
      %p360 = por %p358, %p359
      %s362 = sadd.s32 %s361, 1
      %p365 = scmp.eq.s32.totalorder %s38, 3
      %p366 = scmp.ne.s32.totalorder %s361, %s363
      %p367 = scmp.eq.s32.totalorder %s38, 0
      %p368 = por %p366, %p367
      %p369 = scmp.ne.s32.totalorder %s361, %s363
      %p370 = scmp.eq.s32.totalorder %s43, 3
      %p371 = por %p369, %p370
      %p372 = scmp.ne.s32.totalorder %s363, %s364
      %p373 = scmp.eq.s32.totalorder %s43, 0
      %p374 = por %p372, %p373
      %p375 = scmp.ne.s32.totalorder %s363, %s364
      %p376 = scmp.eq.s32.totalorder %s44, 3
      %p377 = por %p375, %p376
      %p379 = scmp.ne.s32.totalorder %s364, %s378
      %p380 = scmp.eq.s32.totalorder %s44, 0
      %p381 = por %p379, %p380
      %s382 = ssub.s32 %s46, %s53
      %p383 = scmp.eq.s32.totalorder %s382, 0
      %s385 = sadd.s32 %s384, 1
      %s386 = scalar_select %p383, %s384, %s385
      %p389 = pneg %p383
      %p390 = scmp.eq.s32.totalorder %s38, 3
      %p391 = por %p389, %p390
      %p392 = scmp.ne.s32.totalorder %s384, %s387
      %p393 = scmp.eq.s32.totalorder %s38, 0
      %p394 = por %p392, %p393
      %p395 = scmp.ne.s32.totalorder %s384, %s387
      %p396 = scmp.eq.s32.totalorder %s43, 3
      %p397 = por %p395, %p396
      %p398 = scmp.ne.s32.totalorder %s387, %s388
      %p399 = scmp.eq.s32.totalorder %s43, 0
      %p400 = por %p398, %p399
      %p401 = scmp.ne.s32.totalorder %s387, %s388
      %p402 = scmp.eq.s32.totalorder %s44, 3
      %p403 = por %p401, %p402
      %p405 = scmp.ne.s32.totalorder %s388, %s404
      %p406 = scmp.eq.s32.totalorder %s44, 0
      %p407 = por %p405, %p406
      %s408 = ssub.s32 %s46, %s53
      %p409 = scmp.eq.s32.totalorder %s408, 0
      %s411 = sadd.s32 %s410, 1
      %s412 = scalar_select %p409, %s410, %s411
      %p415 = pneg %p409
      %p416 = scmp.eq.s32.totalorder %s38, 3
      %p417 = por %p415, %p416
      %p418 = scmp.ne.s32.totalorder %s410, %s413
      %p419 = scmp.eq.s32.totalorder %s38, 0
      %p420 = por %p418, %p419
      %p421 = scmp.ne.s32.totalorder %s410, %s413
      %p422 = scmp.eq.s32.totalorder %s43, 3
      %p423 = por %p421, %p422
      %p424 = scmp.ne.s32.totalorder %s413, %s414
      %p425 = scmp.eq.s32.totalorder %s43, 0
      %p426 = por %p424, %p425
      %p427 = scmp.ne.s32.totalorder %s413, %s414
      %p428 = scmp.eq.s32.totalorder %s44, 3
      %p429 = por %p427, %p428
      %p431 = scmp.ne.s32.totalorder %s414, %s430
      %p432 = scmp.eq.s32.totalorder %s44, 0
      %p433 = por %p431, %p432
      %s434 = ssub.s32 %s46, %s53
      %p435 = scmp.eq.s32.totalorder %s434, 0
      %s437 = sadd.s32 %s436, 1
      %s438 = scalar_select %p435, %s436, %s437
      %p441 = pneg %p435
      %p442 = scmp.eq.s32.totalorder %s38, 3
      %p443 = por %p441, %p442
      %p444 = scmp.ne.s32.totalorder %s436, %s439
      %p445 = scmp.eq.s32.totalorder %s38, 0
      %p446 = por %p444, %p445
      %p447 = scmp.ne.s32.totalorder %s436, %s439
      %p448 = scmp.eq.s32.totalorder %s43, 3
      %p449 = por %p447, %p448
      %p450 = scmp.ne.s32.totalorder %s439, %s440
      %p451 = scmp.eq.s32.totalorder %s43, 0
      %p452 = por %p450, %p451
      %p453 = scmp.ne.s32.totalorder %s439, %s440
      %p454 = scmp.eq.s32.totalorder %s44, 3
      %p455 = por %p453, %p454
      %p457 = scmp.ne.s32.totalorder %s440, %s456
      %p458 = scmp.eq.s32.totalorder %s44, 0
      %p459 = por %p457, %p458
      %s460 = ssub.s32 %s46, %s53
      %p461 = scmp.eq.s32.totalorder %s460, 0
      %s463 = sadd.s32 %s462, 1
      %s464 = scalar_select %p461, %s462, %s463
      %p467 = pneg %p461
      %p468 = scmp.eq.s32.totalorder %s38, 3
      %p469 = por %p467, %p468
      %p470 = scmp.ne.s32.totalorder %s462, %s465
      %p471 = scmp.eq.s32.totalorder %s38, 0
      %p472 = por %p470, %p471
      %p473 = scmp.ne.s32.totalorder %s462, %s465
      %p474 = scmp.eq.s32.totalorder %s43, 3
      %p475 = por %p473, %p474
      %p476 = scmp.ne.s32.totalorder %s465, %s466
      %p477 = scmp.eq.s32.totalorder %s43, 0
      %p478 = por %p476, %p477
      %p479 = scmp.ne.s32.totalorder %s465, %s466
      %p480 = scmp.eq.s32.totalorder %s44, 3
      %p481 = por %p479, %p480
      %p483 = scmp.ne.s32.totalorder %s466, %s482
      %p484 = scmp.eq.s32.totalorder %s44, 0
      %p485 = por %p483, %p484
      %s486 = ssub.s32 %s46, %s53
      %p487 = scmp.eq.s32.totalorder %s486, 0
      %s489 = sadd.s32 %s488, 1
      %s490 = scalar_select %p487, %s488, %s489
      %p493 = pneg %p487
      %p494 = scmp.eq.s32.totalorder %s38, 3
      %p495 = por %p493, %p494
      %p496 = scmp.ne.s32.totalorder %s488, %s491
      %p497 = scmp.eq.s32.totalorder %s38, 0
      %p498 = por %p496, %p497
      %p499 = scmp.ne.s32.totalorder %s488, %s491
      %p500 = scmp.eq.s32.totalorder %s43, 3
      %p501 = por %p499, %p500
      %p502 = scmp.ne.s32.totalorder %s491, %s492
      %p503 = scmp.eq.s32.totalorder %s43, 0
      %p504 = por %p502, %p503
      %p505 = scmp.ne.s32.totalorder %s491, %s492
      %p506 = scmp.eq.s32.totalorder %s44, 3
      %p507 = por %p505, %p506
      %p509 = scmp.ne.s32.totalorder %s492, %s508
      %p510 = scmp.eq.s32.totalorder %s44, 0
      %p511 = por %p509, %p510
      %s512 = ssub.s32 %s46, %s53
      %p513 = scmp.eq.s32.totalorder %s512, 0
      %s515 = sadd.s32 %s514, 1
      %s516 = scalar_select %p513, %s514, %s515
      %p519 = pneg %p513
      %p520 = scmp.eq.s32.totalorder %s38, 3
      %p521 = por %p519, %p520
      %p522 = scmp.ne.s32.totalorder %s514, %s517
      %p523 = scmp.eq.s32.totalorder %s38, 0
      %p524 = por %p522, %p523
      %p525 = scmp.ne.s32.totalorder %s514, %s517
      %p526 = scmp.eq.s32.totalorder %s43, 3
      %p527 = por %p525, %p526
      %p528 = scmp.ne.s32.totalorder %s517, %s518
      %p529 = scmp.eq.s32.totalorder %s43, 0
      %p530 = por %p528, %p529
      %p531 = scmp.ne.s32.totalorder %s517, %s518
      %p532 = scmp.eq.s32.totalorder %s44, 3
      %p533 = por %p531, %p532
      %p535 = scmp.ne.s32.totalorder %s518, %s534
      %p536 = scmp.eq.s32.totalorder %s44, 0
      %p537 = por %p535, %p536
      %s538 = ssub.s32 %s46, %s53
      %p539 = scmp.eq.s32.totalorder %s538, 0
      %s541 = sadd.s32 %s540, 1
      %s542 = scalar_select %p539, %s540, %s541
      %p545 = pneg %p539
      %p546 = scmp.eq.s32.totalorder %s38, 3
      %p547 = por %p545, %p546
      %p548 = scmp.ne.s32.totalorder %s540, %s543
      %p549 = scmp.eq.s32.totalorder %s38, 0
      %p550 = por %p548, %p549
      %p551 = scmp.ne.s32.totalorder %s540, %s543
      %p552 = scmp.eq.s32.totalorder %s43, 3
      %p553 = por %p551, %p552
      %p554 = scmp.ne.s32.totalorder %s543, %s544
      %p555 = scmp.eq.s32.totalorder %s43, 0
      %p556 = por %p554, %p555
      %p557 = scmp.ne.s32.totalorder %s543, %s544
      %p558 = scmp.eq.s32.totalorder %s44, 3
      %p559 = por %p557, %p558
      %p561 = scmp.ne.s32.totalorder %s544, %s560
      %p562 = scmp.eq.s32.totalorder %s44, 0
      %p563 = por %p561, %p562
      %s564 = ssub.s32 %s46, %s53
      %p565 = scmp.eq.s32.totalorder %s564, 0
      %s567 = sadd.s32 %s566, 1
      %s568 = scalar_select %p565, %s566, %s567
      %p571 = pneg %p565
      %p572 = scmp.eq.s32.totalorder %s38, 3
      %p573 = por %p571, %p572
      %p574 = scmp.ne.s32.totalorder %s566, %s569
      %p575 = scmp.eq.s32.totalorder %s38, 0
      %p576 = por %p574, %p575
      %p577 = scmp.ne.s32.totalorder %s566, %s569
      %p578 = scmp.eq.s32.totalorder %s43, 3
      %p579 = por %p577, %p578
      %p580 = scmp.ne.s32.totalorder %s569, %s570
      %p581 = scmp.eq.s32.totalorder %s43, 0
      %p582 = por %p580, %p581
      %p583 = scmp.ne.s32.totalorder %s569, %s570
      %p584 = scmp.eq.s32.totalorder %s44, 3
      %p585 = por %p583, %p584
      %p587 = scmp.ne.s32.totalorder %s570, %s586
      %p588 = scmp.eq.s32.totalorder %s44, 0
      %p589 = por %p587, %p588
      %s590 = ssub.s32 %s46, %s53
      %p591 = scmp.eq.s32.totalorder %s590, 0
      %s593 = sadd.s32 %s592, 1
      %s594 = scalar_select %p591, %s592, %s593
      %p597 = pneg %p591
      %p598 = scmp.eq.s32.totalorder %s38, 3
      %p599 = por %p597, %p598
      %p600 = scmp.ne.s32.totalorder %s592, %s595
      %p601 = scmp.eq.s32.totalorder %s38, 0
      %p602 = por %p600, %p601
      %p603 = scmp.ne.s32.totalorder %s592, %s595
      %p604 = scmp.eq.s32.totalorder %s43, 3
      %p605 = por %p603, %p604
      %p606 = scmp.ne.s32.totalorder %s595, %s596
      %p607 = scmp.eq.s32.totalorder %s43, 0
      %p608 = por %p606, %p607
      %p609 = scmp.ne.s32.totalorder %s595, %s596
      %p610 = scmp.eq.s32.totalorder %s44, 3
      %p611 = por %p609, %p610
      %p613 = scmp.ne.s32.totalorder %s596, %s612
      %p614 = scmp.eq.s32.totalorder %s44, 0
      %p615 = por %p613, %p614
      %s616 = ssub.s32 %s46, %s53
      %p617 = scmp.eq.s32.totalorder %s616, 0
      %s619 = sadd.s32 %s618, 1
      %s620 = scalar_select %p617, %s618, %s619
      %p623 = pneg %p617
      %p624 = scmp.eq.s32.totalorder %s38, 3
      %p625 = por %p623, %p624
      %p626 = scmp.ne.s32.totalorder %s618, %s621
      %p627 = scmp.eq.s32.totalorder %s38, 0
      %p628 = por %p626, %p627
      %p629 = scmp.ne.s32.totalorder %s618, %s621
      %p630 = scmp.eq.s32.totalorder %s43, 3
      %p631 = por %p629, %p630
      %p632 = scmp.ne.s32.totalorder %s621, %s622
      %p633 = scmp.eq.s32.totalorder %s43, 0
      %p634 = por %p632, %p633
      %p635 = scmp.ne.s32.totalorder %s621, %s622
      %p636 = scmp.eq.s32.totalorder %s44, 3
      %p637 = por %p635, %p636
      %p639 = scmp.ne.s32.totalorder %s622, %s638
      %p640 = scmp.eq.s32.totalorder %s44, 0
      %p641 = por %p639, %p640
      %s642 = ssub.s32 %s45, %s57
      %p643 = scmp.eq.s32.totalorder %s642, 0
      %s645 = sadd.s32 %s644, 1
      %s646 = scalar_select %p643, %s644, %s645
      %p649 = pneg %p643
      %p650 = scmp.eq.s32.totalorder %s38, 3
      %p651 = por %p649, %p650
      %p652 = scmp.ne.s32.totalorder %s644, %s647
      %p653 = scmp.eq.s32.totalorder %s38, 0
      %p654 = por %p652, %p653
      %p655 = scmp.ne.s32.totalorder %s644, %s647
      %p656 = scmp.eq.s32.totalorder %s43, 3
      %p657 = por %p655, %p656
      %p658 = scmp.ne.s32.totalorder %s647, %s648
      %p659 = scmp.eq.s32.totalorder %s43, 0
      %p660 = por %p658, %p659
      %p661 = scmp.ne.s32.totalorder %s647, %s648
      %p662 = scmp.eq.s32.totalorder %s44, 3
      %p663 = por %p661, %p662
      %p665 = scmp.ne.s32.totalorder %s648, %s664
      %p666 = scmp.eq.s32.totalorder %s44, 0
      %p667 = por %p665, %p666
      %s668 = ssub.s32 %s45, %s57
      %p669 = scmp.eq.s32.totalorder %s668, 0
      %s671 = sadd.s32 %s670, 1
      %s672 = scalar_select %p669, %s670, %s671
      %p675 = pneg %p669
      %p676 = scmp.eq.s32.totalorder %s38, 3
      %p677 = por %p675, %p676
      %p678 = scmp.ne.s32.totalorder %s670, %s673
      %p679 = scmp.eq.s32.totalorder %s38, 0
      %p680 = por %p678, %p679
      %p681 = scmp.ne.s32.totalorder %s670, %s673
      %p682 = scmp.eq.s32.totalorder %s43, 3
      %p683 = por %p681, %p682
      %p684 = scmp.ne.s32.totalorder %s673, %s674
      %p685 = scmp.eq.s32.totalorder %s43, 0
      %p686 = por %p684, %p685
      %p687 = scmp.ne.s32.totalorder %s673, %s674
      %p688 = scmp.eq.s32.totalorder %s44, 3
      %p689 = por %p687, %p688
      %p691 = scmp.ne.s32.totalorder %s674, %s690
      %p692 = scmp.eq.s32.totalorder %s44, 0
      %p693 = por %p691, %p692
      %p694 = scmp.le.s32.totalorder 1, %s38
      %p695 = scmp.lt.s32.totalorder %s38, 5
      %p696 = pnand %p694, %p695
      %p697 = pneg %p696
      // Predicated region
      $region9: #{vl_bert_forward.1} parent=5 // pred_check
        _
      $region10: #{vl_bert_forward.1} parent=5 // pred_check_branch
        %699 = sbr.rel (%p696) target = $region12
      $region11: #{vl_bert_forward.1} parent=5 // pred_region
        %s700 = ssub.s32 %s38, 1
        // Predicated region
        $region13: #{vl_bert_forward.1} parent=11 // pred_check
          %p701 = pneg %p227
        $region14: #{vl_bert_forward.1} parent=11 // pred_check_branch
          %703 = sbr.rel (%p701) target = $region16
        $region15: #{vl_bert_forward.1} parent=11 // pred_region
          _
        $region16: #{vl_bert_forward.1} parent=11 // pred_fallthru
          _
        // Predicated region
        $region17: #{vl_bert_forward.1} parent=11 // pred_check
          %p704 = pneg %p248
        $region18: #{vl_bert_forward.1} parent=11 // pred_check_branch
          %706 = sbr.rel (%p704) target = $region20
        $region19: #{vl_bert_forward.1} parent=11 // pred_region
          _
        $region20: #{vl_bert_forward.1} parent=11 // pred_fallthru
          _
        // Predicated region
        $region21: #{vl_bert_forward.1} parent=11 // pred_check
          %p707 = pneg %p269
        $region22: #{vl_bert_forward.1} parent=11 // pred_check_branch
          %709 = sbr.rel (%p707) target = $region24
        $region23: #{vl_bert_forward.1} parent=11 // pred_region
          _
        $region24: #{vl_bert_forward.1} parent=11 // pred_fallthru
          _
        // Predicated region
        $region25: #{vl_bert_forward.1} parent=11 // pred_check
          %p710 = pneg %p290
        $region26: #{vl_bert_forward.1} parent=11 // pred_check_branch
          %712 = sbr.rel (%p710) target = $region28
        $region27: #{vl_bert_forward.1} parent=11 // pred_region
          _
        $region28: #{vl_bert_forward.1} parent=11 // pred_fallthru
          _
        // Predicated region
        $region29: #{vl_bert_forward.1} parent=11 // pred_check
          %p713 = pneg %p311
        $region30: #{vl_bert_forward.1} parent=11 // pred_check_branch
          %715 = sbr.rel (%p713) target = $region32
        $region31: #{vl_bert_forward.1} parent=11 // pred_region
          _
        $region32: #{vl_bert_forward.1} parent=11 // pred_fallthru
          _
        // Predicated region
        $region33: #{vl_bert_forward.1} parent=11 // pred_check
          %p716 = pneg %p332
        $region34: #{vl_bert_forward.1} parent=11 // pred_check_branch
          %718 = sbr.rel (%p716) target = $region36
        $region35: #{vl_bert_forward.1} parent=11 // pred_region
          _
        $region36: #{vl_bert_forward.1} parent=11 // pred_fallthru
          _
        // Predicated region
        $region37: #{vl_bert_forward.1} parent=11 // pred_check
          %p719 = pneg %p353
        $region38: #{vl_bert_forward.1} parent=11 // pred_check_branch
          %721 = sbr.rel (%p719) target = $region40
        $region39: #{vl_bert_forward.1} parent=11 // pred_region
          _
        $region40: #{vl_bert_forward.1} parent=11 // pred_fallthru
          _
        // Predicated region
        $region41: #{vl_bert_forward.1} parent=11 // pred_check
          %p722 = pneg %p374
        $region42: #{vl_bert_forward.1} parent=11 // pred_check_branch
          %724 = sbr.rel (%p722) target = $region44
        $region43: #{vl_bert_forward.1} parent=11 // pred_region
          _
        $region44: #{vl_bert_forward.1} parent=11 // pred_fallthru
          _
      $region12: #{vl_bert_forward.1} parent=5 // pred_fallthru
        _
      %p725 = scmp.lt.s32.totalorder %s38, 4
      // Predicated region
      $region45: #{vl_bert_forward.1} parent=5 // pred_check
        %p726 = pneg %p725
      $region46: #{vl_bert_forward.1} parent=5 // pred_check_branch
        %728 = sbr.rel (%p726) target = $region48
      $region47: #{vl_bert_forward.1} parent=5 // pred_region
        // Predicated region
        $region49: #{vl_bert_forward.1} parent=47 // pred_check
          %p729 = pneg %p70
        $region50: #{vl_bert_forward.1} parent=47 // pred_check_branch
          %731 = sbr.rel (%p729) target = $region52
        $region51: #{vl_bert_forward.1} parent=47 // pred_region
          %p732 = scmp.lt.s32.totalorder %s45, 1
          %s733 = scalar_select %p732, %s45, 1
          %s734 = smul.addr %s733, 2
          %s735 = smul.addr %s734, 8
          %s736 = scalar_lea.vmem %s0, %s735
        $region52: #{vl_bert_forward.1} parent=47 // pred_fallthru
          _
        // Predicated region
        $region53: #{vl_bert_forward.1} parent=47 // pred_check
          %p737 = pneg %p96
        $region54: #{vl_bert_forward.1} parent=47 // pred_check_branch
          %739 = sbr.rel (%p737) target = $region56
        $region55: #{vl_bert_forward.1} parent=47 // pred_region
          %p740 = scmp.lt.s32.totalorder %s45, 1
          %s741 = scalar_select %p740, %s45, 1
          %s742 = smul.addr %s741, 8
          %s743 = scalar_lea.vmem %s1, %s742
        $region56: #{vl_bert_forward.1} parent=47 // pred_fallthru
          _
        // Predicated region
        $region57: #{vl_bert_forward.1} parent=47 // pred_check
          %p744 = pneg %p122
        $region58: #{vl_bert_forward.1} parent=47 // pred_check_branch
          %746 = sbr.rel (%p744) target = $region60
        $region59: #{vl_bert_forward.1} parent=47 // pred_region
          %p747 = scmp.lt.s32.totalorder %s45, 1
          %s748 = scalar_select %p747, %s45, 1
          %s749 = smul.addr %s748, 2
          %s750 = smul.addr %s749, 8
          %s751 = scalar_lea.vmem %s2, %s750
        $region60: #{vl_bert_forward.1} parent=47 // pred_fallthru
          _
        // Predicated region
        $region61: #{vl_bert_forward.1} parent=47 // pred_check
          %p752 = pneg %p148
        $region62: #{vl_bert_forward.1} parent=47 // pred_check_branch
          %754 = sbr.rel (%p752) target = $region64
        $region63: #{vl_bert_forward.1} parent=47 // pred_region
          %p755 = scmp.lt.s32.totalorder %s45, 1
          %s756 = scalar_select %p755, %s45, 1
          %s757 = scalar_lea.vmem %s3, %s756
        $region64: #{vl_bert_forward.1} parent=47 // pred_fallthru
          _
        // Predicated region
        $region65: #{vl_bert_forward.1} parent=47 // pred_check
          %p758 = pneg %p174
        $region66: #{vl_bert_forward.1} parent=47 // pred_check_branch
          %760 = sbr.rel (%p758) target = $region68
        $region67: #{vl_bert_forward.1} parent=47 // pred_region
          %p761 = scmp.lt.s32.totalorder %s45, 1
          %s762 = scalar_select %p761, %s45, 1
          %s763 = smul.addr %s762, 8
          %s764 = scalar_lea.vmem %s4, %s763
        $region68: #{vl_bert_forward.1} parent=47 // pred_fallthru
          _
        // Predicated region
        $region69: #{vl_bert_forward.1} parent=47 // pred_check
          %p765 = pneg %p200
        $region70: #{vl_bert_forward.1} parent=47 // pred_check_branch
          %767 = sbr.rel (%p765) target = $region72
        $region71: #{vl_bert_forward.1} parent=47 // pred_region
          %p768 = scmp.lt.s32.totalorder %s45, 1
          %s769 = scalar_select %p768, %s45, 1
          %s770 = scalar_lea.vmem %s5, %s769
        $region72: #{vl_bert_forward.1} parent=47 // pred_fallthru
          _
        // Predicated region
        $region73: #{vl_bert_forward.1} parent=47 // pred_check
          %p771 = pneg %p394
        $region74: #{vl_bert_forward.1} parent=47 // pred_check_branch
          %773 = sbr.rel (%p771) target = $region76
        $region75: #{vl_bert_forward.1} parent=47 // pred_region
          %p774 = scmp.lt.s32.totalorder %s46, 1
          %s775 = scalar_select %p774, %s46, 1
          %s776 = smul.addr %s775, 8
          %s777 = smul.addr %s776, 4
          %s778 = scalar_lea.vmem %s14, %s777
        $region76: #{vl_bert_forward.1} parent=47 // pred_fallthru
          _
        // Predicated region
        $region77: #{vl_bert_forward.1} parent=47 // pred_check
          %p779 = pneg %p420
        $region78: #{vl_bert_forward.1} parent=47 // pred_check_branch
          %781 = sbr.rel (%p779) target = $region80
        $region79: #{vl_bert_forward.1} parent=47 // pred_region
          %p782 = scmp.lt.s32.totalorder %s46, 1
          %s783 = scalar_select %p782, %s46, 1
          %s784 = smul.addr %s783, 2
          %s785 = scalar_lea.vmem %s15, %s784
        $region80: #{vl_bert_forward.1} parent=47 // pred_fallthru
          _
        // Predicated region
        $region81: #{vl_bert_forward.1} parent=47 // pred_check
          %p786 = pneg %p446
        $region82: #{vl_bert_forward.1} parent=47 // pred_check_branch
          %788 = sbr.rel (%p786) target = $region84
        $region83: #{vl_bert_forward.1} parent=47 // pred_region
          %p789 = scmp.lt.s32.totalorder %s46, 1
          %s790 = scalar_select %p789, %s46, 1
          %s791 = smul.addr %s790, 8
          %s792 = smul.addr %s791, 4
          %s793 = scalar_lea.vmem %s16, %s792
        $region84: #{vl_bert_forward.1} parent=47 // pred_fallthru
          _
        // Predicated region
        $region85: #{vl_bert_forward.1} parent=47 // pred_check
          %p794 = pneg %p472
        $region86: #{vl_bert_forward.1} parent=47 // pred_check_branch
          %796 = sbr.rel (%p794) target = $region88
        $region87: #{vl_bert_forward.1} parent=47 // pred_region
          %p797 = scmp.lt.s32.totalorder %s46, 1
          %s798 = scalar_select %p797, %s46, 1
          %s799 = smul.addr %s798, 2
          %s800 = scalar_lea.vmem %s17, %s799
        $region88: #{vl_bert_forward.1} parent=47 // pred_fallthru
          _
        // Predicated region
        $region89: #{vl_bert_forward.1} parent=47 // pred_check
          %p801 = pneg %p498
        $region90: #{vl_bert_forward.1} parent=47 // pred_check_branch
          %803 = sbr.rel (%p801) target = $region92
        $region91: #{vl_bert_forward.1} parent=47 // pred_region
          %p804 = scmp.lt.s32.totalorder %s46, 1
          %s805 = scalar_select %p804, %s46, 1
          %s806 = smul.addr %s805, 8
          %s807 = smul.addr %s806, 4
          %s808 = scalar_lea.vmem %s18, %s807
        $region92: #{vl_bert_forward.1} parent=47 // pred_fallthru
          _
        // Predicated region
        $region93: #{vl_bert_forward.1} parent=47 // pred_check
          %p809 = pneg %p524
        $region94: #{vl_bert_forward.1} parent=47 // pred_check_branch
          %811 = sbr.rel (%p809) target = $region96
        $region95: #{vl_bert_forward.1} parent=47 // pred_region
          %p812 = scmp.lt.s32.totalorder %s46, 1
          %s813 = scalar_select %p812, %s46, 1
          %s814 = smul.addr %s813, 2
          %s815 = scalar_lea.vmem %s19, %s814
        $region96: #{vl_bert_forward.1} parent=47 // pred_fallthru
          _
        // Predicated region
        $region97: #{vl_bert_forward.1} parent=47 // pred_check
          %p816 = pneg %p550
        $region98: #{vl_bert_forward.1} parent=47 // pred_check_branch
          %818 = sbr.rel (%p816) target = $region100
        $region99: #{vl_bert_forward.1} parent=47 // pred_region
          %p819 = scmp.lt.s32.totalorder %s46, 1
          %s820 = scalar_select %p819, %s46, 1
          %s821 = smul.addr %s820, 16
          %s822 = smul.addr %s821, 4
          %s823 = scalar_lea.vmem %s20, %s822
        $region100: #{vl_bert_forward.1} parent=47 // pred_fallthru
          _
        // Predicated region
        $region101: #{vl_bert_forward.1} parent=47 // pred_check
          %p824 = pneg %p576
        $region102: #{vl_bert_forward.1} parent=47 // pred_check_branch
          %826 = sbr.rel (%p824) target = $region104
        $region103: #{vl_bert_forward.1} parent=47 // pred_region
          %p827 = scmp.lt.s32.totalorder %s46, 1
          %s828 = scalar_select %p827, %s46, 1
          %s829 = smul.addr %s828, 2
          %s830 = scalar_lea.vmem %s21, %s829
        $region104: #{vl_bert_forward.1} parent=47 // pred_fallthru
          _
        // Predicated region
        $region105: #{vl_bert_forward.1} parent=47 // pred_check
          %p831 = pneg %p602
        $region106: #{vl_bert_forward.1} parent=47 // pred_check_branch
          %833 = sbr.rel (%p831) target = $region108
        $region107: #{vl_bert_forward.1} parent=47 // pred_region
          %p834 = scmp.lt.s32.totalorder %s46, 1
          %s835 = scalar_select %p834, %s46, 1
          %s836 = smul.addr %s835, 2
          %s837 = scalar_lea.vmem %s22, %s836
        $region108: #{vl_bert_forward.1} parent=47 // pred_fallthru
          _
        // Predicated region
        $region109: #{vl_bert_forward.1} parent=47 // pred_check
          %p838 = pneg %p628
        $region110: #{vl_bert_forward.1} parent=47 // pred_check_branch
          %840 = sbr.rel (%p838) target = $region112
        $region111: #{vl_bert_forward.1} parent=47 // pred_region
          %p841 = scmp.lt.s32.totalorder %s46, 1
          %s842 = scalar_select %p841, %s46, 1
          %s843 = smul.addr %s842, 2
          %s844 = scalar_lea.vmem %s23, %s843
        $region112: #{vl_bert_forward.1} parent=47 // pred_fallthru
          _
      $region48: #{vl_bert_forward.1} parent=5 // pred_fallthru
        _
      %p845 = scmp.le.s32.totalorder 1, %s38
      %p846 = scmp.lt.s32.totalorder %s38, 5
      %p847 = pnand %p845, %p846
      %p848 = pneg %p847
      // Predicated region
      $region113: #{vl_bert_forward.1} parent=5 // pred_check
        _
      $region114: #{vl_bert_forward.1} parent=5 // pred_check_branch
        %850 = sbr.rel (%p847) target = $region116
      $region115: #{vl_bert_forward.1} parent=5 // pred_region
        %s851 = ssub.s32 %s38, 1
        %p852 = scmp.lt.s32.totalorder %s47, 1
        %s853 = scalar_select %p852, %s47, 1
        %s854 = smul.addr %s853, 2
        %s855 = smul.addr %s854, 8
        %s856 = scalar_lea.vmem %s0, %s855
        %p857 = pneg %p76
        %p858 = pneg %p73
        %p859 = scmp.lt.s32.totalorder %s47, 1
        %s860 = scalar_select %p859, %s47, 1
        %s861 = smul.addr %s860, 8
        %s862 = scalar_lea.vmem %s1, %s861
        %p863 = pneg %p102
        %p864 = pneg %p99
        %p865 = scmp.lt.s32.totalorder %s47, 1
        %s866 = scalar_select %p865, %s47, 1
        %s867 = smul.addr %s866, 2
        %s868 = smul.addr %s867, 8
        %s869 = scalar_lea.vmem %s2, %s868
        %p870 = pneg %p128
        %p871 = pneg %p125
        %p872 = scmp.lt.s32.totalorder %s47, 1
        %s873 = scalar_select %p872, %s47, 1
        %s874 = scalar_lea.vmem %s3, %s873
        %p875 = pneg %p154
        %p876 = pneg %p151
        %p877 = scmp.lt.s32.totalorder %s47, 1
        %s878 = scalar_select %p877, %s47, 1
        %s879 = smul.addr %s878, 8
        %s880 = scalar_lea.vmem %s4, %s879
        %p881 = pneg %p180
        %p882 = pneg %p177
        %p883 = scmp.lt.s32.totalorder %s47, 1
        %s884 = scalar_select %p883, %s47, 1
        %s885 = scalar_lea.vmem %s5, %s884
        %p886 = pneg %p206
        %p887 = pneg %p203
        %p888 = pneg %p227
        %p889 = pneg %p224
        %p890 = pneg %p248
        %p891 = pneg %p245
        %p892 = pneg %p269
        %p893 = pneg %p266
        %p894 = pneg %p290
        %p895 = pneg %p287
        %p896 = pneg %p311
        %p897 = pneg %p308
        %p898 = pneg %p332
        %p899 = pneg %p329
        %p900 = pneg %p353
        %p901 = pneg %p350
        %p902 = pneg %p374
        %p903 = pneg %p371
        %p904 = scmp.lt.s32.totalorder %s48, 1
        %s905 = scalar_select %p904, %s48, 1
        %s906 = smul.addr %s905, 8
        %s907 = smul.addr %s906, 4
        %s908 = scalar_lea.vmem %s14, %s907
        %p909 = pneg %p400
        %p910 = pneg %p397
        %p911 = scmp.lt.s32.totalorder %s48, 1
        %s912 = scalar_select %p911, %s48, 1
        %s913 = smul.addr %s912, 2
        %s914 = scalar_lea.vmem %s15, %s913
        %p915 = pneg %p426
        %p916 = pneg %p423
        %p917 = scmp.lt.s32.totalorder %s48, 1
        %s918 = scalar_select %p917, %s48, 1
        %s919 = smul.addr %s918, 8
        %s920 = smul.addr %s919, 4
        %s921 = scalar_lea.vmem %s16, %s920
        %p922 = pneg %p452
        %p923 = pneg %p449
        %p924 = scmp.lt.s32.totalorder %s48, 1
        %s925 = scalar_select %p924, %s48, 1
        %s926 = smul.addr %s925, 2
        %s927 = scalar_lea.vmem %s17, %s926
        %p928 = pneg %p478
        %p929 = pneg %p475
        %p930 = scmp.lt.s32.totalorder %s48, 1
        %s931 = scalar_select %p930, %s48, 1
        %s932 = smul.addr %s931, 8
        %s933 = smul.addr %s932, 4
        %s934 = scalar_lea.vmem %s18, %s933
        %p935 = pneg %p504
        %p936 = pneg %p501
        %p937 = scmp.lt.s32.totalorder %s48, 1
        %s938 = scalar_select %p937, %s48, 1
        %s939 = smul.addr %s938, 2
        %s940 = scalar_lea.vmem %s19, %s939
        %p941 = pneg %p530
        %p942 = pneg %p527
        %p943 = scmp.lt.s32.totalorder %s48, 1
        %s944 = scalar_select %p943, %s48, 1
        %s945 = smul.addr %s944, 16
        %s946 = smul.addr %s945, 4
        %s947 = scalar_lea.vmem %s20, %s946
        %p948 = pneg %p556
        %p949 = pneg %p553
        %p950 = scmp.lt.s32.totalorder %s48, 1
        %s951 = scalar_select %p950, %s48, 1
        %s952 = smul.addr %s951, 2
        %s953 = scalar_lea.vmem %s21, %s952
        %p954 = pneg %p582
        %p955 = pneg %p579
        %p956 = scmp.lt.s32.totalorder %s48, 1
        %s957 = scalar_select %p956, %s48, 1
        %s958 = smul.addr %s957, 2
        %s959 = scalar_lea.vmem %s22, %s958
        %p960 = pneg %p608
        %p961 = pneg %p605
        %p962 = scmp.lt.s32.totalorder %s48, 1
        %s963 = scalar_select %p962, %s48, 1
        %s964 = smul.addr %s963, 2
        %s965 = scalar_lea.vmem %s23, %s964
        %p966 = pneg %p634
        %p967 = pneg %p631
        %p968 = pneg %p660
        %p969 = pneg %p657
        %s970 = sand.u32 %s647, 1
        %s971 = scalar_lea.sflag [#allocation13], %s970
        %s972 = sand.u32 %s647, 1
        %s973 = smul.addr %s972, 16
        %s974 = scalar_lea.vmem [#allocation12], %s973
        %p975 = pneg %p686
        %p976 = pneg %p683
        %s977 = sand.u32 %s673, 1
        %s978 = scalar_lea.sflag [#allocation15], %s977
        %s979 = sand.u32 %s673, 1
        %s980 = smul.addr %s979, 8
        %s981 = scalar_lea.vmem [#allocation14], %s980
        %p982 = scmp.lt.s32.totalorder %s47, 1
        %s983 = scalar_select %p982, %s47, 1
        %s984 = smul.addr %s983, 2
        %s985 = smul.addr %s984, 8
        %s986 = scalar_lea.vmem %s0, %s985
        %p987 = scmp.lt.s32.totalorder %s47, 1
        %s988 = scalar_select %p987, %s47, 1
        %s989 = smul.addr %s988, 8
        %s990 = scalar_lea.vmem %s1, %s989
        %p991 = scmp.lt.s32.totalorder %s47, 1
        %s992 = scalar_select %p991, %s47, 1
        %s993 = smul.addr %s992, 2
        %s994 = smul.addr %s993, 8
        %s995 = scalar_lea.vmem %s2, %s994
        %p996 = scmp.lt.s32.totalorder %s47, 1
        %s997 = scalar_select %p996, %s47, 1
        %s998 = scalar_lea.vmem %s3, %s997
        %p999 = scmp.lt.s32.totalorder %s47, 1
        %s1000 = scalar_select %p999, %s47, 1
        %s1001 = smul.addr %s1000, 8
        %s1002 = scalar_lea.vmem %s4, %s1001
        %p1003 = scmp.lt.s32.totalorder %s47, 1
        %s1004 = scalar_select %p1003, %s47, 1
        %s1005 = scalar_lea.vmem %s5, %s1004
        %p1006 = scmp.lt.s32.totalorder %s48, 1
        %s1007 = scalar_select %p1006, %s48, 1
        %s1008 = smul.addr %s1007, 8
        %s1009 = smul.addr %s1008, 4
        %s1010 = scalar_lea.vmem %s14, %s1009
        %p1011 = scmp.lt.s32.totalorder %s48, 1
        %s1012 = scalar_select %p1011, %s48, 1
        %s1013 = smul.addr %s1012, 2
        %s1014 = scalar_lea.vmem %s15, %s1013
        %p1015 = scmp.lt.s32.totalorder %s48, 1
        %s1016 = scalar_select %p1015, %s48, 1
        %s1017 = smul.addr %s1016, 8
        %s1018 = smul.addr %s1017, 4
        %s1019 = scalar_lea.vmem %s16, %s1018
        %p1020 = scmp.lt.s32.totalorder %s48, 1
        %s1021 = scalar_select %p1020, %s48, 1
        %s1022 = smul.addr %s1021, 2
        %s1023 = scalar_lea.vmem %s17, %s1022
        %p1024 = scmp.lt.s32.totalorder %s48, 1
        %s1025 = scalar_select %p1024, %s48, 1
        %s1026 = smul.addr %s1025, 8
        %s1027 = smul.addr %s1026, 4
        %s1028 = scalar_lea.vmem %s18, %s1027
        %p1029 = scmp.lt.s32.totalorder %s48, 1
        %s1030 = scalar_select %p1029, %s48, 1
        %s1031 = smul.addr %s1030, 2
        %s1032 = scalar_lea.vmem %s19, %s1031
        %p1033 = scmp.lt.s32.totalorder %s48, 1
        %s1034 = scalar_select %p1033, %s48, 1
        %s1035 = smul.addr %s1034, 16
        %s1036 = smul.addr %s1035, 4
        %s1037 = scalar_lea.vmem %s20, %s1036
        %p1038 = scmp.lt.s32.totalorder %s48, 1
        %s1039 = scalar_select %p1038, %s48, 1
        %s1040 = smul.addr %s1039, 2
        %s1041 = scalar_lea.vmem %s21, %s1040
        %p1042 = scmp.lt.s32.totalorder %s48, 1
        %s1043 = scalar_select %p1042, %s48, 1
        %s1044 = smul.addr %s1043, 2
        %s1045 = scalar_lea.vmem %s22, %s1044
        %p1046 = scmp.lt.s32.totalorder %s48, 1
        %s1047 = scalar_select %p1046, %s48, 1
        %s1048 = smul.addr %s1047, 2
        %s1049 = scalar_lea.vmem %s23, %s1048
        %p1051 = scmp.eq.s32.totalorder %s48, 0
        // Predicated region
        $region117: #{vl_bert_forward.1} parent=115 // pred_check
          %p1052 = pneg %p1051
        $region118: #{vl_bert_forward.1} parent=115 // pred_check_branch
          %1054 = sbr.rel (%p1052) target = $region120
        $region119: #{vl_bert_forward.1} parent=115 // pred_region
          %v1055 = vld [vmem:[%s986] sm:$0xff]
          %v1056 = vld [vmem:[%s986 + $0x8] sm:$0xff]
          %v1057 = vpack.c.bf16 %v1056, %v1055
          %v1058 = vld [vmem:[%s6] sm:$0xf]
          %v1059 = vld [vmem:[%s6 + $0x4] sm:$0xf]
          %v1060 = vld [vmem:[%s6 + $0x8] sm:$0xf]
          %v1061 = vld [vmem:[%s6 + $0xc] sm:$0xf]
          %v1062 = vld [vmem:[%s6 + $0x10] sm:$0xf]
          %v1063 = vld [vmem:[%s6 + $0x14] sm:$0xf]
          %v1064 = vld [vmem:[%s7] sm:$0xff]
          %v1065 = vld [vmem:[%s7 + $0x8] sm:$0xff]
          %v1072 = vunpack.c.l.b16 %v1058
          %v1073 = vunpack.c.l.b16 %v1059
          %v1074 = vunpack.c.l.b16 %v1060
          %v1075 = vunpack.c.l.b16 %v1061
          %v1076 = vunpack.c.l.b16 %v1062
          %v1077 = vunpack.c.l.b16 %v1063
          %v1078 = vpack.c.b16 %v1073, %v1072
          %v1079 = vpack.c.b16 %v1075, %v1074
          %v1080 = vpack.c.b16 %v1077, %v1076
          %vm1084 = vcmask 392192
          %v1086 = vsel %vm1084, %v1057, 0
          %1088 = vmatpush.bf16.msra.mxu0 0
          %1089 = vmatpush.bf16.msra.mxu0 0
          %1090 = vmatpush.bf16.msra.mxu0 0
          %1091 = vmatpush.bf16.msra.mxu0 0
          %1092 = vmatpush.bf16.msra.mxu0 0
          %1093 = vmatpush.bf16.msra.mxu0 %v1080
          %1094 = vmatpush.bf16.msra.mxu0 %v1079
          %1095 = vmatpush.bf16.msra.mxu0 %v1078
          %1096 = vmatmul.bf16.gmra.mxu0 %v1086
          %v1097 = vpop.f32.mrf.mxu0
          %v1098 = vadd.f32 %v1064, %v1097
          %v1099 = vpop.f32.mrf.mxu0
          %v1100 = vadd.f32 %v1065, %v1099
          %1101 = vdwg.mxu0
          %v1102 = vld [vmem:[%s8] sm:$0x1]
          %v1103 = vld [vmem:[%s9] sm:$0x1]
          %vm1104 = vcmask 261120
          %v1105 = vsel %vm1104, %v1098, 0.0
          %1106 = vadd.xlane.f32.xlu0 %v1105
          %v1107 = vpop.xlane.xlu0 %1106
          %v1108 = vsel %vm1104, %v1100, 0.0
          %1109 = vadd.xlane.f32.xlu0 %v1108
          %v1110 = vpop.xlane.xlu0 %1109
          %v1111 = vrcp.pop 32.0
          %v1112 = vmul.f32 32.0, %v1111
          %v1113 = vsub.f32 1.0, %v1112
          %v1114 = vmul.f32 %v1111, %v1113
          %v1115 = vadd.f32 %v1111, %v1114
          %vm1116 = vweird.f32 %v1111
          %v1117 = vsel %vm1116, %v1111, %v1115
          %v1118 = vmul.f32 %v1107, %v1117
          %v1119 = vmul.f32 %v1110, %v1117
          %v1120 = vsub.f32 %v1098, %v1118
          %v1121 = vsub.f32 %v1100, %v1119
          %v1122 = vmul.f32 %v1120, %v1120
          %v1123 = vmul.f32 %v1121, %v1121
          %v1124 = vsel %vm1104, %v1122, 0.0
          %1125 = vadd.xlane.f32.xlu0 %v1124
          %v1126 = vpop.xlane.xlu0 %1125
          %v1127 = vsel %vm1104, %v1123, 0.0
          %1128 = vadd.xlane.f32.xlu0 %v1127
          %v1129 = vpop.xlane.xlu0 %1128
          %v1130 = vmul.f32 %v1126, %v1117
          %v1131 = vmul.f32 %v1129, %v1117
          %v1132 = vadd.f32 %v1130, 1e-12
          %v1133 = vadd.f32 %v1131, 1e-12
          %v1134 = vrsqrt.pop %v1132
          %v1135 = vmul.f32 %v1134, %v1132
          %v1136 = vmul.f32 %v1135, %v1134
          %v1137 = vmul.f32 0.5, %v1136
          %v1138 = vsub.f32 1.5, %v1137
          %v1139 = vmul.f32 %v1134, %v1138
          %vm1140 = vweird.f32 %v1132
          %vm1141 = vweird.f32 %v1134
          %vm1142 = vmor %vm1140, %vm1141
          %v1143 = vsel %vm1142, %v1134, %v1139
          %v1144 = vrsqrt.pop %v1133
          %v1145 = vmul.f32 %v1144, %v1133
          %v1146 = vmul.f32 %v1145, %v1144
          %v1147 = vmul.f32 0.5, %v1146
          %v1148 = vsub.f32 1.5, %v1147
          %v1149 = vmul.f32 %v1144, %v1148
          %vm1150 = vweird.f32 %v1133
          %vm1151 = vweird.f32 %v1144
          %vm1152 = vmor %vm1150, %vm1151
          %v1153 = vsel %vm1152, %v1144, %v1149
          %v1154 = vmul.f32 %v1120, %v1143
          %v1155 = vmul.f32 %v1121, %v1153
          %v1157 = vperm.slane %v1102, 0
          %v1159 = vmul.f32 %v1154, %v1157
          %v1160 = vmul.f32 %v1155, %v1157
          %v1162 = vperm.slane %v1103, 0
          %v1164 = vadd.f32 %v1159, %v1162
          %v1165 = vadd.f32 %v1160, %v1162
          %1166 = vst.msk [vmem:[#allocation2] sm:$0xff] %vm1104, %v1164
          %1167 = vst.msk [vmem:[#allocation2 + $0x8] sm:$0xff] %vm1104, %v1165
          %v1168 = vld [vmem:[%s990] sm:$0xff]
          %v1169 = vpack.c.bf16 %v1168, %v1168
          %v1170 = vld [vmem:[%s10] sm:$0xf]
          %v1171 = vld [vmem:[%s10 + $0x4] sm:$0xf]
          %v1172 = vld [vmem:[%s10 + $0x8] sm:$0xf]
          %v1173 = vld [vmem:[%s10 + $0xc] sm:$0xf]
          %v1174 = vld [vmem:[%s10 + $0x10] sm:$0xf]
          %v1175 = vld [vmem:[%s10 + $0x14] sm:$0xf]
          %v1176 = vld [vmem:[%s11] sm:$0xff]
          %v1183 = vunpack.c.l.b16 %v1170
          %v1184 = vunpack.c.l.b16 %v1171
          %v1185 = vunpack.c.l.b16 %v1172
          %v1186 = vunpack.c.l.b16 %v1173
          %v1187 = vunpack.c.l.b16 %v1174
          %v1188 = vunpack.c.l.b16 %v1175
          %v1189 = vpack.c.b16 %v1184, %v1183
          %v1190 = vpack.c.b16 %v1186, %v1185
          %v1191 = vpack.c.b16 %v1188, %v1187
          %v1196 = vsel %vm1084, %v1169, 0
          %1198 = vmatpush.bf16.msra.mxu0 0
          %1199 = vmatpush.bf16.msra.mxu0 0
          %1200 = vmatpush.bf16.msra.mxu0 0
          %1201 = vmatpush.bf16.msra.mxu0 0
          %1202 = vmatpush.bf16.msra.mxu0 0
          %1203 = vmatpush.bf16.msra.mxu0 %v1191
          %1204 = vmatpush.bf16.msra.mxu0 %v1190
          %1205 = vmatpush.bf16.msra.mxu0 %v1189
          %1206 = vmatmul.bf16.gmra.mxu0 %v1196
          %v1207 = vpop.f32.mrf.mxu0
          %v1208 = vadd.f32 %v1176, %v1207
          %v1209 = vpop.f32.mrf.mxu0
          %1210 = vdwg.mxu0
          %v1211 = vld [vmem:[%s12] sm:$0x1]
          %v1212 = vld [vmem:[%s13] sm:$0x1]
          %v1213 = vsel %vm1104, %v1208, 0.0
          %1214 = vadd.xlane.f32.xlu0 %v1213
          %v1215 = vpop.xlane.xlu0 %1214
          %v1216 = vmul.f32 %v1215, %v1117
          %v1217 = vsub.f32 %v1208, %v1216
          %v1218 = vmul.f32 %v1217, %v1217
          %v1219 = vsel %vm1104, %v1218, 0.0
          %1220 = vadd.xlane.f32.xlu0 %v1219
          %v1221 = vpop.xlane.xlu0 %1220
          %v1222 = vmul.f32 %v1221, %v1117
          %v1223 = vadd.f32 %v1222, 1e-12
          %v1224 = vrsqrt.pop %v1223
          %v1225 = vmul.f32 %v1224, %v1223
          %v1226 = vmul.f32 %v1225, %v1224
          %v1227 = vmul.f32 0.5, %v1226
          %v1228 = vsub.f32 1.5, %v1227
          %v1229 = vmul.f32 %v1224, %v1228
          %vm1230 = vweird.f32 %v1223
          %vm1231 = vweird.f32 %v1224
          %vm1232 = vmor %vm1230, %vm1231
          %v1233 = vsel %vm1232, %v1224, %v1229
          %v1234 = vmul.f32 %v1217, %v1233
          %v1236 = vperm.slane %v1211, 0
          %v1238 = vmul.f32 %v1234, %v1236
          %v1240 = vperm.slane %v1212, 0
          %v1242 = vadd.f32 %v1238, %v1240
          %1243 = vst.msk [vmem:[#allocation3] sm:$0xff] %vm1104, %v1242
          %v1244 = vld [vmem:[%s995] sm:$0xff]
          %v1245 = vld [vmem:[%s995 + $0x8] sm:$0xff]
          %v1246 = vld [vmem:[%s1002] sm:$0xff]
          %v1247 = vld [vmem:[%s998] sm:$0x1]
          %v1248 = vld [vmem:[%s1005] sm:$0x1]
          %1250 = vset.pattern.permute.xlu0 0
          %1251 = vperm.xlu0 %1250, %v1244
          %v1252 = vpop.permute.xlu0 %1251
          %1255 = vset.pattern.permute.xlu0 0
          %1256 = vperm.xlu0 %1255, %v1245
          %v1257 = vpop.permute.xlu0 %1256
          %v1260 = vperm.slane %v1247, 0
          %v1262 = vmul.f32 %v1252, %v1260
          %v1263 = vmul.f32 %v1257, %v1260
          %vm1264 = vcmask 130048
          %1265 = vst.msk [vmem:[#allocation8] sm:$0xff] %vm1264, %v1262
          %1266 = vst.msk [vmem:[#allocation8 + $0x8] sm:$0xff] %vm1264, %v1263
          %v1268 = vperm.slane %v1248, 0
          %v1270 = vmul.f32 %v1252, %v1268
          %v1271 = vmul.f32 %v1257, %v1268
          %vm1272 = vcmask 64512
          %1273 = vst.msk [vmem:[#allocation9] sm:$0xff] %vm1272, %v1270
          %1274 = vst.msk [vmem:[#allocation9 + $0x8] sm:$0xff] %vm1272, %v1271
          %1276 = vset.pattern.permute.xlu0 0
          %1277 = vperm.xlu0 %1276, %v1246
          %v1278 = vpop.permute.xlu0 %1277
          %v1280 = vmul.f32 %v1278, %v1260
          %1281 = vst.msk [vmem:[#allocation10] sm:$0xff] %vm1264, %v1280
          %v1282 = vmul.f32 %v1278, %v1268
          %1283 = vst.msk [vmem:[#allocation11] sm:$0xff] %vm1272, %v1282
        $region120: #{vl_bert_forward.1} parent=115 // pred_fallthru
          _
        %v1284 = vld [vmem:[#allocation2] sm:$0xff]
        %v1285 = vld [vmem:[#allocation2 + $0x8] sm:$0xff]
        %v1286 = vld [vmem:[#allocation3] sm:$0xff]
        %v1287 = vpack.c.bf16 %v1285, %v1284
        %v1288 = vld [vmem:[%s1010] sm:$0xff]
        %v1289 = vld [vmem:[%s1010 + $0x8] sm:$0xff]
        %v1290 = vld [vmem:[%s1010 + $0x10] sm:$0xff]
        %v1291 = vld [vmem:[%s1010 + $0x18] sm:$0xff]
        %v1292 = vld [vmem:[%s1014] sm:$0x3]
        %v1294 = vperm.slane %v1292, 0
        %v1295 = vperm.slane %v1292, 1
        %v1302 = vunpack.c.l.b16 %v1288
        %v1303 = vunpack.c.h.b16 %v1288
        %v1304 = vunpack.c.l.b16 %v1289
        %v1305 = vunpack.c.h.b16 %v1289
        %v1306 = vunpack.c.l.b16 %v1290
        %v1307 = vunpack.c.h.b16 %v1290
        %v1308 = vunpack.c.l.b16 %v1291
        %v1309 = vunpack.c.h.b16 %v1291
        %v1310 = vpack.c.b16 %v1304, %v1302
        %v1311 = vpack.c.b16 %v1305, %v1303
        %v1312 = vpack.c.b16 %v1308, %v1306
        %v1313 = vpack.c.b16 %v1309, %v1307
        %vm1318 = vcmask 261120
        %v1320 = vsel %vm1318, %v1287, 0
        %1322 = vmatpush.bf16.msra.mxu0 0
        %1323 = vmatpush.bf16.msra.mxu0 0
        %1324 = vmatpush.bf16.msra.mxu0 0
        %1325 = vmatpush.bf16.msra.mxu0 0
        %1326 = vmatpush.bf16.msra.mxu0 0
        %1327 = vmatpush.bf16.msra.mxu0 0
        %1328 = vmatpush.bf16.msra.mxu0 %v1312
        %1329 = vmatpush.bf16.msra.mxu0 %v1310
        %1330 = vmatmul.bf16.gmra.mxu0 %v1320
        %v1331 = vpop.f32.mrf.mxu0
        %v1332 = vadd.f32 %v1294, %v1331
        %v1333 = vpop.f32.mrf.mxu0
        %v1334 = vadd.f32 %v1294, %v1333
        %1335 = vdwg.mxu0
        %1336 = vmatpush.bf16.msra.mxu0 0
        %1337 = vmatpush.bf16.msra.mxu0 0
        %1338 = vmatpush.bf16.msra.mxu0 0
        %1339 = vmatpush.bf16.msra.mxu0 0
        %1340 = vmatpush.bf16.msra.mxu0 0
        %1341 = vmatpush.bf16.msra.mxu0 0
        %1342 = vmatpush.bf16.msra.mxu0 %v1313
        %1343 = vmatpush.bf16.msra.mxu0 %v1311
        %1344 = vmatmul.bf16.gmra.mxu0 %v1320
        %v1345 = vpop.f32.mrf.mxu0
        %v1346 = vadd.f32 %v1295, %v1345
        %v1347 = vpop.f32.mrf.mxu0
        %v1348 = vadd.f32 %v1295, %v1347
        %1349 = vdwg.mxu0
        %1350 = vst [vmem:[#allocation4] sm:$0xff] %v1332
        %vm1351 = vcmask 523264
        %1352 = vst.msk [vmem:[#allocation4 + $0x8] sm:$0xff] %vm1351, %v1346
        %1353 = vst [vmem:[#allocation4 + $0x10] sm:$0xff] %v1334
        %1354 = vst.msk [vmem:[#allocation4 + $0x18] sm:$0xff] %vm1351, %v1348
        %v1355 = vpack.c.bf16 %v1286, %v1286
        %v1356 = vld [vmem:[%s1019] sm:$0xff]
        %v1357 = vld [vmem:[%s1019 + $0x8] sm:$0xff]
        %v1358 = vld [vmem:[%s1019 + $0x10] sm:$0xff]
        %v1359 = vld [vmem:[%s1019 + $0x18] sm:$0xff]
        %v1360 = vld [vmem:[%s1023] sm:$0x3]
        %v1362 = vperm.slane %v1360, 0
        %v1363 = vperm.slane %v1360, 1
        %v1370 = vunpack.c.l.b16 %v1356
        %v1371 = vunpack.c.h.b16 %v1356
        %v1372 = vunpack.c.l.b16 %v1357
        %v1373 = vunpack.c.h.b16 %v1357
        %v1374 = vunpack.c.l.b16 %v1358
        %v1375 = vunpack.c.h.b16 %v1358
        %v1376 = vunpack.c.l.b16 %v1359
        %v1377 = vunpack.c.h.b16 %v1359
        %v1378 = vpack.c.b16 %v1372, %v1370
        %v1379 = vpack.c.b16 %v1373, %v1371
        %v1380 = vpack.c.b16 %v1376, %v1374
        %v1381 = vpack.c.b16 %v1377, %v1375
        %v1387 = vsel %vm1318, %v1355, 0
        %1389 = vmatpush.bf16.msra.mxu0 0
        %1390 = vmatpush.bf16.msra.mxu0 0
        %1391 = vmatpush.bf16.msra.mxu0 0
        %1392 = vmatpush.bf16.msra.mxu0 0
        %1393 = vmatpush.bf16.msra.mxu0 0
        %1394 = vmatpush.bf16.msra.mxu0 0
        %1395 = vmatpush.bf16.msra.mxu0 %v1380
        %1396 = vmatpush.bf16.msra.mxu0 %v1378
        %1397 = vmatmul.bf16.gmra.mxu0 %v1387
        %v1398 = vpop.f32.mrf.mxu0
        %v1399 = vadd.f32 %v1362, %v1398
        %v1400 = vpop.f32.mrf.mxu0
        %1401 = vdwg.mxu0
        %1402 = vmatpush.bf16.msra.mxu0 0
        %1403 = vmatpush.bf16.msra.mxu0 0
        %1404 = vmatpush.bf16.msra.mxu0 0
        %1405 = vmatpush.bf16.msra.mxu0 0
        %1406 = vmatpush.bf16.msra.mxu0 0
        %1407 = vmatpush.bf16.msra.mxu0 0
        %1408 = vmatpush.bf16.msra.mxu0 %v1381
        %1409 = vmatpush.bf16.msra.mxu0 %v1379
        %1410 = vmatmul.bf16.gmra.mxu0 %v1387
        %v1411 = vpop.f32.mrf.mxu0
        %v1412 = vadd.f32 %v1363, %v1411
        %v1413 = vpop.f32.mrf.mxu0
        %1414 = vdwg.mxu0
        %1415 = vst [vmem:[#allocation5] sm:$0xff] %v1399
        %1416 = vst.msk [vmem:[#allocation5 + $0x8] sm:$0xff] %vm1351, %v1412
        %v1417 = vld [vmem:[#allocation8] sm:$0xff]
        %v1418 = vld [vmem:[#allocation8 + $0x8] sm:$0xff]
        %vm1419 = vcmp.gt.f32.partialorder %v1417, 0.5
        %vm1420 = vcmp.gt.f32.partialorder %v1418, 0.5
        %v1421 = vld [vmem:[#allocation9] sm:$0xff]
        %v1422 = vld [vmem:[#allocation9 + $0x8] sm:$0xff]
        %vm1423 = vcmp.gt.f32.partialorder %v1421, 0.5
        %vm1424 = vcmp.gt.f32.partialorder %v1422, 0.5
        %v1425 = vld [vmem:[#allocation4] sm:$0xff]
        %v1426 = vld [vmem:[#allocation4 + $0x10] sm:$0xff]
        %v1427 = vld [vmem:[#allocation5] sm:$0xff]
        %1430 = vrot.lane.b32.xlu0 %v1425, 96
        %v1431 = vpop.permute.xlu0 %1430
        %1432 = vrot.lane.b32.xlu0 %v1426, 96
        %v1433 = vpop.permute.xlu0 %1432
        %vm1434 = vcmask 64512
        %v1435 = vsel %vm1434, %v1425, 0
        %v1437 = vsel %vm1434, %v1426, 0
        %v1439 = vsel %vm1434, %v1431, 0
        %v1441 = vsel %vm1434, %v1433, 0
        %1443 = vmatpush.xpose.msra.mxu0 0.0
        %1444 = vmatpush.xpose.msra.mxu0 0.0
        %1445 = vmatpush.xpose.msra.mxu0 0.0
        %1446 = vmatpush.xpose.msra.mxu0 0.0
        %1447 = vmatpush.xpose.msra.mxu0 0.0
        %1448 = vmatpush.xpose.msra.mxu0 0.0
        %1449 = vmatpush.xpose.msra.mxu0 0.0
        %1450 = vmatpush.xpose.msra.mxu0 0.0
        %1451 = vmatpush.xpose.msra.mxu0 0.0
        %1452 = vmatpush.xpose.msra.mxu0 0.0
        %1453 = vmatpush.xpose.msra.mxu0 0.0
        %1454 = vmatpush.xpose.msra.mxu0 0.0
        %1455 = vmatpush.xpose.msra.mxu0 0.0
        %1456 = vmatpush.xpose.msra.mxu0 0.0
        %1457 = vmatpush.xpose.msra.mxu0 %v1441
        %1458 = vmatpush.xpose.msra.mxu0 %v1439
        %1459 = vmatmul.f32.gmra.mxu0 %v1435
        %v1460 = vpop.f32.mrf.mxu0
        %v1461 = vadd.f32 0.0, %v1460
        %1462 = vmatmul.f32.gmra.mxu0 %v1437
        %v1463 = vpop.f32.mrf.mxu0
        %v1464 = vadd.f32 0.0, %v1463
        %1465 = vdwg.mxu0
        %1466 = vrot.lane.b32.xlu0 %v1425, 32
        %v1467 = vpop.permute.xlu0 %1466
        %1468 = vrot.lane.b32.xlu0 %v1426, 32
        %v1469 = vpop.permute.xlu0 %1468
        %v1470 = vsel %vm1434, %v1467, 0
        %v1472 = vsel %vm1434, %v1469, 0
        %v1475 = vsel %vm1434, %v1427, 0
        %1477 = vmatpush.xpose.msra.mxu0 0.0
        %1478 = vmatpush.xpose.msra.mxu0 0.0
        %1479 = vmatpush.xpose.msra.mxu0 0.0
        %1480 = vmatpush.xpose.msra.mxu0 0.0
        %1481 = vmatpush.xpose.msra.mxu0 0.0
        %1482 = vmatpush.xpose.msra.mxu0 0.0
        %1483 = vmatpush.xpose.msra.mxu0 0.0
        %1484 = vmatpush.xpose.msra.mxu0 0.0
        %1485 = vmatpush.xpose.msra.mxu0 0.0
        %1486 = vmatpush.xpose.msra.mxu0 0.0
        %1487 = vmatpush.xpose.msra.mxu0 0.0
        %1488 = vmatpush.xpose.msra.mxu0 0.0
        %1489 = vmatpush.xpose.msra.mxu0 0.0
        %1490 = vmatpush.xpose.msra.mxu0 0.0
        %1491 = vmatpush.xpose.msra.mxu0 0.0
        %1492 = vmatpush.xpose.msra.mxu0 %v1475
        %1493 = vmatmul.f32.gmra.mxu0 %v1470
        %v1494 = vpop.f32.mrf.mxu0
        %v1495 = vadd.f32 0.0, %v1494
        %1496 = vmatmul.f32.gmra.mxu0 %v1472
        %v1497 = vpop.f32.mrf.mxu0
        %v1498 = vadd.f32 0.0, %v1497
        %1499 = vdwg.mxu0
        %v1500 = vsel %vm1419, %v1461, -10000.0
        %v1501 = vsel %vm1420, %v1464, -10000.0
        %v1502 = vsel %vm1423, %v1495, -10000.0
        %v1503 = vsel %vm1424, %v1498, -10000.0
        %vm1504 = vcmask 130048
        %v1505 = vsel %vm1504, %v1500, -inf
        %1506 = vmax.xlane.f32.xlu0 %v1505
        %v1507 = vpop.xlane.xlu0 %1506
        %v1508 = vsel %vm1504, %v1501, -inf
        %1509 = vmax.xlane.f32.xlu0 %v1508
        %v1510 = vpop.xlane.xlu0 %1509
        %v1511 = vsel %vm1434, %v1502, -inf
        %1512 = vmax.xlane.f32.xlu0 %v1511
        %v1513 = vpop.xlane.xlu0 %1512
        %v1514 = vsel %vm1434, %v1503, -inf
        %1515 = vmax.xlane.f32.xlu0 %v1514
        %v1516 = vpop.xlane.xlu0 %1515
        %v1517 = vmax.f32 %v1507, %v1513
        %v1518 = vmax.f32 %v1510, %v1516
        %v1519 = vsub.f32 %v1500, %v1517
        %v1520 = vsub.f32 %v1501, %v1518
        %v1521 = vmul.f32 %v1519, 1.442695
        %v1522 = vpow.pop %v1521
        %v1523 = vmul.f32 %v1520, 1.442695
        %v1524 = vpow.pop %v1523
        %v1525 = vsub.f32 %v1502, %v1517
        %v1526 = vsub.f32 %v1503, %v1518
        %v1527 = vmul.f32 %v1525, 1.442695
        %v1528 = vpow.pop %v1527
        %v1529 = vmul.f32 %v1526, 1.442695
        %v1530 = vpow.pop %v1529
        %v1531 = vsel %vm1504, %v1522, 0.0
        %1532 = vadd.xlane.f32.xlu0 %v1531
        %v1533 = vpop.xlane.xlu0 %1532
        %v1534 = vsel %vm1504, %v1524, 0.0
        %1535 = vadd.xlane.f32.xlu0 %v1534
        %v1536 = vpop.xlane.xlu0 %1535
        %v1537 = vsel %vm1434, %v1528, 0.0
        %1538 = vadd.xlane.f32.xlu0 %v1537
        %v1539 = vpop.xlane.xlu0 %1538
        %v1540 = vsel %vm1434, %v1530, 0.0
        %1541 = vadd.xlane.f32.xlu0 %v1540
        %v1542 = vpop.xlane.xlu0 %1541
        %v1543 = vadd.f32 %v1533, %v1539
        %v1544 = vadd.f32 %v1536, %v1542
        %v1545 = vrcp.pop %v1543
        %v1546 = vrcp.pop %v1544
        %1547 = vrot.lane.b32.xlu0 %v1427, 96
        %v1548 = vpop.permute.xlu0 %1547
        %v1551 = vsel %vm1434, %v1528, 0
        %v1554 = vsel %vm1434, %v1530, 0
        %1556 = vmatpush.msra.mxu0 0.0
        %1557 = vmatpush.msra.mxu0 0.0
        %1558 = vmatpush.msra.mxu0 0.0
        %1559 = vmatpush.msra.mxu0 0.0
        %1560 = vmatpush.msra.mxu0 0.0
        %1561 = vmatpush.msra.mxu0 0.0
        %1562 = vmatpush.msra.mxu0 0.0
        %1563 = vmatpush.msra.mxu0 0.0
        %1564 = vmatpush.msra.mxu0 0.0
        %1565 = vmatpush.msra.mxu0 0.0
        %1566 = vmatpush.msra.mxu0 0.0
        %1567 = vmatpush.msra.mxu0 0.0
        %1568 = vmatpush.msra.mxu0 0.0
        %1569 = vmatpush.msra.mxu0 0.0
        %1570 = vmatpush.msra.mxu0 0.0
        %1571 = vmatpush.msra.mxu0 %v1548
        %1572 = vmatmul.f32.gmra.mxu0 %v1551
        %v1573 = vpop.f32.mrf.mxu0
        %v1574 = vadd.f32 0.0, %v1573
        %1575 = vmatmul.f32.gmra.mxu0 %v1554
        %v1576 = vpop.f32.mrf.mxu0
        %v1577 = vadd.f32 0.0, %v1576
        %1578 = vdwg.mxu0
        %1579 = vrot.lane.b32.xlu0 %v1425, 64
        %v1580 = vpop.permute.xlu0 %1579
        %1581 = vrot.lane.b32.xlu0 %v1426, 64
        %v1582 = vpop.permute.xlu0 %1581
        %v1586 = vsel %vm1504, %v1522, 0
        %v1589 = vsel %vm1504, %v1524, 0
        %1591 = vmatpush.msra.mxu0 0.0
        %1592 = vmatpush.msra.mxu0 0.0
        %1593 = vmatpush.msra.mxu0 0.0
        %1594 = vmatpush.msra.mxu0 0.0
        %1595 = vmatpush.msra.mxu0 0.0
        %1596 = vmatpush.msra.mxu0 0.0
        %1597 = vmatpush.msra.mxu0 0.0
        %1598 = vmatpush.msra.mxu0 0.0
        %1599 = vmatpush.msra.mxu0 0.0
        %1600 = vmatpush.msra.mxu0 0.0
        %1601 = vmatpush.msra.mxu0 0.0
        %1602 = vmatpush.msra.mxu0 0.0
        %1603 = vmatpush.msra.mxu0 0.0
        %1604 = vmatpush.msra.mxu0 0.0
        %1605 = vmatpush.msra.mxu0 %v1582
        %1606 = vmatpush.msra.mxu0 %v1580
        %1607 = vmatmul.f32.gmra.mxu0 %v1586
        %v1608 = vpop.f32.mrf.mxu0
        %v1609 = vadd.f32 %v1574, %v1608
        %1610 = vmatmul.f32.gmra.mxu0 %v1589
        %v1611 = vpop.f32.mrf.mxu0
        %v1612 = vadd.f32 %v1577, %v1611
        %1613 = vdwg.mxu0
        %v1614 = vmul.f32 %v1545, %v1609
        %v1615 = vmul.f32 %v1546, %v1612
        %1616 = vst.msk [vmem:[#allocation6] sm:$0xff] %vm1434, %v1614
        %1617 = vst.msk [vmem:[#allocation6 + $0x8] sm:$0xff] %vm1434, %v1615
        %v1618 = vld [vmem:[#allocation4] sm:$0xff]
        %v1619 = vld [vmem:[#allocation4 + $0x10] sm:$0xff]
        %v1620 = vld [vmem:[#allocation5] sm:$0xff]
        %1623 = vrot.lane.b32.xlu0 %v1618, 120
        %v1624 = vpop.permute.xlu0 %1623
        %1625 = vrot.lane.b32.xlu0 %v1619, 120
        %v1626 = vpop.permute.xlu0 %1625
        %1627 = vrot.lane.b32.xlu0 %v1618, 88
        %v1628 = vpop.permute.xlu0 %1627
        %1629 = vrot.lane.b32.xlu0 %v1619, 88
        %v1630 = vpop.permute.xlu0 %1629
        %v1631 = vsel %vm1434, %v1624, 0
        %v1633 = vsel %vm1434, %v1626, 0
        %v1635 = vsel %vm1434, %v1628, 0
        %v1637 = vsel %vm1434, %v1630, 0
        %1639 = vmatpush.xpose.msra.mxu0 0.0
        %1640 = vmatpush.xpose.msra.mxu0 0.0
        %1641 = vmatpush.xpose.msra.mxu0 0.0
        %1642 = vmatpush.xpose.msra.mxu0 0.0
        %1643 = vmatpush.xpose.msra.mxu0 0.0
        %1644 = vmatpush.xpose.msra.mxu0 0.0
        %1645 = vmatpush.xpose.msra.mxu0 0.0
        %1646 = vmatpush.xpose.msra.mxu0 0.0
        %1647 = vmatpush.xpose.msra.mxu0 0.0
        %1648 = vmatpush.xpose.msra.mxu0 0.0
        %1649 = vmatpush.xpose.msra.mxu0 0.0
        %1650 = vmatpush.xpose.msra.mxu0 0.0
        %1651 = vmatpush.xpose.msra.mxu0 0.0
        %1652 = vmatpush.xpose.msra.mxu0 0.0
        %1653 = vmatpush.xpose.msra.mxu0 %v1637
        %1654 = vmatpush.xpose.msra.mxu0 %v1635
        %1655 = vmatmul.f32.gmra.mxu0 %v1631
        %v1656 = vpop.f32.mrf.mxu0
        %v1657 = vadd.f32 0.0, %v1656
        %1658 = vmatmul.f32.gmra.mxu0 %v1633
        %v1659 = vpop.f32.mrf.mxu0
        %v1660 = vadd.f32 0.0, %v1659
        %1661 = vdwg.mxu0
        %1662 = vrot.lane.b32.xlu0 %v1618, 24
        %v1663 = vpop.permute.xlu0 %1662
        %1664 = vrot.lane.b32.xlu0 %v1619, 24
        %v1665 = vpop.permute.xlu0 %1664
        %1667 = vrot.lane.b32.xlu0 %v1620, 120
        %v1668 = vpop.permute.xlu0 %1667
        %v1669 = vsel %vm1434, %v1663, 0
        %v1671 = vsel %vm1434, %v1665, 0
        %v1673 = vsel %vm1434, %v1668, 0
        %1675 = vmatpush.xpose.msra.mxu0 0.0
        %1676 = vmatpush.xpose.msra.mxu0 0.0
        %1677 = vmatpush.xpose.msra.mxu0 0.0
        %1678 = vmatpush.xpose.msra.mxu0 0.0
        %1679 = vmatpush.xpose.msra.mxu0 0.0
        %1680 = vmatpush.xpose.msra.mxu0 0.0
        %1681 = vmatpush.xpose.msra.mxu0 0.0
        %1682 = vmatpush.xpose.msra.mxu0 0.0
        %1683 = vmatpush.xpose.msra.mxu0 0.0
        %1684 = vmatpush.xpose.msra.mxu0 0.0
        %1685 = vmatpush.xpose.msra.mxu0 0.0
        %1686 = vmatpush.xpose.msra.mxu0 0.0
        %1687 = vmatpush.xpose.msra.mxu0 0.0
        %1688 = vmatpush.xpose.msra.mxu0 0.0
        %1689 = vmatpush.xpose.msra.mxu0 0.0
        %1690 = vmatpush.xpose.msra.mxu0 %v1673
        %1691 = vmatmul.f32.gmra.mxu0 %v1669
        %v1692 = vpop.f32.mrf.mxu0
        %v1693 = vadd.f32 0.0, %v1692
        %1694 = vmatmul.f32.gmra.mxu0 %v1671
        %v1695 = vpop.f32.mrf.mxu0
        %v1696 = vadd.f32 0.0, %v1695
        %1697 = vdwg.mxu0
        %v1698 = vsel %vm1419, %v1657, -10000.0
        %v1699 = vsel %vm1420, %v1660, -10000.0
        %v1700 = vsel %vm1423, %v1693, -10000.0
        %v1701 = vsel %vm1424, %v1696, -10000.0
        %v1702 = vsel %vm1504, %v1698, -inf
        %1703 = vmax.xlane.f32.xlu0 %v1702
        %v1704 = vpop.xlane.xlu0 %1703
        %v1705 = vsel %vm1504, %v1699, -inf
        %1706 = vmax.xlane.f32.xlu0 %v1705
        %v1707 = vpop.xlane.xlu0 %1706
        %v1708 = vsel %vm1434, %v1700, -inf
        %1709 = vmax.xlane.f32.xlu0 %v1708
        %v1710 = vpop.xlane.xlu0 %1709
        %v1711 = vsel %vm1434, %v1701, -inf
        %1712 = vmax.xlane.f32.xlu0 %v1711
        %v1713 = vpop.xlane.xlu0 %1712
        %v1714 = vmax.f32 %v1704, %v1710
        %v1715 = vmax.f32 %v1707, %v1713
        %v1716 = vsub.f32 %v1698, %v1714
        %v1717 = vsub.f32 %v1699, %v1715
        %v1718 = vmul.f32 %v1716, 1.442695
        %v1719 = vpow.pop %v1718
        %v1720 = vmul.f32 %v1717, 1.442695
        %v1721 = vpow.pop %v1720
        %v1722 = vsub.f32 %v1700, %v1714
        %v1723 = vsub.f32 %v1701, %v1715
        %v1724 = vmul.f32 %v1722, 1.442695
        %v1725 = vpow.pop %v1724
        %v1726 = vmul.f32 %v1723, 1.442695
        %v1727 = vpow.pop %v1726
        %v1728 = vsel %vm1504, %v1719, 0.0
        %1729 = vadd.xlane.f32.xlu0 %v1728
        %v1730 = vpop.xlane.xlu0 %1729
        %v1731 = vsel %vm1504, %v1721, 0.0
        %1732 = vadd.xlane.f32.xlu0 %v1731
        %v1733 = vpop.xlane.xlu0 %1732
        %v1734 = vsel %vm1434, %v1725, 0.0
        %1735 = vadd.xlane.f32.xlu0 %v1734
        %v1736 = vpop.xlane.xlu0 %1735
        %v1737 = vsel %vm1434, %v1727, 0.0
        %1738 = vadd.xlane.f32.xlu0 %v1737
        %v1739 = vpop.xlane.xlu0 %1738
        %v1740 = vadd.f32 %v1730, %v1736
        %v1741 = vadd.f32 %v1733, %v1739
        %v1742 = vrcp.pop %v1740
        %v1743 = vrcp.pop %v1741
        %1744 = vrot.lane.b32.xlu0 %v1620, 88
        %v1745 = vpop.permute.xlu0 %1744
        %v1748 = vsel %vm1434, %v1725, 0
        %v1751 = vsel %vm1434, %v1727, 0
        %1753 = vmatpush.msra.mxu0 0.0
        %1754 = vmatpush.msra.mxu0 0.0
        %1755 = vmatpush.msra.mxu0 0.0
        %1756 = vmatpush.msra.mxu0 0.0
        %1757 = vmatpush.msra.mxu0 0.0
        %1758 = vmatpush.msra.mxu0 0.0
        %1759 = vmatpush.msra.mxu0 0.0
        %1760 = vmatpush.msra.mxu0 0.0
        %1761 = vmatpush.msra.mxu0 0.0
        %1762 = vmatpush.msra.mxu0 0.0
        %1763 = vmatpush.msra.mxu0 0.0
        %1764 = vmatpush.msra.mxu0 0.0
        %1765 = vmatpush.msra.mxu0 0.0
        %1766 = vmatpush.msra.mxu0 0.0
        %1767 = vmatpush.msra.mxu0 0.0
        %1768 = vmatpush.msra.mxu0 %v1745
        %1769 = vmatmul.f32.gmra.mxu0 %v1748
        %v1770 = vpop.f32.mrf.mxu0
        %v1771 = vadd.f32 0.0, %v1770
        %1772 = vmatmul.f32.gmra.mxu0 %v1751
        %v1773 = vpop.f32.mrf.mxu0
        %v1774 = vadd.f32 0.0, %v1773
        %1775 = vdwg.mxu0
        %1776 = vrot.lane.b32.xlu0 %v1618, 56
        %v1777 = vpop.permute.xlu0 %1776
        %1778 = vrot.lane.b32.xlu0 %v1619, 56
        %v1779 = vpop.permute.xlu0 %1778
        %v1783 = vsel %vm1504, %v1719, 0
        %v1786 = vsel %vm1504, %v1721, 0
        %1788 = vmatpush.msra.mxu0 0.0
        %1789 = vmatpush.msra.mxu0 0.0
        %1790 = vmatpush.msra.mxu0 0.0
        %1791 = vmatpush.msra.mxu0 0.0
        %1792 = vmatpush.msra.mxu0 0.0
        %1793 = vmatpush.msra.mxu0 0.0
        %1794 = vmatpush.msra.mxu0 0.0
        %1795 = vmatpush.msra.mxu0 0.0
        %1796 = vmatpush.msra.mxu0 0.0
        %1797 = vmatpush.msra.mxu0 0.0
        %1798 = vmatpush.msra.mxu0 0.0
        %1799 = vmatpush.msra.mxu0 0.0
        %1800 = vmatpush.msra.mxu0 0.0
        %1801 = vmatpush.msra.mxu0 0.0
        %1802 = vmatpush.msra.mxu0 %v1779
        %1803 = vmatpush.msra.mxu0 %v1777
        %1804 = vmatmul.f32.gmra.mxu0 %v1783
        %v1805 = vpop.f32.mrf.mxu0
        %v1806 = vadd.f32 %v1771, %v1805
        %1807 = vmatmul.f32.gmra.mxu0 %v1786
        %v1808 = vpop.f32.mrf.mxu0
        %v1809 = vadd.f32 %v1774, %v1808
        %1810 = vdwg.mxu0
        %v1811 = vmul.f32 %v1742, %v1806
        %v1812 = vmul.f32 %v1743, %v1809
        %1815 = vrot.lane.b32.xlu0 %v1811, 8
        %v1816 = vpop.permute.xlu0 %1815
        %1817 = vrot.lane.b32.xlu0 %v1812, 8
        %v1818 = vpop.permute.xlu0 %1817
        %vm1821 = vcmask 130112
        %1822 = vst.msk [vmem:[#allocation6] sm:$0xff] %vm1821, %v1816
        %1823 = vst.msk [vmem:[#allocation6 + $0x8] sm:$0xff] %vm1821, %v1818
        %v1824 = vld [vmem:[#allocation4] sm:$0xff]
        %v1825 = vld [vmem:[#allocation4 + $0x10] sm:$0xff]
        %v1826 = vld [vmem:[#allocation5] sm:$0xff]
        %1829 = vrot.lane.b32.xlu0 %v1824, 112
        %v1830 = vpop.permute.xlu0 %1829
        %1831 = vrot.lane.b32.xlu0 %v1825, 112
        %v1832 = vpop.permute.xlu0 %1831
        %1833 = vrot.lane.b32.xlu0 %v1824, 80
        %v1834 = vpop.permute.xlu0 %1833
        %1835 = vrot.lane.b32.xlu0 %v1825, 80
        %v1836 = vpop.permute.xlu0 %1835
        %v1837 = vsel %vm1434, %v1830, 0
        %v1839 = vsel %vm1434, %v1832, 0
        %v1841 = vsel %vm1434, %v1834, 0
        %v1843 = vsel %vm1434, %v1836, 0
        %1845 = vmatpush.xpose.msra.mxu0 0.0
        %1846 = vmatpush.xpose.msra.mxu0 0.0
        %1847 = vmatpush.xpose.msra.mxu0 0.0
        %1848 = vmatpush.xpose.msra.mxu0 0.0
        %1849 = vmatpush.xpose.msra.mxu0 0.0
        %1850 = vmatpush.xpose.msra.mxu0 0.0
        %1851 = vmatpush.xpose.msra.mxu0 0.0
        %1852 = vmatpush.xpose.msra.mxu0 0.0
        %1853 = vmatpush.xpose.msra.mxu0 0.0
        %1854 = vmatpush.xpose.msra.mxu0 0.0
        %1855 = vmatpush.xpose.msra.mxu0 0.0
        %1856 = vmatpush.xpose.msra.mxu0 0.0
        %1857 = vmatpush.xpose.msra.mxu0 0.0
        %1858 = vmatpush.xpose.msra.mxu0 0.0
        %1859 = vmatpush.xpose.msra.mxu0 %v1843
        %1860 = vmatpush.xpose.msra.mxu0 %v1841
        %1861 = vmatmul.f32.gmra.mxu0 %v1837
        %v1862 = vpop.f32.mrf.mxu0
        %v1863 = vadd.f32 0.0, %v1862
        %1864 = vmatmul.f32.gmra.mxu0 %v1839
        %v1865 = vpop.f32.mrf.mxu0
        %v1866 = vadd.f32 0.0, %v1865
        %1867 = vdwg.mxu0
        %1868 = vrot.lane.b32.xlu0 %v1824, 16
        %v1869 = vpop.permute.xlu0 %1868
        %1870 = vrot.lane.b32.xlu0 %v1825, 16
        %v1871 = vpop.permute.xlu0 %1870
        %1873 = vrot.lane.b32.xlu0 %v1826, 112
        %v1874 = vpop.permute.xlu0 %1873
        %v1875 = vsel %vm1434, %v1869, 0
        %v1877 = vsel %vm1434, %v1871, 0
        %v1879 = vsel %vm1434, %v1874, 0
        %1881 = vmatpush.xpose.msra.mxu0 0.0
        %1882 = vmatpush.xpose.msra.mxu0 0.0
        %1883 = vmatpush.xpose.msra.mxu0 0.0
        %1884 = vmatpush.xpose.msra.mxu0 0.0
        %1885 = vmatpush.xpose.msra.mxu0 0.0
        %1886 = vmatpush.xpose.msra.mxu0 0.0
        %1887 = vmatpush.xpose.msra.mxu0 0.0
        %1888 = vmatpush.xpose.msra.mxu0 0.0
        %1889 = vmatpush.xpose.msra.mxu0 0.0
        %1890 = vmatpush.xpose.msra.mxu0 0.0
        %1891 = vmatpush.xpose.msra.mxu0 0.0
        %1892 = vmatpush.xpose.msra.mxu0 0.0
        %1893 = vmatpush.xpose.msra.mxu0 0.0
        %1894 = vmatpush.xpose.msra.mxu0 0.0
        %1895 = vmatpush.xpose.msra.mxu0 0.0
        %1896 = vmatpush.xpose.msra.mxu0 %v1879
        %1897 = vmatmul.f32.gmra.mxu0 %v1875
        %v1898 = vpop.f32.mrf.mxu0
        %v1899 = vadd.f32 0.0, %v1898
        %1900 = vmatmul.f32.gmra.mxu0 %v1877
        %v1901 = vpop.f32.mrf.mxu0
        %v1902 = vadd.f32 0.0, %v1901
        %1903 = vdwg.mxu0
        %v1904 = vsel %vm1419, %v1863, -10000.0
        %v1905 = vsel %vm1420, %v1866, -10000.0
        %v1906 = vsel %vm1423, %v1899, -10000.0
        %v1907 = vsel %vm1424, %v1902, -10000.0
        %v1908 = vsel %vm1504, %v1904, -inf
        %1909 = vmax.xlane.f32.xlu0 %v1908
        %v1910 = vpop.xlane.xlu0 %1909
        %v1911 = vsel %vm1504, %v1905, -inf
        %1912 = vmax.xlane.f32.xlu0 %v1911
        %v1913 = vpop.xlane.xlu0 %1912
        %v1914 = vsel %vm1434, %v1906, -inf
        %1915 = vmax.xlane.f32.xlu0 %v1914
        %v1916 = vpop.xlane.xlu0 %1915
        %v1917 = vsel %vm1434, %v1907, -inf
        %1918 = vmax.xlane.f32.xlu0 %v1917
        %v1919 = vpop.xlane.xlu0 %1918
        %v1920 = vmax.f32 %v1910, %v1916
        %v1921 = vmax.f32 %v1913, %v1919
        %v1922 = vsub.f32 %v1904, %v1920
        %v1923 = vsub.f32 %v1905, %v1921
        %v1924 = vmul.f32 %v1922, 1.442695
        %v1925 = vpow.pop %v1924
        %v1926 = vmul.f32 %v1923, 1.442695
        %v1927 = vpow.pop %v1926
        %v1928 = vsub.f32 %v1906, %v1920
        %v1929 = vsub.f32 %v1907, %v1921
        %v1930 = vmul.f32 %v1928, 1.442695
        %v1931 = vpow.pop %v1930
        %v1932 = vmul.f32 %v1929, 1.442695
        %v1933 = vpow.pop %v1932
        %v1934 = vsel %vm1504, %v1925, 0.0
        %1935 = vadd.xlane.f32.xlu0 %v1934
        %v1936 = vpop.xlane.xlu0 %1935
        %v1937 = vsel %vm1504, %v1927, 0.0
        %1938 = vadd.xlane.f32.xlu0 %v1937
        %v1939 = vpop.xlane.xlu0 %1938
        %v1940 = vsel %vm1434, %v1931, 0.0
        %1941 = vadd.xlane.f32.xlu0 %v1940
        %v1942 = vpop.xlane.xlu0 %1941
        %v1943 = vsel %vm1434, %v1933, 0.0
        %1944 = vadd.xlane.f32.xlu0 %v1943
        %v1945 = vpop.xlane.xlu0 %1944
        %v1946 = vadd.f32 %v1936, %v1942
        %v1947 = vadd.f32 %v1939, %v1945
        %v1948 = vrcp.pop %v1946
        %v1949 = vrcp.pop %v1947
        %1950 = vrot.lane.b32.xlu0 %v1826, 80
        %v1951 = vpop.permute.xlu0 %1950
        %v1954 = vsel %vm1434, %v1931, 0
        %v1957 = vsel %vm1434, %v1933, 0
        %1959 = vmatpush.msra.mxu0 0.0
        %1960 = vmatpush.msra.mxu0 0.0
        %1961 = vmatpush.msra.mxu0 0.0
        %1962 = vmatpush.msra.mxu0 0.0
        %1963 = vmatpush.msra.mxu0 0.0
        %1964 = vmatpush.msra.mxu0 0.0
        %1965 = vmatpush.msra.mxu0 0.0
        %1966 = vmatpush.msra.mxu0 0.0
        %1967 = vmatpush.msra.mxu0 0.0
        %1968 = vmatpush.msra.mxu0 0.0
        %1969 = vmatpush.msra.mxu0 0.0
        %1970 = vmatpush.msra.mxu0 0.0
        %1971 = vmatpush.msra.mxu0 0.0
        %1972 = vmatpush.msra.mxu0 0.0
        %1973 = vmatpush.msra.mxu0 0.0
        %1974 = vmatpush.msra.mxu0 %v1951
        %1975 = vmatmul.f32.gmra.mxu0 %v1954
        %v1976 = vpop.f32.mrf.mxu0
        %v1977 = vadd.f32 0.0, %v1976
        %1978 = vmatmul.f32.gmra.mxu0 %v1957
        %v1979 = vpop.f32.mrf.mxu0
        %v1980 = vadd.f32 0.0, %v1979
        %1981 = vdwg.mxu0
        %1982 = vrot.lane.b32.xlu0 %v1824, 48
        %v1983 = vpop.permute.xlu0 %1982
        %1984 = vrot.lane.b32.xlu0 %v1825, 48
        %v1985 = vpop.permute.xlu0 %1984
        %v1989 = vsel %vm1504, %v1925, 0
        %v1992 = vsel %vm1504, %v1927, 0
        %1994 = vmatpush.msra.mxu0 0.0
        %1995 = vmatpush.msra.mxu0 0.0
        %1996 = vmatpush.msra.mxu0 0.0
        %1997 = vmatpush.msra.mxu0 0.0
        %1998 = vmatpush.msra.mxu0 0.0
        %1999 = vmatpush.msra.mxu0 0.0
        %2000 = vmatpush.msra.mxu0 0.0
        %2001 = vmatpush.msra.mxu0 0.0
        %2002 = vmatpush.msra.mxu0 0.0
        %2003 = vmatpush.msra.mxu0 0.0
        %2004 = vmatpush.msra.mxu0 0.0
        %2005 = vmatpush.msra.mxu0 0.0
        %2006 = vmatpush.msra.mxu0 0.0
        %2007 = vmatpush.msra.mxu0 0.0
        %2008 = vmatpush.msra.mxu0 %v1985
        %2009 = vmatpush.msra.mxu0 %v1983
        %2010 = vmatmul.f32.gmra.mxu0 %v1989
        %v2011 = vpop.f32.mrf.mxu0
        %v2012 = vadd.f32 %v1977, %v2011
        %2013 = vmatmul.f32.gmra.mxu0 %v1992
        %v2014 = vpop.f32.mrf.mxu0
        %v2015 = vadd.f32 %v1980, %v2014
        %2016 = vdwg.mxu0
        %v2017 = vmul.f32 %v1948, %v2012
        %v2018 = vmul.f32 %v1949, %v2015
        %2021 = vrot.lane.b32.xlu0 %v2017, 16
        %v2022 = vpop.permute.xlu0 %2021
        %2023 = vrot.lane.b32.xlu0 %v2018, 16
        %v2024 = vpop.permute.xlu0 %2023
        %vm2027 = vcmask 195712
        %2028 = vst.msk [vmem:[#allocation6] sm:$0xff] %vm2027, %v2022
        %2029 = vst.msk [vmem:[#allocation6 + $0x8] sm:$0xff] %vm2027, %v2024
        %v2030 = vld [vmem:[#allocation4] sm:$0xff]
        %v2031 = vld [vmem:[#allocation4 + $0x10] sm:$0xff]
        %v2032 = vld [vmem:[#allocation5] sm:$0xff]
        %2035 = vrot.lane.b32.xlu0 %v2030, 104
        %v2036 = vpop.permute.xlu0 %2035
        %2037 = vrot.lane.b32.xlu0 %v2031, 104
        %v2038 = vpop.permute.xlu0 %2037
        %2039 = vrot.lane.b32.xlu0 %v2030, 72
        %v2040 = vpop.permute.xlu0 %2039
        %2041 = vrot.lane.b32.xlu0 %v2031, 72
        %v2042 = vpop.permute.xlu0 %2041
        %v2043 = vsel %vm1434, %v2036, 0
        %v2045 = vsel %vm1434, %v2038, 0
        %v2047 = vsel %vm1434, %v2040, 0
        %v2049 = vsel %vm1434, %v2042, 0
        %2051 = vmatpush.xpose.msra.mxu0 0.0
        %2052 = vmatpush.xpose.msra.mxu0 0.0
        %2053 = vmatpush.xpose.msra.mxu0 0.0
        %2054 = vmatpush.xpose.msra.mxu0 0.0
        %2055 = vmatpush.xpose.msra.mxu0 0.0
        %2056 = vmatpush.xpose.msra.mxu0 0.0
        %2057 = vmatpush.xpose.msra.mxu0 0.0
        %2058 = vmatpush.xpose.msra.mxu0 0.0
        %2059 = vmatpush.xpose.msra.mxu0 0.0
        %2060 = vmatpush.xpose.msra.mxu0 0.0
        %2061 = vmatpush.xpose.msra.mxu0 0.0
        %2062 = vmatpush.xpose.msra.mxu0 0.0
        %2063 = vmatpush.xpose.msra.mxu0 0.0
        %2064 = vmatpush.xpose.msra.mxu0 0.0
        %2065 = vmatpush.xpose.msra.mxu0 %v2049
        %2066 = vmatpush.xpose.msra.mxu0 %v2047
        %2067 = vmatmul.f32.gmra.mxu0 %v2043
        %v2068 = vpop.f32.mrf.mxu0
        %v2069 = vadd.f32 0.0, %v2068
        %2070 = vmatmul.f32.gmra.mxu0 %v2045
        %v2071 = vpop.f32.mrf.mxu0
        %v2072 = vadd.f32 0.0, %v2071
        %2073 = vdwg.mxu0
        %2074 = vrot.lane.b32.xlu0 %v2030, 8
        %v2075 = vpop.permute.xlu0 %2074
        %2076 = vrot.lane.b32.xlu0 %v2031, 8
        %v2077 = vpop.permute.xlu0 %2076
        %2079 = vrot.lane.b32.xlu0 %v2032, 104
        %v2080 = vpop.permute.xlu0 %2079
        %v2081 = vsel %vm1434, %v2075, 0
        %v2083 = vsel %vm1434, %v2077, 0
        %v2085 = vsel %vm1434, %v2080, 0
        %2087 = vmatpush.xpose.msra.mxu0 0.0
        %2088 = vmatpush.xpose.msra.mxu0 0.0
        %2089 = vmatpush.xpose.msra.mxu0 0.0
        %2090 = vmatpush.xpose.msra.mxu0 0.0
        %2091 = vmatpush.xpose.msra.mxu0 0.0
        %2092 = vmatpush.xpose.msra.mxu0 0.0
        %2093 = vmatpush.xpose.msra.mxu0 0.0
        %2094 = vmatpush.xpose.msra.mxu0 0.0
        %2095 = vmatpush.xpose.msra.mxu0 0.0
        %2096 = vmatpush.xpose.msra.mxu0 0.0
        %2097 = vmatpush.xpose.msra.mxu0 0.0
        %2098 = vmatpush.xpose.msra.mxu0 0.0
        %2099 = vmatpush.xpose.msra.mxu0 0.0
        %2100 = vmatpush.xpose.msra.mxu0 0.0
        %2101 = vmatpush.xpose.msra.mxu0 0.0
        %2102 = vmatpush.xpose.msra.mxu0 %v2085
        %2103 = vmatmul.f32.gmra.mxu0 %v2081
        %v2104 = vpop.f32.mrf.mxu0
        %v2105 = vadd.f32 0.0, %v2104
        %2106 = vmatmul.f32.gmra.mxu0 %v2083
        %v2107 = vpop.f32.mrf.mxu0
        %v2108 = vadd.f32 0.0, %v2107
        %2109 = vdwg.mxu0
        %v2110 = vsel %vm1419, %v2069, -10000.0
        %v2111 = vsel %vm1420, %v2072, -10000.0
        %v2112 = vsel %vm1423, %v2105, -10000.0
        %v2113 = vsel %vm1424, %v2108, -10000.0
        %v2114 = vsel %vm1504, %v2110, -inf
        %2115 = vmax.xlane.f32.xlu0 %v2114
        %v2116 = vpop.xlane.xlu0 %2115
        %v2117 = vsel %vm1504, %v2111, -inf
        %2118 = vmax.xlane.f32.xlu0 %v2117
        %v2119 = vpop.xlane.xlu0 %2118
        %v2120 = vsel %vm1434, %v2112, -inf
        %2121 = vmax.xlane.f32.xlu0 %v2120
        %v2122 = vpop.xlane.xlu0 %2121
        %v2123 = vsel %vm1434, %v2113, -inf
        %2124 = vmax.xlane.f32.xlu0 %v2123
        %v2125 = vpop.xlane.xlu0 %2124
        %v2126 = vmax.f32 %v2116, %v2122
        %v2127 = vmax.f32 %v2119, %v2125
        %v2128 = vsub.f32 %v2110, %v2126
        %v2129 = vsub.f32 %v2111, %v2127
        %v2130 = vmul.f32 %v2128, 1.442695
        %v2131 = vpow.pop %v2130
        %v2132 = vmul.f32 %v2129, 1.442695
        %v2133 = vpow.pop %v2132
        %v2134 = vsub.f32 %v2112, %v2126
        %v2135 = vsub.f32 %v2113, %v2127
        %v2136 = vmul.f32 %v2134, 1.442695
        %v2137 = vpow.pop %v2136
        %v2138 = vmul.f32 %v2135, 1.442695
        %v2139 = vpow.pop %v2138
        %v2140 = vsel %vm1504, %v2131, 0.0
        %2141 = vadd.xlane.f32.xlu0 %v2140
        %v2142 = vpop.xlane.xlu0 %2141
        %v2143 = vsel %vm1504, %v2133, 0.0
        %2144 = vadd.xlane.f32.xlu0 %v2143
        %v2145 = vpop.xlane.xlu0 %2144
        %v2146 = vsel %vm1434, %v2137, 0.0
        %2147 = vadd.xlane.f32.xlu0 %v2146
        %v2148 = vpop.xlane.xlu0 %2147
        %v2149 = vsel %vm1434, %v2139, 0.0
        %2150 = vadd.xlane.f32.xlu0 %v2149
        %v2151 = vpop.xlane.xlu0 %2150
        %v2152 = vadd.f32 %v2142, %v2148
        %v2153 = vadd.f32 %v2145, %v2151
        %v2154 = vrcp.pop %v2152
        %v2155 = vrcp.pop %v2153
        %2156 = vrot.lane.b32.xlu0 %v2032, 72
        %v2157 = vpop.permute.xlu0 %2156
        %v2160 = vsel %vm1434, %v2137, 0
        %v2163 = vsel %vm1434, %v2139, 0
        %2165 = vmatpush.msra.mxu0 0.0
        %2166 = vmatpush.msra.mxu0 0.0
        %2167 = vmatpush.msra.mxu0 0.0
        %2168 = vmatpush.msra.mxu0 0.0
        %2169 = vmatpush.msra.mxu0 0.0
        %2170 = vmatpush.msra.mxu0 0.0
        %2171 = vmatpush.msra.mxu0 0.0
        %2172 = vmatpush.msra.mxu0 0.0
        %2173 = vmatpush.msra.mxu0 0.0
        %2174 = vmatpush.msra.mxu0 0.0
        %2175 = vmatpush.msra.mxu0 0.0
        %2176 = vmatpush.msra.mxu0 0.0
        %2177 = vmatpush.msra.mxu0 0.0
        %2178 = vmatpush.msra.mxu0 0.0
        %2179 = vmatpush.msra.mxu0 0.0
        %2180 = vmatpush.msra.mxu0 %v2157
        %2181 = vmatmul.f32.gmra.mxu0 %v2160
        %v2182 = vpop.f32.mrf.mxu0
        %v2183 = vadd.f32 0.0, %v2182
        %2184 = vmatmul.f32.gmra.mxu0 %v2163
        %v2185 = vpop.f32.mrf.mxu0
        %v2186 = vadd.f32 0.0, %v2185
        %2187 = vdwg.mxu0
        %2188 = vrot.lane.b32.xlu0 %v2030, 40
        %v2189 = vpop.permute.xlu0 %2188
        %2190 = vrot.lane.b32.xlu0 %v2031, 40
        %v2191 = vpop.permute.xlu0 %2190
        %v2195 = vsel %vm1504, %v2131, 0
        %v2198 = vsel %vm1504, %v2133, 0
        %2200 = vmatpush.msra.mxu0 0.0
        %2201 = vmatpush.msra.mxu0 0.0
        %2202 = vmatpush.msra.mxu0 0.0
        %2203 = vmatpush.msra.mxu0 0.0
        %2204 = vmatpush.msra.mxu0 0.0
        %2205 = vmatpush.msra.mxu0 0.0
        %2206 = vmatpush.msra.mxu0 0.0
        %2207 = vmatpush.msra.mxu0 0.0
        %2208 = vmatpush.msra.mxu0 0.0
        %2209 = vmatpush.msra.mxu0 0.0
        %2210 = vmatpush.msra.mxu0 0.0
        %2211 = vmatpush.msra.mxu0 0.0
        %2212 = vmatpush.msra.mxu0 0.0
        %2213 = vmatpush.msra.mxu0 0.0
        %2214 = vmatpush.msra.mxu0 %v2191
        %2215 = vmatpush.msra.mxu0 %v2189
        %2216 = vmatmul.f32.gmra.mxu0 %v2195
        %v2217 = vpop.f32.mrf.mxu0
        %v2218 = vadd.f32 %v2183, %v2217
        %2219 = vmatmul.f32.gmra.mxu0 %v2198
        %v2220 = vpop.f32.mrf.mxu0
        %v2221 = vadd.f32 %v2186, %v2220
        %2222 = vdwg.mxu0
        %v2223 = vmul.f32 %v2154, %v2218
        %v2224 = vmul.f32 %v2155, %v2221
        %2227 = vrot.lane.b32.xlu0 %v2223, 24
        %v2228 = vpop.permute.xlu0 %2227
        %2229 = vrot.lane.b32.xlu0 %v2224, 24
        %v2230 = vpop.permute.xlu0 %2229
        %vm2233 = vcmask 261312
        %2234 = vst.msk [vmem:[#allocation6] sm:$0xff] %vm2233, %v2228
        %2235 = vst.msk [vmem:[#allocation6 + $0x8] sm:$0xff] %vm2233, %v2230
        %v2236 = vld [vmem:[#allocation10] sm:$0xff]
        %vm2237 = vcmp.gt.f32.partialorder %v2236, 0.5
        %v2238 = vld [vmem:[#allocation11] sm:$0xff]
        %vm2239 = vcmp.gt.f32.partialorder %v2238, 0.5
        %v2240 = vld [vmem:[#allocation5] sm:$0xff]
        %v2241 = vld [vmem:[#allocation4 + $0x8] sm:$0xff]
        %v2242 = vld [vmem:[#allocation4 + $0x18] sm:$0xff]
        %v2243 = vld [vmem:[#allocation5 + $0x8] sm:$0xff]
        %2245 = vrot.lane.b32.xlu0 %v2240, 64
        %v2246 = vpop.permute.xlu0 %2245
        %v2247 = vsel %vm1434, %v2246, 0
        %v2250 = vsel %vm1434, %v2241, 0
        %v2253 = vsel %vm1434, %v2242, 0
        %2255 = vmatpush.xpose.msra.mxu0 0.0
        %2256 = vmatpush.xpose.msra.mxu0 0.0
        %2257 = vmatpush.xpose.msra.mxu0 0.0
        %2258 = vmatpush.xpose.msra.mxu0 0.0
        %2259 = vmatpush.xpose.msra.mxu0 0.0
        %2260 = vmatpush.xpose.msra.mxu0 0.0
        %2261 = vmatpush.xpose.msra.mxu0 0.0
        %2262 = vmatpush.xpose.msra.mxu0 0.0
        %2263 = vmatpush.xpose.msra.mxu0 0.0
        %2264 = vmatpush.xpose.msra.mxu0 0.0
        %2265 = vmatpush.xpose.msra.mxu0 0.0
        %2266 = vmatpush.xpose.msra.mxu0 0.0
        %2267 = vmatpush.xpose.msra.mxu0 0.0
        %2268 = vmatpush.xpose.msra.mxu0 0.0
        %2269 = vmatpush.xpose.msra.mxu0 %v2253
        %2270 = vmatpush.xpose.msra.mxu0 %v2250
        %2271 = vmatmul.f32.gmra.mxu0 %v2247
        %v2272 = vpop.f32.mrf.mxu0
        %v2273 = vadd.f32 0.0, %v2272
        %2274 = vdwg.mxu0
        %2275 = vrot.lane.b32.xlu0 %v2240, 32
        %v2276 = vpop.permute.xlu0 %2275
        %v2277 = vsel %vm1434, %v2276, 0
        %v2280 = vsel %vm1434, %v2243, 0
        %2282 = vmatpush.xpose.msra.mxu0 0.0
        %2283 = vmatpush.xpose.msra.mxu0 0.0
        %2284 = vmatpush.xpose.msra.mxu0 0.0
        %2285 = vmatpush.xpose.msra.mxu0 0.0
        %2286 = vmatpush.xpose.msra.mxu0 0.0
        %2287 = vmatpush.xpose.msra.mxu0 0.0
        %2288 = vmatpush.xpose.msra.mxu0 0.0
        %2289 = vmatpush.xpose.msra.mxu0 0.0
        %2290 = vmatpush.xpose.msra.mxu0 0.0
        %2291 = vmatpush.xpose.msra.mxu0 0.0
        %2292 = vmatpush.xpose.msra.mxu0 0.0
        %2293 = vmatpush.xpose.msra.mxu0 0.0
        %2294 = vmatpush.xpose.msra.mxu0 0.0
        %2295 = vmatpush.xpose.msra.mxu0 0.0
        %2296 = vmatpush.xpose.msra.mxu0 0.0
        %2297 = vmatpush.xpose.msra.mxu0 %v2280
        %2298 = vmatmul.f32.gmra.mxu0 %v2277
        %v2299 = vpop.f32.mrf.mxu0
        %v2300 = vadd.f32 0.0, %v2299
        %2301 = vdwg.mxu0
        %v2302 = vsel %vm2237, %v2273, -10000.0
        %v2303 = vsel %vm2239, %v2300, -10000.0
        %v2304 = vsel %vm1504, %v2302, -inf
        %2305 = vmax.xlane.f32.xlu0 %v2304
        %v2306 = vpop.xlane.xlu0 %2305
        %v2307 = vsel %vm1434, %v2303, -inf
        %2308 = vmax.xlane.f32.xlu0 %v2307
        %v2309 = vpop.xlane.xlu0 %2308
        %v2310 = vmax.f32 %v2306, %v2309
        %v2311 = vsub.f32 %v2302, %v2310
        %v2312 = vmul.f32 %v2311, 1.442695
        %v2313 = vpow.pop %v2312
        %v2314 = vsub.f32 %v2303, %v2310
        %v2315 = vmul.f32 %v2314, 1.442695
        %v2316 = vpow.pop %v2315
        %v2317 = vsel %vm1504, %v2313, 0.0
        %2318 = vadd.xlane.f32.xlu0 %v2317
        %v2319 = vpop.xlane.xlu0 %2318
        %v2320 = vsel %vm1434, %v2316, 0.0
        %2321 = vadd.xlane.f32.xlu0 %v2320
        %v2322 = vpop.xlane.xlu0 %2321
        %v2323 = vadd.f32 %v2319, %v2322
        %v2324 = vrcp.pop %v2323
        %2325 = vrot.lane.b32.xlu0 %v2243, 96
        %v2326 = vpop.permute.xlu0 %2325
        %v2329 = vsel %vm1434, %v2316, 0
        %2331 = vmatpush.msra.mxu0 0.0
        %2332 = vmatpush.msra.mxu0 0.0
        %2333 = vmatpush.msra.mxu0 0.0
        %2334 = vmatpush.msra.mxu0 0.0
        %2335 = vmatpush.msra.mxu0 0.0
        %2336 = vmatpush.msra.mxu0 0.0
        %2337 = vmatpush.msra.mxu0 0.0
        %2338 = vmatpush.msra.mxu0 0.0
        %2339 = vmatpush.msra.mxu0 0.0
        %2340 = vmatpush.msra.mxu0 0.0
        %2341 = vmatpush.msra.mxu0 0.0
        %2342 = vmatpush.msra.mxu0 0.0
        %2343 = vmatpush.msra.mxu0 0.0
        %2344 = vmatpush.msra.mxu0 0.0
        %2345 = vmatpush.msra.mxu0 0.0
        %2346 = vmatpush.msra.mxu0 %v2326
        %2347 = vmatmul.f32.gmra.mxu0 %v2329
        %v2348 = vpop.f32.mrf.mxu0
        %v2349 = vadd.f32 0.0, %v2348
        %2350 = vdwg.mxu0
        %2351 = vrot.lane.b32.xlu0 %v2241, 96
        %v2352 = vpop.permute.xlu0 %2351
        %2353 = vrot.lane.b32.xlu0 %v2242, 96
        %v2354 = vpop.permute.xlu0 %2353
        %v2358 = vsel %vm1504, %v2313, 0
        %2360 = vmatpush.msra.mxu0 0.0
        %2361 = vmatpush.msra.mxu0 0.0
        %2362 = vmatpush.msra.mxu0 0.0
        %2363 = vmatpush.msra.mxu0 0.0
        %2364 = vmatpush.msra.mxu0 0.0
        %2365 = vmatpush.msra.mxu0 0.0
        %2366 = vmatpush.msra.mxu0 0.0
        %2367 = vmatpush.msra.mxu0 0.0
        %2368 = vmatpush.msra.mxu0 0.0
        %2369 = vmatpush.msra.mxu0 0.0
        %2370 = vmatpush.msra.mxu0 0.0
        %2371 = vmatpush.msra.mxu0 0.0
        %2372 = vmatpush.msra.mxu0 0.0
        %2373 = vmatpush.msra.mxu0 0.0
        %2374 = vmatpush.msra.mxu0 %v2354
        %2375 = vmatpush.msra.mxu0 %v2352
        %2376 = vmatmul.f32.gmra.mxu0 %v2358
        %v2377 = vpop.f32.mrf.mxu0
        %v2378 = vadd.f32 %v2349, %v2377
        %2379 = vdwg.mxu0
        %v2380 = vmul.f32 %v2324, %v2378
        %2381 = vst.msk [vmem:[#allocation7] sm:$0xff] %vm1434, %v2380
        %v2382 = vld [vmem:[#allocation5] sm:$0xff]
        %v2383 = vld [vmem:[#allocation4 + $0x8] sm:$0xff]
        %v2384 = vld [vmem:[#allocation4 + $0x18] sm:$0xff]
        %v2385 = vld [vmem:[#allocation5 + $0x8] sm:$0xff]
        %2387 = vrot.lane.b32.xlu0 %v2382, 56
        %v2388 = vpop.permute.xlu0 %2387
        %2391 = vrot.lane.b32.xlu0 %v2383, 120
        %v2392 = vpop.permute.xlu0 %2391
        %2393 = vrot.lane.b32.xlu0 %v2384, 120
        %v2394 = vpop.permute.xlu0 %2393
        %v2395 = vsel %vm1434, %v2388, 0
        %v2397 = vsel %vm1434, %v2392, 0
        %v2399 = vsel %vm1434, %v2394, 0
        %2401 = vmatpush.xpose.msra.mxu0 0.0
        %2402 = vmatpush.xpose.msra.mxu0 0.0
        %2403 = vmatpush.xpose.msra.mxu0 0.0
        %2404 = vmatpush.xpose.msra.mxu0 0.0
        %2405 = vmatpush.xpose.msra.mxu0 0.0
        %2406 = vmatpush.xpose.msra.mxu0 0.0
        %2407 = vmatpush.xpose.msra.mxu0 0.0
        %2408 = vmatpush.xpose.msra.mxu0 0.0
        %2409 = vmatpush.xpose.msra.mxu0 0.0
        %2410 = vmatpush.xpose.msra.mxu0 0.0
        %2411 = vmatpush.xpose.msra.mxu0 0.0
        %2412 = vmatpush.xpose.msra.mxu0 0.0
        %2413 = vmatpush.xpose.msra.mxu0 0.0
        %2414 = vmatpush.xpose.msra.mxu0 0.0
        %2415 = vmatpush.xpose.msra.mxu0 %v2399
        %2416 = vmatpush.xpose.msra.mxu0 %v2397
        %2417 = vmatmul.f32.gmra.mxu0 %v2395
        %v2418 = vpop.f32.mrf.mxu0
        %v2419 = vadd.f32 0.0, %v2418
        %2420 = vdwg.mxu0
        %2421 = vrot.lane.b32.xlu0 %v2382, 24
        %v2422 = vpop.permute.xlu0 %2421
        %2424 = vrot.lane.b32.xlu0 %v2385, 120
        %v2425 = vpop.permute.xlu0 %2424
        %v2426 = vsel %vm1434, %v2422, 0
        %v2428 = vsel %vm1434, %v2425, 0
        %2430 = vmatpush.xpose.msra.mxu0 0.0
        %2431 = vmatpush.xpose.msra.mxu0 0.0
        %2432 = vmatpush.xpose.msra.mxu0 0.0
        %2433 = vmatpush.xpose.msra.mxu0 0.0
        %2434 = vmatpush.xpose.msra.mxu0 0.0
        %2435 = vmatpush.xpose.msra.mxu0 0.0
        %2436 = vmatpush.xpose.msra.mxu0 0.0
        %2437 = vmatpush.xpose.msra.mxu0 0.0
        %2438 = vmatpush.xpose.msra.mxu0 0.0
        %2439 = vmatpush.xpose.msra.mxu0 0.0
        %2440 = vmatpush.xpose.msra.mxu0 0.0
        %2441 = vmatpush.xpose.msra.mxu0 0.0
        %2442 = vmatpush.xpose.msra.mxu0 0.0
        %2443 = vmatpush.xpose.msra.mxu0 0.0
        %2444 = vmatpush.xpose.msra.mxu0 0.0
        %2445 = vmatpush.xpose.msra.mxu0 %v2428
        %2446 = vmatmul.f32.gmra.mxu0 %v2426
        %v2447 = vpop.f32.mrf.mxu0
        %v2448 = vadd.f32 0.0, %v2447
        %2449 = vdwg.mxu0
        %v2450 = vsel %vm2237, %v2419, -10000.0
        %v2451 = vsel %vm2239, %v2448, -10000.0
        %v2452 = vsel %vm1504, %v2450, -inf
        %2453 = vmax.xlane.f32.xlu0 %v2452
        %v2454 = vpop.xlane.xlu0 %2453
        %v2455 = vsel %vm1434, %v2451, -inf
        %2456 = vmax.xlane.f32.xlu0 %v2455
        %v2457 = vpop.xlane.xlu0 %2456
        %v2458 = vmax.f32 %v2454, %v2457
        %v2459 = vsub.f32 %v2450, %v2458
        %v2460 = vmul.f32 %v2459, 1.442695
        %v2461 = vpow.pop %v2460
        %v2462 = vsub.f32 %v2451, %v2458
        %v2463 = vmul.f32 %v2462, 1.442695
        %v2464 = vpow.pop %v2463
        %v2465 = vsel %vm1504, %v2461, 0.0
        %2466 = vadd.xlane.f32.xlu0 %v2465
        %v2467 = vpop.xlane.xlu0 %2466
        %v2468 = vsel %vm1434, %v2464, 0.0
        %2469 = vadd.xlane.f32.xlu0 %v2468
        %v2470 = vpop.xlane.xlu0 %2469
        %v2471 = vadd.f32 %v2467, %v2470
        %v2472 = vrcp.pop %v2471
        %2473 = vrot.lane.b32.xlu0 %v2385, 88
        %v2474 = vpop.permute.xlu0 %2473
        %v2477 = vsel %vm1434, %v2464, 0
        %2479 = vmatpush.msra.mxu0 0.0
        %2480 = vmatpush.msra.mxu0 0.0
        %2481 = vmatpush.msra.mxu0 0.0
        %2482 = vmatpush.msra.mxu0 0.0
        %2483 = vmatpush.msra.mxu0 0.0
        %2484 = vmatpush.msra.mxu0 0.0
        %2485 = vmatpush.msra.mxu0 0.0
        %2486 = vmatpush.msra.mxu0 0.0
        %2487 = vmatpush.msra.mxu0 0.0
        %2488 = vmatpush.msra.mxu0 0.0
        %2489 = vmatpush.msra.mxu0 0.0
        %2490 = vmatpush.msra.mxu0 0.0
        %2491 = vmatpush.msra.mxu0 0.0
        %2492 = vmatpush.msra.mxu0 0.0
        %2493 = vmatpush.msra.mxu0 0.0
        %2494 = vmatpush.msra.mxu0 %v2474
        %2495 = vmatmul.f32.gmra.mxu0 %v2477
        %v2496 = vpop.f32.mrf.mxu0
        %v2497 = vadd.f32 0.0, %v2496
        %2498 = vdwg.mxu0
        %2499 = vrot.lane.b32.xlu0 %v2383, 88
        %v2500 = vpop.permute.xlu0 %2499
        %2501 = vrot.lane.b32.xlu0 %v2384, 88
        %v2502 = vpop.permute.xlu0 %2501
        %v2506 = vsel %vm1504, %v2461, 0
        %2508 = vmatpush.msra.mxu0 0.0
        %2509 = vmatpush.msra.mxu0 0.0
        %2510 = vmatpush.msra.mxu0 0.0
        %2511 = vmatpush.msra.mxu0 0.0
        %2512 = vmatpush.msra.mxu0 0.0
        %2513 = vmatpush.msra.mxu0 0.0
        %2514 = vmatpush.msra.mxu0 0.0
        %2515 = vmatpush.msra.mxu0 0.0
        %2516 = vmatpush.msra.mxu0 0.0
        %2517 = vmatpush.msra.mxu0 0.0
        %2518 = vmatpush.msra.mxu0 0.0
        %2519 = vmatpush.msra.mxu0 0.0
        %2520 = vmatpush.msra.mxu0 0.0
        %2521 = vmatpush.msra.mxu0 0.0
        %2522 = vmatpush.msra.mxu0 %v2502
        %2523 = vmatpush.msra.mxu0 %v2500
        %2524 = vmatmul.f32.gmra.mxu0 %v2506
        %v2525 = vpop.f32.mrf.mxu0
        %v2526 = vadd.f32 %v2497, %v2525
        %2527 = vdwg.mxu0
        %v2528 = vmul.f32 %v2472, %v2526
        %2530 = vrot.lane.b32.xlu0 %v2528, 8
        %v2531 = vpop.permute.xlu0 %2530
        %2533 = vst.msk [vmem:[#allocation7] sm:$0xff] %vm1821, %v2531
        %v2534 = vld [vmem:[#allocation5] sm:$0xff]
        %v2535 = vld [vmem:[#allocation4 + $0x8] sm:$0xff]
        %v2536 = vld [vmem:[#allocation4 + $0x18] sm:$0xff]
        %v2537 = vld [vmem:[#allocation5 + $0x8] sm:$0xff]
        %2539 = vrot.lane.b32.xlu0 %v2534, 48
        %v2540 = vpop.permute.xlu0 %2539
        %2543 = vrot.lane.b32.xlu0 %v2535, 112
        %v2544 = vpop.permute.xlu0 %2543
        %2545 = vrot.lane.b32.xlu0 %v2536, 112
        %v2546 = vpop.permute.xlu0 %2545
        %v2547 = vsel %vm1434, %v2540, 0
        %v2549 = vsel %vm1434, %v2544, 0
        %v2551 = vsel %vm1434, %v2546, 0
        %2553 = vmatpush.xpose.msra.mxu0 0.0
        %2554 = vmatpush.xpose.msra.mxu0 0.0
        %2555 = vmatpush.xpose.msra.mxu0 0.0
        %2556 = vmatpush.xpose.msra.mxu0 0.0
        %2557 = vmatpush.xpose.msra.mxu0 0.0
        %2558 = vmatpush.xpose.msra.mxu0 0.0
        %2559 = vmatpush.xpose.msra.mxu0 0.0
        %2560 = vmatpush.xpose.msra.mxu0 0.0
        %2561 = vmatpush.xpose.msra.mxu0 0.0
        %2562 = vmatpush.xpose.msra.mxu0 0.0
        %2563 = vmatpush.xpose.msra.mxu0 0.0
        %2564 = vmatpush.xpose.msra.mxu0 0.0
        %2565 = vmatpush.xpose.msra.mxu0 0.0
        %2566 = vmatpush.xpose.msra.mxu0 0.0
        %2567 = vmatpush.xpose.msra.mxu0 %v2551
        %2568 = vmatpush.xpose.msra.mxu0 %v2549
        %2569 = vmatmul.f32.gmra.mxu0 %v2547
        %v2570 = vpop.f32.mrf.mxu0
        %v2571 = vadd.f32 0.0, %v2570
        %2572 = vdwg.mxu0
        %2573 = vrot.lane.b32.xlu0 %v2534, 16
        %v2574 = vpop.permute.xlu0 %2573
        %2576 = vrot.lane.b32.xlu0 %v2537, 112
        %v2577 = vpop.permute.xlu0 %2576
        %v2578 = vsel %vm1434, %v2574, 0
        %v2580 = vsel %vm1434, %v2577, 0
        %2582 = vmatpush.xpose.msra.mxu0 0.0
        %2583 = vmatpush.xpose.msra.mxu0 0.0
        %2584 = vmatpush.xpose.msra.mxu0 0.0
        %2585 = vmatpush.xpose.msra.mxu0 0.0
        %2586 = vmatpush.xpose.msra.mxu0 0.0
        %2587 = vmatpush.xpose.msra.mxu0 0.0
        %2588 = vmatpush.xpose.msra.mxu0 0.0
        %2589 = vmatpush.xpose.msra.mxu0 0.0
        %2590 = vmatpush.xpose.msra.mxu0 0.0
        %2591 = vmatpush.xpose.msra.mxu0 0.0
        %2592 = vmatpush.xpose.msra.mxu0 0.0
        %2593 = vmatpush.xpose.msra.mxu0 0.0
        %2594 = vmatpush.xpose.msra.mxu0 0.0
        %2595 = vmatpush.xpose.msra.mxu0 0.0
        %2596 = vmatpush.xpose.msra.mxu0 0.0
        %2597 = vmatpush.xpose.msra.mxu0 %v2580
        %2598 = vmatmul.f32.gmra.mxu0 %v2578
        %v2599 = vpop.f32.mrf.mxu0
        %v2600 = vadd.f32 0.0, %v2599
        %2601 = vdwg.mxu0
        %v2602 = vsel %vm2237, %v2571, -10000.0
        %v2603 = vsel %vm2239, %v2600, -10000.0
        %v2604 = vsel %vm1504, %v2602, -inf
        %2605 = vmax.xlane.f32.xlu0 %v2604
        %v2606 = vpop.xlane.xlu0 %2605
        %v2607 = vsel %vm1434, %v2603, -inf
        %2608 = vmax.xlane.f32.xlu0 %v2607
        %v2609 = vpop.xlane.xlu0 %2608
        %v2610 = vmax.f32 %v2606, %v2609
        %v2611 = vsub.f32 %v2602, %v2610
        %v2612 = vmul.f32 %v2611, 1.442695
        %v2613 = vpow.pop %v2612
        %v2614 = vsub.f32 %v2603, %v2610
        %v2615 = vmul.f32 %v2614, 1.442695
        %v2616 = vpow.pop %v2615
        %v2617 = vsel %vm1504, %v2613, 0.0
        %2618 = vadd.xlane.f32.xlu0 %v2617
        %v2619 = vpop.xlane.xlu0 %2618
        %v2620 = vsel %vm1434, %v2616, 0.0
        %2621 = vadd.xlane.f32.xlu0 %v2620
        %v2622 = vpop.xlane.xlu0 %2621
        %v2623 = vadd.f32 %v2619, %v2622
        %v2624 = vrcp.pop %v2623
        %2625 = vrot.lane.b32.xlu0 %v2537, 80
        %v2626 = vpop.permute.xlu0 %2625
        %v2629 = vsel %vm1434, %v2616, 0
        %2631 = vmatpush.msra.mxu0 0.0
        %2632 = vmatpush.msra.mxu0 0.0
        %2633 = vmatpush.msra.mxu0 0.0
        %2634 = vmatpush.msra.mxu0 0.0
        %2635 = vmatpush.msra.mxu0 0.0
        %2636 = vmatpush.msra.mxu0 0.0
        %2637 = vmatpush.msra.mxu0 0.0
        %2638 = vmatpush.msra.mxu0 0.0
        %2639 = vmatpush.msra.mxu0 0.0
        %2640 = vmatpush.msra.mxu0 0.0
        %2641 = vmatpush.msra.mxu0 0.0
        %2642 = vmatpush.msra.mxu0 0.0
        %2643 = vmatpush.msra.mxu0 0.0
        %2644 = vmatpush.msra.mxu0 0.0
        %2645 = vmatpush.msra.mxu0 0.0
        %2646 = vmatpush.msra.mxu0 %v2626
        %2647 = vmatmul.f32.gmra.mxu0 %v2629
        %v2648 = vpop.f32.mrf.mxu0
        %v2649 = vadd.f32 0.0, %v2648
        %2650 = vdwg.mxu0
        %2651 = vrot.lane.b32.xlu0 %v2535, 80
        %v2652 = vpop.permute.xlu0 %2651
        %2653 = vrot.lane.b32.xlu0 %v2536, 80
        %v2654 = vpop.permute.xlu0 %2653
        %v2658 = vsel %vm1504, %v2613, 0
        %2660 = vmatpush.msra.mxu0 0.0
        %2661 = vmatpush.msra.mxu0 0.0
        %2662 = vmatpush.msra.mxu0 0.0
        %2663 = vmatpush.msra.mxu0 0.0
        %2664 = vmatpush.msra.mxu0 0.0
        %2665 = vmatpush.msra.mxu0 0.0
        %2666 = vmatpush.msra.mxu0 0.0
        %2667 = vmatpush.msra.mxu0 0.0
        %2668 = vmatpush.msra.mxu0 0.0
        %2669 = vmatpush.msra.mxu0 0.0
        %2670 = vmatpush.msra.mxu0 0.0
        %2671 = vmatpush.msra.mxu0 0.0
        %2672 = vmatpush.msra.mxu0 0.0
        %2673 = vmatpush.msra.mxu0 0.0
        %2674 = vmatpush.msra.mxu0 %v2654
        %2675 = vmatpush.msra.mxu0 %v2652
        %2676 = vmatmul.f32.gmra.mxu0 %v2658
        %v2677 = vpop.f32.mrf.mxu0
        %v2678 = vadd.f32 %v2649, %v2677
        %2679 = vdwg.mxu0
        %v2680 = vmul.f32 %v2624, %v2678
        %2682 = vrot.lane.b32.xlu0 %v2680, 16
        %v2683 = vpop.permute.xlu0 %2682
        %2685 = vst.msk [vmem:[#allocation7] sm:$0xff] %vm2027, %v2683
        %v2686 = vld [vmem:[#allocation5] sm:$0xff]
        %v2687 = vld [vmem:[#allocation4 + $0x8] sm:$0xff]
        %v2688 = vld [vmem:[#allocation4 + $0x18] sm:$0xff]
        %v2689 = vld [vmem:[#allocation5 + $0x8] sm:$0xff]
        %2691 = vrot.lane.b32.xlu0 %v2686, 40
        %v2692 = vpop.permute.xlu0 %2691
        %2695 = vrot.lane.b32.xlu0 %v2687, 104
        %v2696 = vpop.permute.xlu0 %2695
        %2697 = vrot.lane.b32.xlu0 %v2688, 104
        %v2698 = vpop.permute.xlu0 %2697
        %v2699 = vsel %vm1434, %v2692, 0
        %v2701 = vsel %vm1434, %v2696, 0
        %v2703 = vsel %vm1434, %v2698, 0
        %2705 = vmatpush.xpose.msra.mxu0 0.0
        %2706 = vmatpush.xpose.msra.mxu0 0.0
        %2707 = vmatpush.xpose.msra.mxu0 0.0
        %2708 = vmatpush.xpose.msra.mxu0 0.0
        %2709 = vmatpush.xpose.msra.mxu0 0.0
        %2710 = vmatpush.xpose.msra.mxu0 0.0
        %2711 = vmatpush.xpose.msra.mxu0 0.0
        %2712 = vmatpush.xpose.msra.mxu0 0.0
        %2713 = vmatpush.xpose.msra.mxu0 0.0
        %2714 = vmatpush.xpose.msra.mxu0 0.0
        %2715 = vmatpush.xpose.msra.mxu0 0.0
        %2716 = vmatpush.xpose.msra.mxu0 0.0
        %2717 = vmatpush.xpose.msra.mxu0 0.0
        %2718 = vmatpush.xpose.msra.mxu0 0.0
        %2719 = vmatpush.xpose.msra.mxu0 %v2703
        %2720 = vmatpush.xpose.msra.mxu0 %v2701
        %2721 = vmatmul.f32.gmra.mxu0 %v2699
        %v2722 = vpop.f32.mrf.mxu0
        %v2723 = vadd.f32 0.0, %v2722
        %2724 = vdwg.mxu0
        %2725 = vrot.lane.b32.xlu0 %v2686, 8
        %v2726 = vpop.permute.xlu0 %2725
        %2728 = vrot.lane.b32.xlu0 %v2689, 104
        %v2729 = vpop.permute.xlu0 %2728
        %v2730 = vsel %vm1434, %v2726, 0
        %v2732 = vsel %vm1434, %v2729, 0
        %2734 = vmatpush.xpose.msra.mxu0 0.0
        %2735 = vmatpush.xpose.msra.mxu0 0.0
        %2736 = vmatpush.xpose.msra.mxu0 0.0
        %2737 = vmatpush.xpose.msra.mxu0 0.0
        %2738 = vmatpush.xpose.msra.mxu0 0.0
        %2739 = vmatpush.xpose.msra.mxu0 0.0
        %2740 = vmatpush.xpose.msra.mxu0 0.0
        %2741 = vmatpush.xpose.msra.mxu0 0.0
        %2742 = vmatpush.xpose.msra.mxu0 0.0
        %2743 = vmatpush.xpose.msra.mxu0 0.0
        %2744 = vmatpush.xpose.msra.mxu0 0.0
        %2745 = vmatpush.xpose.msra.mxu0 0.0
        %2746 = vmatpush.xpose.msra.mxu0 0.0
        %2747 = vmatpush.xpose.msra.mxu0 0.0
        %2748 = vmatpush.xpose.msra.mxu0 0.0
        %2749 = vmatpush.xpose.msra.mxu0 %v2732
        %2750 = vmatmul.f32.gmra.mxu0 %v2730
        %v2751 = vpop.f32.mrf.mxu0
        %v2752 = vadd.f32 0.0, %v2751
        %2753 = vdwg.mxu0
        %v2754 = vsel %vm2237, %v2723, -10000.0
        %v2755 = vsel %vm2239, %v2752, -10000.0
        %v2756 = vsel %vm1504, %v2754, -inf
        %2757 = vmax.xlane.f32.xlu0 %v2756
        %v2758 = vpop.xlane.xlu0 %2757
        %v2759 = vsel %vm1434, %v2755, -inf
        %2760 = vmax.xlane.f32.xlu0 %v2759
        %v2761 = vpop.xlane.xlu0 %2760
        %v2762 = vmax.f32 %v2758, %v2761
        %v2763 = vsub.f32 %v2754, %v2762
        %v2764 = vmul.f32 %v2763, 1.442695
        %v2765 = vpow.pop %v2764
        %v2766 = vsub.f32 %v2755, %v2762
        %v2767 = vmul.f32 %v2766, 1.442695
        %v2768 = vpow.pop %v2767
        %v2769 = vsel %vm1504, %v2765, 0.0
        %2770 = vadd.xlane.f32.xlu0 %v2769
        %v2771 = vpop.xlane.xlu0 %2770
        %v2772 = vsel %vm1434, %v2768, 0.0
        %2773 = vadd.xlane.f32.xlu0 %v2772
        %v2774 = vpop.xlane.xlu0 %2773
        %v2775 = vadd.f32 %v2771, %v2774
        %v2776 = vrcp.pop %v2775
        %2777 = vrot.lane.b32.xlu0 %v2689, 72
        %v2778 = vpop.permute.xlu0 %2777
        %v2781 = vsel %vm1434, %v2768, 0
        %2783 = vmatpush.msra.mxu0 0.0
        %2784 = vmatpush.msra.mxu0 0.0
        %2785 = vmatpush.msra.mxu0 0.0
        %2786 = vmatpush.msra.mxu0 0.0
        %2787 = vmatpush.msra.mxu0 0.0
        %2788 = vmatpush.msra.mxu0 0.0
        %2789 = vmatpush.msra.mxu0 0.0
        %2790 = vmatpush.msra.mxu0 0.0
        %2791 = vmatpush.msra.mxu0 0.0
        %2792 = vmatpush.msra.mxu0 0.0
        %2793 = vmatpush.msra.mxu0 0.0
        %2794 = vmatpush.msra.mxu0 0.0
        %2795 = vmatpush.msra.mxu0 0.0
        %2796 = vmatpush.msra.mxu0 0.0
        %2797 = vmatpush.msra.mxu0 0.0
        %2798 = vmatpush.msra.mxu0 %v2778
        %2799 = vmatmul.f32.gmra.mxu0 %v2781
        %v2800 = vpop.f32.mrf.mxu0
        %v2801 = vadd.f32 0.0, %v2800
        %2802 = vdwg.mxu0
        %2803 = vrot.lane.b32.xlu0 %v2687, 72
        %v2804 = vpop.permute.xlu0 %2803
        %2805 = vrot.lane.b32.xlu0 %v2688, 72
        %v2806 = vpop.permute.xlu0 %2805
        %v2810 = vsel %vm1504, %v2765, 0
        %2812 = vmatpush.msra.mxu0 0.0
        %2813 = vmatpush.msra.mxu0 0.0
        %2814 = vmatpush.msra.mxu0 0.0
        %2815 = vmatpush.msra.mxu0 0.0
        %2816 = vmatpush.msra.mxu0 0.0
        %2817 = vmatpush.msra.mxu0 0.0
        %2818 = vmatpush.msra.mxu0 0.0
        %2819 = vmatpush.msra.mxu0 0.0
        %2820 = vmatpush.msra.mxu0 0.0
        %2821 = vmatpush.msra.mxu0 0.0
        %2822 = vmatpush.msra.mxu0 0.0
        %2823 = vmatpush.msra.mxu0 0.0
        %2824 = vmatpush.msra.mxu0 0.0
        %2825 = vmatpush.msra.mxu0 0.0
        %2826 = vmatpush.msra.mxu0 %v2806
        %2827 = vmatpush.msra.mxu0 %v2804
        %2828 = vmatmul.f32.gmra.mxu0 %v2810
        %v2829 = vpop.f32.mrf.mxu0
        %v2830 = vadd.f32 %v2801, %v2829
        %2831 = vdwg.mxu0
        %v2832 = vmul.f32 %v2776, %v2830
        %2834 = vrot.lane.b32.xlu0 %v2832, 24
        %v2835 = vpop.permute.xlu0 %2834
        %2837 = vst.msk [vmem:[#allocation7] sm:$0xff] %vm2233, %v2835
        %v2838 = vld [vmem:[#allocation6] sm:$0xff]
        %v2839 = vld [vmem:[#allocation6 + $0x8] sm:$0xff]
        %v2840 = vadd.f32 %v1284, %v2838
        %v2841 = vadd.f32 %v1285, %v2839
        %v2842 = vld [vmem:[#allocation7] sm:$0xff]
        %v2843 = vadd.f32 %v1286, %v2842
        %v2844 = vpack.c.bf16 %v2841, %v2840
        %v2845 = vld [vmem:[%s1028] sm:$0xf]
        %v2846 = vld [vmem:[%s1028 + $0x4] sm:$0xf]
        %v2847 = vld [vmem:[%s1028 + $0x8] sm:$0xf]
        %v2848 = vld [vmem:[%s1028 + $0xc] sm:$0xf]
        %v2849 = vld [vmem:[%s1032] sm:$0x1]
        %v2851 = vperm.slane %v2849, 0
        %v2857 = vunpack.c.l.b16 %v2845
        %v2858 = vunpack.c.l.b16 %v2846
        %v2859 = vunpack.c.l.b16 %v2847
        %v2860 = vunpack.c.l.b16 %v2848
        %v2861 = vpack.c.b16 %v2858, %v2857
        %v2862 = vpack.c.b16 %v2860, %v2859
        %v2866 = vsel %vm1318, %v2844, 0
        %2868 = vmatpush.bf16.msra.mxu0 0
        %2869 = vmatpush.bf16.msra.mxu0 0
        %2870 = vmatpush.bf16.msra.mxu0 0
        %2871 = vmatpush.bf16.msra.mxu0 0
        %2872 = vmatpush.bf16.msra.mxu0 0
        %2873 = vmatpush.bf16.msra.mxu0 0
        %2874 = vmatpush.bf16.msra.mxu0 %v2862
        %2875 = vmatpush.bf16.msra.mxu0 %v2861
        %2876 = vmatmul.bf16.gmra.mxu0 %v2866
        %v2877 = vpop.f32.mrf.mxu0
        %v2878 = vadd.f32 %v2851, %v2877
        %v2879 = vpop.f32.mrf.mxu0
        %v2880 = vadd.f32 %v2851, %v2879
        %2881 = vdwg.mxu0
        %v2882 = vmul.f32 %v2878, 0.5
        %v2883 = vmul.f32 %v2880, 0.5
        %v2884 = vmul.f32 %v2878, 0.70710677
        %v2885 = vmul.f32 %v2880, 0.70710677
        %vm2886 = vcmp.ge.f32.partialorder %v2884, 0.0
        %vm2887 = vcmp.ge.f32.partialorder %v2885, 0.0
        %v2888 = vsel %vm2886, 1.0, -1.0
        %v2889 = vsel %vm2887, 1.0, -1.0
        %v2890 = vand.u32 2147483647, %v2884
        %v2891 = vand.u32 2147483647, %v2885
        %v2892 = vmul.f32 %v2890, 0.3275911
        %v2893 = vmul.f32 %v2891, 0.3275911
        %v2894 = vadd.f32 %v2892, 1.0
        %v2895 = vadd.f32 %v2893, 1.0
        %v2896 = vrcp.pop %v2894
        %v2897 = vrcp.pop %v2895
        %v2898 = vmul.f32 %v2896, 1.0614054
        %v2899 = vmul.f32 %v2897, 1.0614054
        %v2900 = vadd.f32 %v2898, -1.4531521
        %v2901 = vadd.f32 %v2899, -1.4531521
        %v2902 = vmul.f32 %v2896, %v2900
        %v2903 = vmul.f32 %v2897, %v2901
        %v2904 = vadd.f32 %v2902, 1.4214138
        %v2905 = vadd.f32 %v2903, 1.4214138
        %v2906 = vmul.f32 %v2896, %v2904
        %v2907 = vmul.f32 %v2897, %v2905
        %v2908 = vadd.f32 %v2906, -0.28449672
        %v2909 = vadd.f32 %v2907, -0.28449672
        %v2910 = vmul.f32 %v2896, %v2908
        %v2911 = vmul.f32 %v2897, %v2909
        %v2912 = vadd.f32 %v2910, 0.2548296
        %v2913 = vadd.f32 %v2911, 0.2548296
        %v2914 = vmul.f32 %v2896, %v2912
        %v2915 = vmul.f32 %v2897, %v2913
        %v2916 = vsub.f32 0.0, %v2890
        %v2917 = vsub.f32 0.0, %v2891
        %v2918 = vmul.f32 %v2916, %v2890
        %v2919 = vmul.f32 %v2917, %v2891
        %v2920 = vmul.f32 %v2918, 1.442695
        %v2921 = vpow.pop %v2920
        %v2922 = vmul.f32 %v2919, 1.442695
        %v2923 = vpow.pop %v2922
        %v2924 = vmul.f32 %v2914, %v2921
        %v2925 = vmul.f32 %v2915, %v2923
        %v2926 = vsub.f32 1.0, %v2924
        %v2927 = vsub.f32 1.0, %v2925
        %v2928 = vmul.f32 %v2888, %v2926
        %v2929 = vmul.f32 %v2889, %v2927
        %v2930 = vadd.f32 %v2928, 1.0
        %v2931 = vadd.f32 %v2929, 1.0
        %v2932 = vmul.f32 %v2882, %v2930
        %v2933 = vmul.f32 %v2883, %v2931
        %v2934 = vpack.c.bf16 %v2933, %v2932
        %v2935 = vld [vmem:[%s1037] sm:$0xf]
        %v2936 = vld [vmem:[%s1037 + $0x4] sm:$0xf]
        %v2937 = vld [vmem:[%s1037 + $0x8] sm:$0xf]
        %v2938 = vld [vmem:[%s1037 + $0xc] sm:$0xf]
        %v2939 = vld [vmem:[%s1037 + $0x10] sm:$0xf]
        %v2940 = vld [vmem:[%s1037 + $0x14] sm:$0xf]
        %v2941 = vld [vmem:[%s1037 + $0x18] sm:$0xf]
        %v2942 = vld [vmem:[%s1037 + $0x1c] sm:$0xf]
        %v2943 = vld [vmem:[%s1041] sm:$0x1]
        %v2945 = vperm.slane %v2943, 0
        %v2955 = vunpack.c.l.b16 %v2935
        %v2956 = vunpack.c.l.b16 %v2936
        %v2957 = vunpack.c.l.b16 %v2937
        %v2958 = vunpack.c.l.b16 %v2938
        %v2959 = vunpack.c.l.b16 %v2939
        %v2960 = vunpack.c.l.b16 %v2940
        %v2961 = vunpack.c.l.b16 %v2941
        %v2962 = vunpack.c.l.b16 %v2942
        %v2963 = vpack.c.b16 %v2956, %v2955
        %v2964 = vpack.c.b16 %v2958, %v2957
        %v2965 = vpack.c.b16 %v2960, %v2959
        %v2966 = vpack.c.b16 %v2962, %v2961
        %v2972 = vsel %vm1351, %v2934, 0
        %2974 = vmatpush.bf16.msra.mxu0 0
        %2975 = vmatpush.bf16.msra.mxu0 0
        %2976 = vmatpush.bf16.msra.mxu0 0
        %2977 = vmatpush.bf16.msra.mxu0 0
        %2978 = vmatpush.bf16.msra.mxu0 %v2966
        %2979 = vmatpush.bf16.msra.mxu0 %v2965
        %2980 = vmatpush.bf16.msra.mxu0 %v2964
        %2981 = vmatpush.bf16.msra.mxu0 %v2963
        %2982 = vmatmul.bf16.gmra.mxu0 %v2972
        %v2983 = vpop.f32.mrf.mxu0
        %v2984 = vadd.f32 %v2945, %v2983
        %v2985 = vpop.f32.mrf.mxu0
        %v2986 = vadd.f32 %v2945, %v2985
        %2987 = vdwg.mxu0
        %v2988 = vadd.f32 %v2984, %v2840
        %v2989 = vadd.f32 %v2986, %v2841
        %v2990 = vld [vmem:[%s1045] sm:$0x1]
        %v2991 = vld [vmem:[%s1049] sm:$0x1]
        %v2992 = vsel %vm1318, %v2988, 0.0
        %2993 = vadd.xlane.f32.xlu0 %v2992
        %v2994 = vpop.xlane.xlu0 %2993
        %v2995 = vsel %vm1318, %v2989, 0.0
        %2996 = vadd.xlane.f32.xlu0 %v2995
        %v2997 = vpop.xlane.xlu0 %2996
        %v2998 = vrcp.pop 32.0
        %v2999 = vmul.f32 32.0, %v2998
        %v3000 = vsub.f32 1.0, %v2999
        %v3001 = vmul.f32 %v2998, %v3000
        %v3002 = vadd.f32 %v2998, %v3001
        %vm3003 = vweird.f32 %v2998
        %v3004 = vsel %vm3003, %v2998, %v3002
        %v3005 = vmul.f32 %v2994, %v3004
        %v3006 = vmul.f32 %v2997, %v3004
        %v3007 = vsub.f32 %v2988, %v3005
        %v3008 = vsub.f32 %v2989, %v3006
        %v3009 = vmul.f32 %v3007, %v3007
        %v3010 = vmul.f32 %v3008, %v3008
        %v3011 = vsel %vm1318, %v3009, 0.0
        %3012 = vadd.xlane.f32.xlu0 %v3011
        %v3013 = vpop.xlane.xlu0 %3012
        %v3014 = vsel %vm1318, %v3010, 0.0
        %3015 = vadd.xlane.f32.xlu0 %v3014
        %v3016 = vpop.xlane.xlu0 %3015
        %v3017 = vmul.f32 %v3013, %v3004
        %v3018 = vmul.f32 %v3016, %v3004
        %v3019 = vadd.f32 %v3017, 1e-12
        %v3020 = vadd.f32 %v3018, 1e-12
        %v3021 = vrsqrt.pop %v3019
        %v3022 = vmul.f32 %v3021, %v3019
        %v3023 = vmul.f32 %v3022, %v3021
        %v3024 = vmul.f32 0.5, %v3023
        %v3025 = vsub.f32 1.5, %v3024
        %v3026 = vmul.f32 %v3021, %v3025
        %vm3027 = vweird.f32 %v3019
        %vm3028 = vweird.f32 %v3021
        %vm3029 = vmor %vm3027, %vm3028
        %v3030 = vsel %vm3029, %v3021, %v3026
        %v3031 = vrsqrt.pop %v3020
        %v3032 = vmul.f32 %v3031, %v3020
        %v3033 = vmul.f32 %v3032, %v3031
        %v3034 = vmul.f32 0.5, %v3033
        %v3035 = vsub.f32 1.5, %v3034
        %v3036 = vmul.f32 %v3031, %v3035
        %vm3037 = vweird.f32 %v3020
        %vm3038 = vweird.f32 %v3031
        %vm3039 = vmor %vm3037, %vm3038
        %v3040 = vsel %vm3039, %v3031, %v3036
        %v3041 = vmul.f32 %v3007, %v3030
        %v3042 = vmul.f32 %v3008, %v3040
        %v3044 = vperm.slane %v2990, 0
        %v3046 = vmul.f32 %v3041, %v3044
        %v3047 = vmul.f32 %v3042, %v3044
        %v3049 = vperm.slane %v2991, 0
        %v3051 = vadd.f32 %v3046, %v3049
        %v3052 = vadd.f32 %v3047, %v3049
        %3053 = vst.msk [vmem:[#allocation2] sm:$0xff] %vm1318, %v3051
        %3054 = vst.msk [vmem:[#allocation2 + $0x8] sm:$0xff] %vm1318, %v3052
        %v3055 = vpack.c.bf16 %v2843, %v2843
        %s3056 = scalar_lea.vmem %s1028, 16
        %v3057 = vld [vmem:[%s3056] sm:$0xf]
        %v3058 = vld [vmem:[%s3056 + $0x4] sm:$0xf]
        %v3059 = vld [vmem:[%s3056 + $0x8] sm:$0xf]
        %v3060 = vld [vmem:[%s3056 + $0xc] sm:$0xf]
        %s3061 = scalar_lea.vmem %s1032, 1
        %v3062 = vld [vmem:[%s3061] sm:$0x1]
        %v3064 = vperm.slane %v3062, 0
        %v3070 = vunpack.c.l.b16 %v3057
        %v3071 = vunpack.c.l.b16 %v3058
        %v3072 = vunpack.c.l.b16 %v3059
        %v3073 = vunpack.c.l.b16 %v3060
        %v3074 = vpack.c.b16 %v3071, %v3070
        %v3075 = vpack.c.b16 %v3073, %v3072
        %v3079 = vsel %vm1318, %v3055, 0
        %3081 = vmatpush.bf16.msra.mxu0 0
        %3082 = vmatpush.bf16.msra.mxu0 0
        %3083 = vmatpush.bf16.msra.mxu0 0
        %3084 = vmatpush.bf16.msra.mxu0 0
        %3085 = vmatpush.bf16.msra.mxu0 0
        %3086 = vmatpush.bf16.msra.mxu0 0
        %3087 = vmatpush.bf16.msra.mxu0 %v3075
        %3088 = vmatpush.bf16.msra.mxu0 %v3074
        %3089 = vmatmul.bf16.gmra.mxu0 %v3079
        %v3090 = vpop.f32.mrf.mxu0
        %v3091 = vadd.f32 %v3064, %v3090
        %v3092 = vpop.f32.mrf.mxu0
        %3093 = vdwg.mxu0
        %v3094 = vmul.f32 %v3091, 0.5
        %v3095 = vmul.f32 %v3091, 0.70710677
        %vm3096 = vcmp.ge.f32.partialorder %v3095, 0.0
        %v3097 = vsel %vm3096, 1.0, -1.0
        %v3098 = vand.u32 2147483647, %v3095
        %v3099 = vmul.f32 %v3098, 0.3275911
        %v3100 = vadd.f32 %v3099, 1.0
        %v3101 = vrcp.pop %v3100
        %v3102 = vmul.f32 %v3101, 1.0614054
        %v3103 = vadd.f32 %v3102, -1.4531521
        %v3104 = vmul.f32 %v3101, %v3103
        %v3105 = vadd.f32 %v3104, 1.4214138
        %v3106 = vmul.f32 %v3101, %v3105
        %v3107 = vadd.f32 %v3106, -0.28449672
        %v3108 = vmul.f32 %v3101, %v3107
        %v3109 = vadd.f32 %v3108, 0.2548296
        %v3110 = vmul.f32 %v3101, %v3109
        %v3111 = vsub.f32 0.0, %v3098
        %v3112 = vmul.f32 %v3111, %v3098
        %v3113 = vmul.f32 %v3112, 1.442695
        %v3114 = vpow.pop %v3113
        %v3115 = vmul.f32 %v3110, %v3114
        %v3116 = vsub.f32 1.0, %v3115
        %v3117 = vmul.f32 %v3097, %v3116
        %v3118 = vadd.f32 %v3117, 1.0
        %v3119 = vmul.f32 %v3094, %v3118
        %v3120 = vpack.c.bf16 %v3119, %v3119
        %s3121 = scalar_lea.vmem %s1037, 32
        %v3122 = vld [vmem:[%s3121] sm:$0xf]
        %v3123 = vld [vmem:[%s3121 + $0x4] sm:$0xf]
        %v3124 = vld [vmem:[%s3121 + $0x8] sm:$0xf]
        %v3125 = vld [vmem:[%s3121 + $0xc] sm:$0xf]
        %v3126 = vld [vmem:[%s3121 + $0x10] sm:$0xf]
        %v3127 = vld [vmem:[%s3121 + $0x14] sm:$0xf]
        %v3128 = vld [vmem:[%s3121 + $0x18] sm:$0xf]
        %v3129 = vld [vmem:[%s3121 + $0x1c] sm:$0xf]
        %s3130 = scalar_lea.vmem %s1041, 1
        %v3131 = vld [vmem:[%s3130] sm:$0x1]
        %v3133 = vperm.slane %v3131, 0
        %v3143 = vunpack.c.l.b16 %v3122
        %v3144 = vunpack.c.l.b16 %v3123
        %v3145 = vunpack.c.l.b16 %v3124
        %v3146 = vunpack.c.l.b16 %v3125
        %v3147 = vunpack.c.l.b16 %v3126
        %v3148 = vunpack.c.l.b16 %v3127
        %v3149 = vunpack.c.l.b16 %v3128
        %v3150 = vunpack.c.l.b16 %v3129
        %v3151 = vpack.c.b16 %v3144, %v3143
        %v3152 = vpack.c.b16 %v3146, %v3145
        %v3153 = vpack.c.b16 %v3148, %v3147
        %v3154 = vpack.c.b16 %v3150, %v3149
        %v3160 = vsel %vm1351, %v3120, 0
        %3162 = vmatpush.bf16.msra.mxu0 0
        %3163 = vmatpush.bf16.msra.mxu0 0
        %3164 = vmatpush.bf16.msra.mxu0 0
        %3165 = vmatpush.bf16.msra.mxu0 0
        %3166 = vmatpush.bf16.msra.mxu0 %v3154
        %3167 = vmatpush.bf16.msra.mxu0 %v3153
        %3168 = vmatpush.bf16.msra.mxu0 %v3152
        %3169 = vmatpush.bf16.msra.mxu0 %v3151
        %3170 = vmatmul.bf16.gmra.mxu0 %v3160
        %v3171 = vpop.f32.mrf.mxu0
        %v3172 = vadd.f32 %v3133, %v3171
        %v3173 = vpop.f32.mrf.mxu0
        %3174 = vdwg.mxu0
        %v3175 = vadd.f32 %v3172, %v2843
        %s3176 = scalar_lea.vmem %s1045, 1
        %v3177 = vld [vmem:[%s3176] sm:$0x1]
        %s3178 = scalar_lea.vmem %s1049, 1
        %v3179 = vld [vmem:[%s3178] sm:$0x1]
        %v3180 = vsel %vm1318, %v3175, 0.0
        %3181 = vadd.xlane.f32.xlu0 %v3180
        %v3182 = vpop.xlane.xlu0 %3181
        %v3183 = vmul.f32 %v3182, %v3004
        %v3184 = vsub.f32 %v3175, %v3183
        %v3185 = vmul.f32 %v3184, %v3184
        %v3186 = vsel %vm1318, %v3185, 0.0
        %3187 = vadd.xlane.f32.xlu0 %v3186
        %v3188 = vpop.xlane.xlu0 %3187
        %v3189 = vmul.f32 %v3188, %v3004
        %v3190 = vadd.f32 %v3189, 1e-12
        %v3191 = vrsqrt.pop %v3190
        %v3192 = vmul.f32 %v3191, %v3190
        %v3193 = vmul.f32 %v3192, %v3191
        %v3194 = vmul.f32 0.5, %v3193
        %v3195 = vsub.f32 1.5, %v3194
        %v3196 = vmul.f32 %v3191, %v3195
        %vm3197 = vweird.f32 %v3190
        %vm3198 = vweird.f32 %v3191
        %vm3199 = vmor %vm3197, %vm3198
        %v3200 = vsel %vm3199, %v3191, %v3196
        %v3201 = vmul.f32 %v3184, %v3200
        %v3203 = vperm.slane %v3177, 0
        %v3205 = vmul.f32 %v3201, %v3203
        %v3207 = vperm.slane %v3179, 0
        %v3209 = vadd.f32 %v3205, %v3207
        %3210 = vst.msk [vmem:[#allocation3] sm:$0xff] %vm1318, %v3209
        %p3211 = scmp.eq.s32.totalorder %s48, 1
        // Predicated region
        $region121: #{vl_bert_forward.1} parent=115 // pred_check
          %p3212 = pneg %p3211
        $region122: #{vl_bert_forward.1} parent=115 // pred_check_branch
          %3214 = sbr.rel (%p3212) target = $region124
        $region123: #{vl_bert_forward.1} parent=115 // pred_region
          %v3215 = vld [vmem:[#allocation2] sm:$0xff]
          %v3216 = vld [vmem:[#allocation2 + $0x8] sm:$0xff]
          %3217 = vst.msk [vmem:[%s974] sm:$0xff] %vm1318, %v3215
          %3218 = vst.msk [vmem:[%s974 + $0x8] sm:$0xff] %vm1318, %v3216
          %v3219 = vld [vmem:[#allocation3] sm:$0xff]
          %3220 = vst.msk [vmem:[%s981] sm:$0xff] %vm1318, %v3219
        $region124: #{vl_bert_forward.1} parent=115 // pred_fallthru
          _
        %s3221 = sand.u32 %s647, 1
        %s3222 = scalar_lea.sflag [#allocation13], %s3221
        %s3223 = sand.u32 %s647, 1
        %s3224 = smul.addr %s3223, 16
        %s3225 = scalar_lea.vmem [#allocation12], %s3224
        %s3226 = sand.u32 %s673, 1
        %s3227 = scalar_lea.sflag [#allocation15], %s3226
        %s3228 = sand.u32 %s673, 1
        %s3229 = smul.addr %s3228, 8
        %s3230 = scalar_lea.vmem [#allocation14], %s3229
        // Predicated region
        $region125: #{vl_bert_forward.1} parent=115 // pred_check
          %p3231 = pneg %p657
        $region126: #{vl_bert_forward.1} parent=115 // pred_check_branch
          %3233 = sbr.rel (%p3231) target = $region128
        $region127: #{vl_bert_forward.1} parent=115 // pred_region
          %3235 = vsyncadd %s3222, 0
          %s3236 = smul.addr %s47, 2
          %s3237 = smul.addr %s3236, 8
          %s3238 = scalar_lea.hbm %s24, %s3237
          %s3239 = sshll.u32 %s3225, 4
          %s3240 = int_to_ptr.vmem [resolvable:$true] %s3239
          %s3241 = sshll.u32 %s3238, 4
          %s3242 = int_to_ptr.hbm [resolvable:$true] %s3241
          %3247 = dma.vmem_to_hbm [thread:$0]  %s3240, 256, %s3242, %s3222, 128, 128, 8
        $region128: #{vl_bert_forward.1} parent=115 // pred_fallthru
          _
        // Predicated region
        $region129: #{vl_bert_forward.1} parent=115 // pred_check
          %p3248 = pneg %p683
        $region130: #{vl_bert_forward.1} parent=115 // pred_check_branch
          %3250 = sbr.rel (%p3248) target = $region132
        $region131: #{vl_bert_forward.1} parent=115 // pred_region
          %3252 = vsyncadd %s3227, 0
          %s3253 = smul.addr %s47, 8
          %s3254 = scalar_lea.hbm %s25, %s3253
          %s3256 = sshll.u32 %s3230, 4
          %s3257 = int_to_ptr.vmem [resolvable:$true] %s3256
          %s3258 = sshll.u32 %s3254, 4
          %s3259 = int_to_ptr.hbm [resolvable:$true] %s3258
          %3261 = dma.vmem_to_hbm [thread:$0]  %s3257, 128, %s3259, %s3227
        $region132: #{vl_bert_forward.1} parent=115 // pred_fallthru
          _
      $region116: #{vl_bert_forward.1} parent=5 // pred_fallthru
        _
      %p3262 = scmp.le.s32.totalorder 2, %s38
      // Predicated region
      $region133: #{vl_bert_forward.1} parent=5 // pred_check
        %p3263 = pneg %p3262
      $region134: #{vl_bert_forward.1} parent=5 // pred_check_branch
        %3265 = sbr.rel (%p3263) target = $region136
      $region135: #{vl_bert_forward.1} parent=5 // pred_region
        %s3266 = ssub.s32 %s38, 2
        // Predicated region
        $region137: #{vl_bert_forward.1} parent=135 // pred_check
          %p3267 = pneg %p663
        $region138: #{vl_bert_forward.1} parent=135 // pred_check_branch
          %3269 = sbr.rel (%p3267) target = $region140
        $region139: #{vl_bert_forward.1} parent=135 // pred_region
          %s3270 = sand.u32 %s648, 1
          %s3271 = scalar_lea.sflag [#allocation13], %s3270
          %s3272 = sand.u32 %s648, 1
          %s3273 = smul.addr %s3272, 16
          %s3274 = scalar_lea.vmem [#allocation12], %s3273
          %3276 = dma.done %s3271, 256
        $region140: #{vl_bert_forward.1} parent=135 // pred_fallthru
          _
        // Predicated region
        $region141: #{vl_bert_forward.1} parent=135 // pred_check
          %p3277 = pneg %p689
        $region142: #{vl_bert_forward.1} parent=135 // pred_check_branch
          %3279 = sbr.rel (%p3277) target = $region144
        $region143: #{vl_bert_forward.1} parent=135 // pred_region
          %s3280 = sand.u32 %s674, 1
          %s3281 = scalar_lea.sflag [#allocation15], %s3280
          %s3282 = sand.u32 %s674, 1
          %s3283 = smul.addr %s3282, 8
          %s3284 = scalar_lea.vmem [#allocation14], %s3283
          %3286 = dma.done %s3281, 128
        $region144: #{vl_bert_forward.1} parent=135 // pred_fallthru
          _
      $region136: #{vl_bert_forward.1} parent=5 // pred_fallthru
        _
    $region6: #{vl_bert_forward.1} parent=1 // loop_footer
      %s42 = sadd.s32 1, %s38
    $region7: #{vl_bert_forward.1} parent=1 // loop_footer_branch
      %37 = sbr.rel target = $region3
    $region8: #{vl_bert_forward.1} parent=1 // loop_exit
      _
    %3287 = vsyncpa [#allocation13], 1
    %s3288 = scalar_lea.sflag [#allocation13], 1
    %3289 = vsyncpa %s3288, 1
    %3290 = vsyncpa [#allocation15], 1
    %s3291 = scalar_lea.sflag [#allocation15], 1
    %3292 = vsyncpa %s3291, 1

</llo_original>
